<compile_context>
chip_gen: v7x
topology: tpu7x:2x2x1
jax: 0.10.0
libtpu: 0.0.40
codegen_flags: <defaults>
</compile_context>

<pallas_src>
import functools
import numpy as np

import jax
import jax.numpy as jnp
from jax.experimental import pallas as pl
from jax.experimental.pallas import tpu as pltpu

EXP = 4  # Bottleneck.expansion
_VMEM_LIMIT = 48 * 1024 * 1024  # explicit scoped-VMEM limit (safe on v5e/v6e/v7x)


def _ru(x, m):
    return (x + m - 1) // m * m


def _kp(K):
    """Padded K target shared by conv glue and the matmul (always 128-aligned)."""
    if K <= 1024:
        return _ru(K, 128)
    return _ru(K, 512)


# ----------------------------------------------------------------------------
# Pallas kernels
# ----------------------------------------------------------------------------
def _mm_bias_kernel(a_ref, b_ref, s_ref, o_ref, acc_ref, *, relu):
    @pl.when(pl.program_id(2) == 0)
    def _():
        acc_ref[...] = jnp.zeros_like(acc_ref)

    acc_ref[...] += jnp.dot(a_ref[...], b_ref[...],
                            preferred_element_type=jnp.float32)

    @pl.when(pl.program_id(2) == pl.num_programs(2) - 1)
    def _():
        y = acc_ref[...] + s_ref[...]
        if relu:
            y = jnp.maximum(y, 0.0)
        o_ref[...] = y.astype(o_ref.dtype)


def _mm_bias_res_kernel(a_ref, b_ref, s_ref, r_ref, o_ref, acc_ref, *, relu):
    @pl.when(pl.program_id(2) == 0)
    def _():
        acc_ref[...] = jnp.zeros_like(acc_ref)

    acc_ref[...] += jnp.dot(a_ref[...], b_ref[...],
                            preferred_element_type=jnp.float32)

    @pl.when(pl.program_id(2) == pl.num_programs(2) - 1)
    def _():
        y = acc_ref[...] + s_ref[...] + r_ref[...].astype(jnp.float32)
        if relu:
            y = jnp.maximum(y, 0.0)
        o_ref[...] = y.astype(o_ref.dtype)


def _conv3x3_kernel(x_ref, w_ref, s_ref, o_ref, acc_ref, *, Ho, Wo, Wp8, relu):
    """Direct (1,3,3)/stride-1 conv: 9 shifted windows of one flat VMEM block."""
    Mw = Ho * Wp8
    xv = x_ref[0]                                  # (Hp*Wp8, C)
    for tap in range(9):
        dh, dw = divmod(tap, 3)
        off = dh * Wp8 + dw
        a = xv[off:off + Mw, :]                    # static shifted window
        c = jnp.dot(a, w_ref[tap], preferred_element_type=jnp.float32)
        if tap == 0:
            acc_ref[...] = c
        else:
            acc_ref[...] += c
    y = acc_ref[...] + s_ref[...]
    if relu:
        y = jnp.maximum(y, 0.0)
    y = y.reshape(Ho, Wp8, y.shape[-1])[:, :Wo, :]  # drop the padded-width cols
    o_ref[0] = y.astype(o_ref.dtype)


def _max9_kernel(*refs):
    o_ref = refs[-1]
    m = refs[0][...]
    for r in refs[1:-1]:
        m = jnp.maximum(m, r[...])
    o_ref[...] = m


def _heatmap_kernel(xs_ref, ys_ref, ws_ref, o_ref, *, sigma):
    # Separable gaussian: out[i,j] = sum_k w_k * exp(-(i-y_k)^2/2s^2) * exp(-(j-x_k)^2/2s^2)
    Hh, Wh = o_ref.shape[1], o_ref.shape[2]
    npad = xs_ref.shape[1]
    inv = 0.5 / (sigma * sigma)
    ys = ys_ref[0]                                        # (1, npad)
    ws = ws_ref[0]                                        # (1, npad)
    xs = xs_ref[0]                                        # (npad, 1)
    rows = jax.lax.broadcasted_iota(jnp.float32, (Hh, npad), 0)
    cols = jax.lax.broadcasted_iota(jnp.float32, (npad, Wh), 1)
    a = (jnp.exp(-(rows - ys) ** 2 * inv) * ws).astype(jnp.bfloat16)   # (Hh, npad)
    b = jnp.exp(-(cols - xs) ** 2 * inv).astype(jnp.bfloat16)          # (npad, Wh)
    o_ref[0] = jnp.dot(a, b, preferred_element_type=jnp.float32).astype(o_ref.dtype)


# ----------------------------------------------------------------------------
# Fused matmul + bias (+residual) (+ReLU)
# ----------------------------------------------------------------------------
def _matmul_fused(a, b, bias, residual, relu):
    """(M,K)bf16 @ (K,N)bf16 + bias[N] (+residual) (+ReLU) -> (M,N) bf16."""
    M, K = a.shape
    _, N = b.shape

    Kp = _kp(K)
    tk = Kp if Kp <= 1024 else 512

    if N <= 512:
        tn, Np = N, N                      # compact N: never pad small Cout
    else:
        tn, Np = 512, _ru(N, 512)

    if M <= 1024:
        tm = _ru(M, 8)
    else:
        tm = 128
        for t in (1024, 512, 256, 128):    # relaxed picker: pad M, waste <=12.5%
            if (_ru(M, t) - M) * 8 <= M:
                tm = t
                break
    Mp = _ru(M, tm)
    # v7x megacore: keep at least 2 parallel output blocks when cheaply possible.
    if (Mp // tm) * (Np // tn) < 2 and Mp >= 256 and (Mp // 2) % 8 == 0:
        tm = Mp // 2

    if (Mp, Kp) != (M, K):
        a = jnp.pad(a, ((0, Mp - M), (0, Kp - K)))
    if b.shape != (Kp, Np):
        b = jnp.pad(b, ((0, Kp - K), (0, Np - N)))
    brow = bias if Np == N else jnp.pad(bias, (0, Np - N))
    brow = brow.reshape(1, Np)

    a_spec = pl.BlockSpec((tm, tk), lambda i, j, k: (i, k))
    b_spec = pl.BlockSpec((tk, tn), lambda i, j, k: (k, j))
    s_spec = pl.BlockSpec((1, tn), lambda i, j, k: (0, j))
    r_spec = pl.BlockSpec((tm, tn), lambda i, j, k: (i, j))
    o_spec = pl.BlockSpec((tm, tn), lambda i, j, k: (i, j))

    if residual is None:
        kernel = functools.partial(_mm_bias_kernel, relu=relu)
        in_specs = [a_spec, b_spec, s_spec]
        args = (a, b, brow)
        res_bytes = 0
    else:
        r = residual.astype(jnp.bfloat16)
        if r.shape != (Mp, Np):
            r = jnp.pad(r, ((0, Mp - r.shape[0]), (0, Np - r.shape[1])))
        kernel = functools.partial(_mm_bias_res_kernel, relu=relu)
        in_specs = [a_spec, b_spec, s_spec, r_spec]
        args = (a, b, brow, r)
        res_bytes = Mp * Np * 2

    cost = pl.CostEstimate(
        flops=int(2 * Mp * Np * Kp), transcendentals=0,
        bytes_accessed=int(2 * (Mp * Kp + Kp * Np + Mp * Np) + res_bytes))

    out = pl.pallas_call(
        kernel,
        out_shape=jax.ShapeDtypeStruct((Mp, Np), jnp.bfloat16),
        grid_spec=pltpu.PrefetchScalarGridSpec(
            num_scalar_prefetch=0,
            grid=(Mp // tm, Np // tn, Kp // tk),
            in_specs=in_specs,
            out_specs=o_spec,
            scratch_shapes=[pltpu.VMEM((tm, tn), jnp.float32)]),
        compiler_params=pltpu.CompilerParams(
            dimension_semantics=("parallel", "parallel", "arbitrary"),
            vmem_limit_bytes=_VMEM_LIMIT),
        cost_estimate=cost,
    )(*args)
    if (Mp, Np) != (M, N):
        out = out[:M, :N]
    return out


# ----------------------------------------------------------------------------
# Conv3d (+fused BN/residual/ReLU) = light im2col glue + fused Pallas matmul
# (stems, 1x1 convs, temporal convs, strided convs)
# ----------------------------------------------------------------------------
@functools.partial(jax.jit, static_argnames=("stride", "padding", "relu"))
def conv3d_bn(x, w, scale, bias, residual=None, *, stride, padding, relu=True):
    """x: (B,T,H,W,Cin) channels-last; w: torch layout (Cout,Cin,kt,kh,kw)."""
    B, T, H, W, Cin = x.shape
    Cout, _, kt, kh, kw = w.shape
    st, sh, sw = stride
    pt, ph, pw = padding
    To = (T + 2 * pt - kt) // st + 1
    Ho = (H + 2 * ph - kh) // sh + 1
    Wo = (W + 2 * pw - kw) // sw + 1

    # --- prune temporal taps that only ever see zero padding (exact) ---
    dts = []
    for dt in range(kt):
        lo = dt - pt
        hi = dt - pt + st * (To - 1)
        if hi < 0 or lo > T - 1:
            continue
        dts.append(dt)
    need_tpad = (dts[0] - pt < 0) or (dts[-1] - pt + st * (To - 1) > T - 1)
    tpad = pt if need_tpad else 0

    xb = x.astype(jnp.bfloat16)
    if tpad or ph or pw:
        xb = jnp.pad(xb, ((0, 0), (tpad, tpad), (ph, ph), (pw, pw), (0, 0)))

    cols = []
    for dt in dts:
        if kt == 1 and st == 1 and pt == 0:
            xt = xb
        else:
            t0 = dt - pt + tpad
            xt = xb[:, t0:t0 + st * (To - 1) + 1:st]
        if kh == 1 and kw == 1 and sh == 1 and sw == 1 and ph == 0 and pw == 0:
            cols.append(xt)  # pure 1x1 conv: no copy at all
        else:
            for dh in range(kh):
                for dw in range(kw):
                    cols.append(xt[:, :, dh:dh + sh * (Ho - 1) + 1:sh,
                                   dw:dw + sw * (Wo - 1) + 1:sw, :])

    Keff = len(dts) * kh * kw * Cin
    Kp = _kp(Keff)
    if Kp > Keff:  # fold K padding into the concat (avoids a second pad copy)
        cols.append(jnp.zeros(cols[0].shape[:-1] + (Kp - Keff,), jnp.bfloat16))
    patches = cols[0] if len(cols) == 1 else jnp.concatenate(cols, axis=-1)
    a = patches.reshape(B * To * Ho * Wo, patches.shape[-1])

    wk = w if len(dts) == kt else w[:, :, dts[0]:dts[-1] + 1]
    wmat = jnp.transpose(wk, (2, 3, 4, 1, 0)).reshape(Keff, Cout)
    wmat = wmat * scale.astype(wmat.dtype)[None, :]     # fold BN scale
    if Kp > Keff:
        wmat = jnp.pad(wmat, ((0, Kp - Keff), (0, 0)))
    wmat = wmat.astype(jnp.bfloat16)

    res2d = None
    if residual is not None:
        res2d = residual.reshape(B * To * Ho * Wo, Cout)

    out = _matmul_fused(a, wmat, bias.astype(jnp.float32), res2d, relu)
    return out.reshape(B, To, Ho, Wo, Cout)


def conv3d_plain(x, w, stride, padding):
    cout = w.shape[0]
    return conv3d_bn(x, w, jnp.ones((cout,), jnp.float32),
                     jnp.zeros((cout,), jnp.float32),
                     stride=stride, padding=padding, relu=False)


# ----------------------------------------------------------------------------
# Direct (1,3,3) stride-1 conv + BN (+ReLU): no HBM im2col (review item 1)
# ----------------------------------------------------------------------------
@functools.partial(jax.jit, static_argnames=("relu",))
def conv3x3_bn_direct(x, w, scale, bias, *, relu=True):
    """(1,3,3) stride-1 pad-(0,1,1) conv; x: (B,T,H,W,C); w: (Cout,Cin,1,3,3)."""
    B, T, H, W, C = x.shape
    Cout = w.shape[0]
    Ho, Wo = H, W
    Wp8 = _ru(W + 2, 8)              # padded width, rounded to sublane multiple
    Hp = H + 3                       # 1 top pad, 1 bottom pad, +1 shift-slack row
    xb = x.astype(jnp.bfloat16)
    xb = jnp.pad(xb, ((0, 0), (0, 0), (1, Hp - H - 1), (1, Wp8 - W - 1), (0, 0)))
    BT = B * T
    xf = xb.reshape(BT, Hp * Wp8, C)          # free reshape (row-major)

    wm = jnp.transpose(w[:, :, 0], (2, 3, 1, 0)).reshape(9, C, Cout)
    wm = (wm * scale.astype(wm.dtype)[None, None, :]).astype(jnp.bfloat16)
    brow = bias.astype(jnp.float32).reshape(1, Cout)

    tn = Cout
    if BT < 2 and Cout >= 256:       # keep >=2 parallel blocks for v7x megacore
        tn = Cout // 2
    nco = Cout // tn
    Mw = Ho * Wp8

    kernel = functools.partial(_conv3x3_kernel, Ho=Ho, Wo=Wo, Wp8=Wp8, relu=relu)
    cost = pl.CostEstimate(
        flops=int(2 * BT * Ho * Wo * 9 * C * Cout), transcendentals=0,
        bytes_accessed=int(2 * (BT * Hp * Wp8 * C * nco + 9 * C * Cout
                                + BT * Ho * Wo * Cout)))
    out = pl.pallas_call(
        kernel,
        out_shape=jax.ShapeDtypeStruct((BT, Ho, Wo, Cout), jnp.bfloat16),
        grid_spec=pltpu.PrefetchScalarGridSpec(
            num_scalar_prefetch=0,
            grid=(BT, nco),
            in_specs=[pl.BlockSpec((1, Hp * Wp8, C), lambda b, j: (b, 0, 0)),
                      pl.BlockSpec((9, C, tn), lambda b, j: (0, 0, j)),
                      pl.BlockSpec((1, tn), lambda b, j: (0, j))],
            out_specs=pl.BlockSpec((1, Ho, Wo, tn), lambda b, j: (b, 0, 0, j)),
            scratch_shapes=[pltpu.VMEM((Mw, tn), jnp.float32)]),
        compiler_params=pltpu.CompilerParams(
            dimension_semantics=("parallel", "parallel"),
            vmem_limit_bytes=_VMEM_LIMIT),
        cost_estimate=cost,
    )(xf, wm, brow)
    return out.reshape(B, T, Ho, Wo, Cout)


# ----------------------------------------------------------------------------
# MaxPool3d (1,3,3) / stride (1,2,2) / pad (0,1,1)
# ----------------------------------------------------------------------------
@jax.jit
def maxpool_1x3x3(x):
    B, T, H, W, C = x.shape
    Ho = (H + 2 - 3) // 2 + 1
    Wo = (W + 2 - 3) // 2 + 1
    # Inputs are post-ReLU (>=0) and every 3x3 window holds >=1 real pixel, so
    # zero padding is exact (equivalent to torch MaxPool3d's -inf padding).
    xp = jnp.pad(x, ((0, 0), (0, 0), (1, 1), (1, 1), (0, 0)))
    taps = []
    for dh in range(3):
        for dw in range(3):
            t = xp[:, :, dh:dh + 2 * (Ho - 1) + 1:2,
                   dw:dw + 2 * (Wo - 1) + 1:2, :]
            taps.append(t.reshape(B * T, Ho, Wo, C))
    hr = 16 if Ho % 16 == 0 else Ho
    spec = pl.BlockSpec((1, hr, Wo, C), lambda i, h: (i, h, 0, 0))
    out = pl.pallas_call(
        _max9_kernel,
        out_shape=jax.ShapeDtypeStruct((B * T, Ho, Wo, C), x.dtype),
        grid_spec=pltpu.PrefetchScalarGridSpec(
            num_scalar_prefetch=0, grid=(B * T, Ho // hr),
            in_specs=[spec] * 9, out_specs=spec),
        compiler_params=pltpu.CompilerParams(
            dimension_semantics=("parallel", "parallel"),
            vmem_limit_bytes=_VMEM_LIMIT),
    )(*taps)
    return out.reshape(B, T, Ho, Wo, C)


# ----------------------------------------------------------------------------
# Gaussian heatmap generation
# ----------------------------------------------------------------------------
@jax.jit
def generate_heatmap(pose):
    """pose (B,F,N,J,3) -> mean-over-joints heatmap (B,F,256,256,1) in bf16.

    torch broadcasts this mean map to 17 identical joint channels; we keep one
    channel and sum heatmap_conv1's weights over Cin instead (exact)."""
    B, F, N, J, _ = pose.shape
    Hh = Wh = 256
    npts = N * J
    npad = _ru(npts, 128)
    p = pose.reshape(B * F, npts, 3).astype(jnp.float32)
    pd = ((0, 0), (0, npad - npts))
    xs = jnp.pad(p[..., 0], pd)
    ys = jnp.pad(p[..., 1], pd)
    ws = jnp.pad((p[..., 2] > 0.0).astype(jnp.float32) / float(J), pd)
    mm = pl.pallas_call(
        functools.partial(_heatmap_kernel, sigma=2.0),
        out_shape=jax.ShapeDtypeStruct((B * F, Hh, Wh), jnp.bfloat16),
        grid_spec=pltpu.PrefetchScalarGridSpec(
            num_scalar_prefetch=0, grid=(B * F,),
            in_specs=[pl.BlockSpec((1, npad, 1), lambda i: (i, 0, 0)),
                      pl.BlockSpec((1, 1, npad), lambda i: (i, 0, 0)),
                      pl.BlockSpec((1, 1, npad), lambda i: (i, 0, 0))],
            out_specs=pl.BlockSpec((1, Hh, Wh), lambda i: (i, 0, 0))),
        compiler_params=pltpu.CompilerParams(
            dimension_semantics=("parallel",), vmem_limit_bytes=_VMEM_LIMIT),
    )(xs.reshape(B * F, npad, 1), ys.reshape(B * F, 1, npad),
      ws.reshape(B * F, 1, npad))
    return mm.reshape(B, F, Hh, Wh, 1)


# ----------------------------------------------------------------------------
# Parameters (deterministic, mirrors SlowFast.__init__ shapes)
# ----------------------------------------------------------------------------
class KeyGen:
    def __init__(self, seed=0):
        self.rng = np.random.default_rng(seed)

    def normal(self, shape, std):
        a = self.rng.standard_normal(shape, dtype=np.float32) * np.float32(std)
        return jnp.asarray(a)


def conv_w(kg, cout, cin, kt, kh, kw):
    fan_in = cin * kt * kh * kw
    return kg.normal((cout, cin, kt, kh, kw), np.sqrt(2.0 / fan_in))


def bn_p(c):
    # PyTorch init: gamma=1, beta=0, running_mean=0, running_var=1 (eval fold)
    eps = 1e-5
    scale = jnp.full((c,), 1.0 / np.sqrt(1.0 + eps), jnp.float32)
    bias = jnp.zeros((c,), jnp.float32)
    return scale, bias


def make_bottleneck(kg, inplanes, planes, stride, downsample, head_conv):
    p = {"stride": stride, "head_conv": head_conv}
    if head_conv == 1:
        p["w1"] = conv_w(kg, planes, inplanes, 1, 1, 1)
    else:
        p["w1"] = conv_w(kg, planes, inplanes, 3, 1, 1)
    p["s1"], p["b1"] = bn_p(planes)
    p["w2"] = conv_w(kg, planes, planes, 1, 3, 3)
    p["s2"], p["b2"] = bn_p(planes)
    p["w3"] = conv_w(kg, planes * EXP, planes, 1, 1, 1)
    p["s3"], p["b3"] = bn_p(planes * EXP)
    if downsample:
        p["dw"] = conv_w(kg, planes * EXP, inplanes, 1, 1, 1)
        p["ds"], p["db"] = bn_p(planes * EXP)
    else:
        p["dw"] = None
    return p


def make_layer(kg, inplanes, planes, blocks, stride=1, head_conv=1):
    ds = (stride != 1) or (inplanes != planes * EXP)
    layers = [make_bottleneck(kg, inplanes, planes, stride, ds, head_conv)]
    for _ in range(1, blocks):
        layers.append(make_bottleneck(kg, planes * EXP, planes, 1, False, head_conv))
    return layers, planes * EXP


def build_params(kg, layers=(3, 4, 6, 3)):
    P = {}
    # fast pathway
    fi = 8
    P["fast_conv1"] = conv_w(kg, 8, 3, 5, 7, 7)
    P["fast_bn1"] = bn_p(8)
    P["fast_res2"], fi = make_layer(kg, fi, 8, layers[0], 1, 3)
    P["fast_res3"], fi = make_layer(kg, fi, 16, layers[1], 2, 3)
    P["fast_res4"], fi = make_layer(kg, fi, 32, layers[2], 2, 3)
    P["fast_res5"], fi = make_layer(kg, fi, 64, layers[3], 1, 3)
    P["lateral_p1"] = conv_w(kg, 16, 8, 5, 1, 1)
    P["lateral_res2"] = conv_w(kg, 64, 32, 5, 1, 1)
    P["lateral_res3"] = conv_w(kg, 128, 64, 5, 1, 1)
    P["lateral_res4"] = conv_w(kg, 256, 128, 5, 1, 1)
    # slow pathway
    si = 64 + 64 // 8 * 2 + 64 * 2
    P["slow_conv1"] = conv_w(kg, 64, 3, 1, 7, 7)
    P["slow_bn1"] = bn_p(64)
    P["slow_res2"], c = make_layer(kg, si, 64, layers[0], 1, 1)
    si = c + c // 8 * 2 + c * 2
    P["slow_res3"], c = make_layer(kg, si, 128, layers[1], 2, 1)
    si = c + c // 8 * 2 + c * 2
    P["slow_res4"], c = make_layer(kg, si, 256, layers[2], 2, 3)
    si = c + c // 8 * 2 + c * 2
    P["slow_res5"], c = make_layer(kg, si, 512, layers[3], 1, 3)
    # heatmap pathway
    hi = 64
    P["heatmap_conv1"] = conv_w(kg, 64, 17, 1, 7, 7)
    P["heatmap_bn1"] = bn_p(64)
    P["heatmap_res2"], hi = make_layer(kg, hi, 64, layers[0], 1, 1)
    P["heatmap_res3"], hi = make_layer(kg, hi, 128, layers[1], 2, 1)
    P["heatmap_res4"], hi = make_layer(kg, hi, 256, layers[2], 2, 3)
    P["heatmap_res5"], hi = make_layer(kg, hi, 512, layers[3], 1, 3)
    P["lateral_p1_heatmap"] = conv_w(kg, 128, 64, 5, 1, 1)
    P["lateral_res2_heatmap"] = conv_w(kg, 512, 256, 5, 1, 1)
    P["lateral_res3_heatmap"] = conv_w(kg, 1024, 512, 5, 1, 1)
    P["lateral_res4_heatmap"] = conv_w(kg, 2048, 1024, 5, 1, 1)
    return P


# ----------------------------------------------------------------------------
# Forward pass (mirrors SlowFast.forward)
# ----------------------------------------------------------------------------
def bottleneck_forward(x, p):
    s = p["stride"]
    residual = x
    if p["dw"] is not None:
        residual = conv3d_bn(x, p["dw"], p["ds"], p["db"],
                             stride=(1, s, s), padding=(0, 0, 0), relu=False)
    if p["head_conv"] == 1:
        out = conv3d_bn(x, p["w1"], p["s1"], p["b1"],
                        stride=(1, 1, 1), padding=(0, 0, 0), relu=True)
    else:
        out = conv3d_bn(x, p["w1"], p["s1"], p["b1"],
                        stride=(1, 1, 1), padding=(1, 0, 0), relu=True)
    # (1,3,3) conv: direct windowed kernel when stride 1 and Cin large enough;
    # stride-2 (and tiny-C fast-path) blocks keep the im2col fallback.
    if s == 1 and out.shape[-1] >= 64:
        out = conv3x3_bn_direct(out, p["w2"], p["s2"], p["b2"], relu=True)
    else:
        out = conv3d_bn(out, p["w2"], p["s2"], p["b2"],
                        stride=(1, s, s), padding=(0, 1, 1), relu=True)
    out = conv3d_bn(out, p["w3"], p["s3"], p["b3"], residual=residual,
                    stride=(1, 1, 1), padding=(0, 0, 0), relu=True)
    return out


def run_layer(x, blocks):
    for p in blocks:
        x = bottleneck_forward(x, p)
    return x


def fast_path(x, P):
    lateral = []
    x = conv3d_bn(x, P["fast_conv1"], P["fast_bn1"][0], P["fast_bn1"][1],
                  stride=(1, 2, 2), padding=(2, 3, 3), relu=True)
    pool1 = maxpool_1x3x3(x)
    lateral.append(conv3d_plain(pool1, P["lateral_p1"], (4, 1, 1), (2, 0, 0)))
    res2 = run_layer(pool1, P["fast_res2"])
    lateral.append(conv3d_plain(res2, P["lateral_res2"], (4, 1, 1), (2, 0, 0)))
    res3 = run_layer(res2, P["fast_res3"])
    lateral.append(conv3d_plain(res3, P["lateral_res3"], (4, 1, 1), (2, 0, 0)))
    res4 = run_layer(res3, P["fast_res4"])
    lateral.append(conv3d_plain(res4, P["lateral_res4"], (4, 1, 1), (2, 0, 0)))
    res5 = run_layer(res4, P["fast_res5"])
    return res5, lateral


def heatmap_path(hm, P):
    lateral = []
    # All 17 joint channels of the generated heatmap are identical -> fold them
    # into the stem weights (sum over Cin); exactly equivalent.
    w1 = jnp.sum(P["heatmap_conv1"], axis=1, keepdims=True)
    x = conv3d_bn(hm, w1, P["heatmap_bn1"][0], P["heatmap_bn1"][1],
                  stride=(1, 2, 2), padding=(0, 3, 3), relu=True)
    pool1 = maxpool_1x3x3(x)
    lateral.append(conv3d_plain(pool1, P["lateral_p1_heatmap"], (4, 1, 1), (2, 0, 0)))
    res2 = run_layer(pool1, P["heatmap_res2"])
    lateral.append(conv3d_plain(res2, P["lateral_res2_heatmap"], (4, 1, 1), (2, 0, 0)))
    res3 = run_layer(res2, P["heatmap_res3"])
    lateral.append(conv3d_plain(res3, P["lateral_res3_heatmap"], (4, 1, 1), (2, 0, 0)))
    res4 = run_layer(res3, P["heatmap_res4"])
    lateral.append(conv3d_plain(res4, P["lateral_res4_heatmap"], (4, 1, 1), (2, 0, 0)))
    res5 = run_layer(res4, P["heatmap_res5"])
    return res5, lateral


def slow_path(x, lateral_rgb, lateral_hm, P):
    x = conv3d_bn(x, P["slow_conv1"], P["slow_bn1"][0], P["slow_bn1"][1],
                  stride=(1, 2, 2), padding=(0, 3, 3), relu=True)
    x = maxpool_1x3x3(x)
    x = jnp.concatenate([x, lateral_rgb[0], lateral_hm[0]], axis=-1)
    x = run_layer(x, P["slow_res2"])
    x = jnp.concatenate([x, lateral_rgb[1], lateral_hm[1]], axis=-1)
    x = run_layer(x, P["slow_res3"])
    x = jnp.concatenate([x, lateral_rgb[2], lateral_hm[2]], axis=-1)
    x = run_layer(x, P["slow_res4"])
    x = jnp.concatenate([x, lateral_rgb[3], lateral_hm[3]], axis=-1)
    x = run_layer(x, P["slow_res5"])
    return x


def slowfast_forward(video, pose, P):
    """video: (B, 3, T, H, W) NCDHW; pose: (B, frame_num, N, 17, 3)."""
    x = jnp.transpose(video, (0, 2, 3, 4, 1))  # -> channels-last (B,T,H,W,C)
    fast, lateral_rgb = fast_path(x, P)                       # input[:, :, ::1]
    hm = generate_heatmap(pose)
    heatmap_feat, lateral_hm = heatmap_path(hm, P)
    slow = slow_path(x[:, ::4], lateral_rgb, lateral_hm, P)   # input[:, :, ::4]
    to_ncdhw = lambda a: jnp.transpose(a, (0, 4, 1, 2, 3)).astype(jnp.float32)
    return to_ncdhw(fast), to_ncdhw(heatmap_feat), to_ncdhw(slow)


# ----------------------------------------------------------------------------
if __name__ == "__main__":
    kg = KeyGen(0)
    P = build_params(kg)

    # Minimal shapes consistent with the module: spatial must be 256 (the
    # generated heatmap is hard-coded 256x256 and its pathway is concatenated
    # with the slow path); T=4 RGB frames, 1 heatmap frame, 1 person, 17 joints.
    B, T, Hs, Ws = 1, 4, 256, 256
    F, N, J = 1, 1, 17

    key = jax.random.PRNGKey(0)
    k1, k2, k3 = jax.random.split(key, 3)
    video = jax.random.normal(k1, (B, 3, T, Hs, Ws), jnp.float32)
    xy = jax.random.uniform(k2, (B, F, N, J, 2), jnp.float32, 0.0, 255.0)
    score = jax.random.uniform(k3, (B, F, N, J, 1), jnp.float32, -0.5, 1.0)
    pose = jnp.concatenate([xy, score], axis=-1)

    fast, heatmap_feat, slow = slowfast_forward(video, pose, P)
    jax.block_until_ready((fast, heatmap_feat, slow))

    assert fast.shape == (B, 256, T, 16, 16)
    assert heatmap_feat.shape == (B, 2048, F, 16, 16)
    assert slow.shape == (B, 2048, 1, 16, 16)
    print("KERNEL_OK")
</pallas_src>

<mosaic_0001>
module attributes {stable_mosaic.version = 11 : i64} {
  func.func @_mm_bias_kernel(%arg0: i32, %arg1: i32, %arg2: i32, %arg3: memref<1024x768xbf16, #tpu.memory_space<vmem>>, %arg4: memref<768x8xbf16, #tpu.memory_space<vmem>>, %arg5: memref<1x8xf32, #tpu.memory_space<vmem>>, %arg6: memref<1024x8xbf16, #tpu.memory_space<vmem>>, %arg7: memref<1024x8xf32, #tpu.memory_space<vmem>>) attributes {dimension_semantics = [#tpu.dimension_semantics<parallel>, #tpu.dimension_semantics<parallel>, #tpu.dimension_semantics<arbitrary>], iteration_bounds = array<i64: 64, 1, 1>, scalar_prefetch = 0 : i64, scratch_operands = 1 : i64, tpu.core_type = #tpu.core_type<tc>, window_params = [{transform_indices = @transform_0, window_bounds = array<i64: 1024, 768>}, {transform_indices = @transform_1, window_bounds = array<i64: 768, 8>}, {transform_indices = @transform_2, window_bounds = array<i64: 1, 8>}, {transform_indices = @transform_3, window_bounds = array<i64: 1024, 8>}]} {
    %c0_i32 = arith.constant 0 : i32
    %0 = arith.cmpi eq, %arg2, %c0_i32 : i32
    %1 = arith.extui %0 : i1 to i32
    %c0_i32_0 = arith.constant 0 : i32
    %2 = arith.cmpi ne, %1, %c0_i32_0 : i32
    scf.if %2 {
      %cst_10 = arith.constant 0.000000e+00 : f32
      %12 = vector.broadcast %cst_10 : f32 to vector<1024x8xf32>
      %c0_11 = arith.constant 0 : index
      %c0_12 = arith.constant 0 : index
      %13 = vector.load %arg7[%c0_11, %c0_12] : memref<1024x8xf32, #tpu.memory_space<vmem>>, vector<1024x8xf32>
      tpu.vector_store %arg7[%c0_11, %c0_12], %12 {strides = array<i32>} : memref<1024x8xf32, #tpu.memory_space<vmem>>, vector<1024x8xf32>,
    } else {
    }
    %c0 = arith.constant 0 : index
    %c0_1 = arith.constant 0 : index
    %3 = vector.load %arg7[%c0, %c0_1] : memref<1024x8xf32, #tpu.memory_space<vmem>>, vector<1024x8xf32>
    %c0_2 = arith.constant 0 : index
    %c0_3 = arith.constant 0 : index
    %4 = vector.load %arg3[%c0_2, %c0_3] : memref<1024x768xbf16, #tpu.memory_space<vmem>>, vector<1024x768xbf16>
    %c0_4 = arith.constant 0 : index
    %c0_5 = arith.constant 0 : index
    %5 = vector.load %arg4[%c0_4, %c0_5] : memref<768x8xbf16, #tpu.memory_space<vmem>>, vector<768x8xbf16>
    %cst = arith.constant dense<0.000000e+00> : vector<1024x8xf32>
    %6 = tpu.matmul %4, %5, %cst {dimension_numbers = #tpu.dot_dimension_numbers<[1], [0], [0], [1], [0, 0, 1, 1], [], []>} : vector<1024x768xbf16>, vector<768x8xbf16>, vector<1024x8xf32> -> vector<1024x8xf32>
    %7 = arith.addf %3, %6 : vector<1024x8xf32>
    %c0_6 = arith.constant 0 : index
    %c0_7 = arith.constant 0 : index
    %8 = vector.load %arg7[%c0_6, %c0_7] : memref<1024x8xf32, #tpu.memory_space<vmem>>, vector<1024x8xf32>
    tpu.vector_store %arg7[%c0_6, %c0_7], %7 {strides = array<i32>} : memref<1024x8xf32, #tpu.memory_space<vmem>>, vector<1024x8xf32>,
    %c0_i32_8 = arith.constant 0 : i32
    %9 = arith.cmpi eq, %arg2, %c0_i32_8 : i32
    %10 = arith.extui %9 : i1 to i32
    %c0_i32_9 = arith.constant 0 : i32
    %11 = arith.cmpi ne, %10, %c0_i32_9 : i32
    scf.if %11 {
      %c0_10 = arith.constant 0 : index
      %c0_11 = arith.constant 0 : index
      %12 = vector.load %arg7[%c0_10, %c0_11] : memref<1024x8xf32, #tpu.memory_space<vmem>>, vector<1024x8xf32>
      %c0_12 = arith.constant 0 : index
      %c0_13 = arith.constant 0 : index
      %13 = vector.load %arg5[%c0_12, %c0_13] : memref<1x8xf32, #tpu.memory_space<vmem>>, vector<1x8xf32>
      %14 = vector.broadcast %13 : vector<1x8xf32> to vector<1024x8xf32>
      %15 = arith.addf %12, %14 : vector<1024x8xf32>
      %cst_14 = arith.constant 0.000000e+00 : f32
      %16 = vector.broadcast %cst_14 : f32 to vector<1024x8xf32>
      %17 = arith.maximumf %15, %16 : vector<1024x8xf32>
      %18 = arith.truncf %17 : vector<1024x8xf32> to vector<1024x8xbf16>
      %c0_15 = arith.constant 0 : index
      %c0_16 = arith.constant 0 : index
      %19 = vector.load %arg6[%c0_15, %c0_16] : memref<1024x8xbf16, #tpu.memory_space<vmem>>, vector<1024x8xbf16>
      tpu.vector_store %arg6[%c0_15, %c0_16], %18 {strides = array<i32>} : memref<1024x8xbf16, #tpu.memory_space<vmem>>, vector<1024x8xbf16>,
    } else {
    }
    return
  }
  func.func @transform_0(%arg0: i32, %arg1: i32, %arg2: i32) -> (i32, i32) {
    %c0_i32 = arith.constant 0 : i32
    return %arg0, %arg2 : i32, i32
  }
  func.func @transform_1(%arg0: i32, %arg1: i32, %arg2: i32) -> (i32, i32) {
    %c0_i32 = arith.constant 0 : i32
    return %arg2, %arg1 : i32, i32
  }
  func.func @transform_2(%arg0: i32, %arg1: i32, %arg2: i32) -> (i32, i32) {
    %c0_i32 = arith.constant 0 : i32
    %c0_i32_0 = arith.constant 0 : i32
    return %c0_i32, %arg1 : i32, i32
  }
  func.func @transform_3(%arg0: i32, %arg1: i32, %arg2: i32) -> (i32, i32) {
    %c0_i32 = arith.constant 0 : i32
    return %arg0, %arg1 : i32, i32
  }
}

</mosaic_0001>

<llo_original>
// kernel: conv3d_bn.1
$region0: #{conv3d_bn.1}
  #allocation0 [shape = 'u32[]', space=smem, size = 0x4, offset = 0x4, fixed_abs, tag = 'smem constant byte address 0x4 - core index']
  #allocation1 [shape = 'u32[144,128]{1,0:T(1,128)}', space=vmem, size = 0x12000, scoped, tag = 'internal scratch']
  #allocation2 [shape = 'f32[1024,8]{1,0:T(8,128)}', space=vmem, size = 0x80000, scoped, tag = 'scratch operand']
  %s0 = inlined_call_operand.hbm [shape: bf16[65536,768], index: 0, kind: input, shape index: {}]
  %s1 = inlined_call_operand.hbm [shape: bf16[768,8], index: 1, kind: input, shape index: {}]
  %s2 = inlined_call_operand.hbm [shape: f32[1,8], index: 2, kind: input, shape index: {}]
  %s3 = inlined_call_operand.vmem [shape: bf16[65536,8], index: 3, kind: output, shape index: {}]
  %s4 = sld [smem:[#allocation0]]
  $region65: #{conv3d_bn.1} parent=0
    _
  %s6 = ssub.s32 1, %s4
  %s7 = scalar_select 0, %s6, %s4
  $region1: #{conv3d_bn.1} parent=0
    #allocation3 [shape = 'u8[3145728]{0}', space=vmem, size = 0x300000, scoped, tag = 'input window, operand 0']
    #allocation4 [shape = 's32[2]{0}', space=sflag, size = 0x8, scoped, tag = 'scoped memory for conv3d_bn.1']
    #allocation5 [shape = 'u8[196608]{0}', space=vmem, size = 0x30000, scoped, tag = 'input window, operand 1, single buffered']
    #allocation6 [shape = 's32[1]{0}', space=sflag, size = 0x4, scoped, tag = 'scoped memory for conv3d_bn.1']
    #allocation7 [shape = 'u8[512]{0}', space=vmem, size = 0x400, scoped, tag = 'input window, operand 2, single buffered']
    %8 = vsyncpa [#allocation4], 0
    %s9 = scalar_lea.sflag [#allocation4], 1
    %10 = vsyncpa %s9, 0
    %11 = vsyncpa [#allocation6], 0
    loop: start=0, step=1, limit=66
    $region2: #{conv3d_bn.1} parent=1 // loop_pre_header
      _
    $region3: #{conv3d_bn.1} parent=1 // loop_header
      %s13 = sphi 0, %s17
      %p14 = scmp.ge.s32.totalorder %s13, 66
      %s20 = sphi 0, %s39
      %s21 = sphi 0, %s35
      %s22 = sphi 0, %s31
      %s23 = sphi 0, %s20
      %s24 = sphi 0, %s21
      %s25 = sphi 0, %s22
      %s26 = sphi 0, %s23
      %s27 = sphi 0, %s24
      %s28 = sphi 0, %s25
      %s44 = sphi 0, %s46
      %s47 = sphi 0, %s44
      %s48 = sphi 0, %s47
      %s64 = sphi 0, %s48
      %s72 = sphi 0, %s74
      %s75 = sphi 0, %s72
      %s76 = sphi 0, %s75
      %s92 = sphi 0, %s76
      %s98 = sphi 0, %s100
      %s101 = sphi 0, %s98
      %s102 = sphi 0, %s101
      %s118 = sphi 0, %s102
      %s126 = sphi 0, %s128
      %s129 = sphi 0, %s126
      %s130 = sphi 0, %s129
      %s146 = sphi 0, %s130
    $region4: #{conv3d_bn.1} parent=1 // loop_header_branch
      %16 = sbr.rel (%p14) target = $region8
    $region5: #{conv3d_bn.1} parent=1 // loop_body
      %s18 = ssub.s32 %s13, 1
      %s19 = ssub.s32 %s13, 2
      %s29 = sadd.s32 1, %s22
      %p30 = scmp.ge.s32.totalorder %s29, 1
      %s31 = scalar_select %p30, 0, %s29
      %s32 = sadd.s32 1, %s21
      %s33 = scalar_select %p30, %s32, %s21
      %p34 = scmp.ge.s32.totalorder %s33, 1
      %s35 = scalar_select %p34, 0, %s33
      %s36 = sadd.s32 1, %s20
      %s37 = scalar_select %p34, %s36, %s20
      %p38 = scmp.ge.s32.totalorder %s37, 64
      %s39 = scalar_select %p38, 0, %s37
      %s40 = ssub.s32 %s20, %s39
      %s41 = ssub.s32 %s22, %s31
      %s42 = sor.u32 %s40, %s41
      %p43 = scmp.eq.s32.totalorder %s42, 0
      %s45 = sadd.s32 %s44, 1
      %s46 = scalar_select %p43, %s44, %s45
      %p49 = pneg %p43
      %p50 = scmp.eq.s32.totalorder %s13, 63
      %p51 = por %p49, %p50
      %p52 = scmp.ne.s32.totalorder %s44, %s47
      %p53 = scmp.eq.s32.totalorder %s13, 0
      %p54 = por %p52, %p53
      %p55 = scmp.ne.s32.totalorder %s44, %s47
      %p56 = scmp.eq.s32.totalorder %s18, 63
      %p57 = por %p55, %p56
      %p58 = scmp.ne.s32.totalorder %s47, %s48
      %p59 = scmp.eq.s32.totalorder %s18, 0
      %p60 = por %p58, %p59
      %p61 = scmp.ne.s32.totalorder %s47, %s48
      %p62 = scmp.eq.s32.totalorder %s19, 63
      %p63 = por %p61, %p62
      %p65 = scmp.ne.s32.totalorder %s48, %s64
      %p66 = scmp.eq.s32.totalorder %s19, 0
      %p67 = por %p65, %p66
      %s68 = ssub.s32 %s22, %s31
      %s69 = ssub.s32 %s21, %s35
      %s70 = sor.u32 %s68, %s69
      %p71 = scmp.eq.s32.totalorder %s70, 0
      %s73 = sadd.s32 %s72, 1
      %s74 = scalar_select %p71, %s72, %s73
      %p77 = pneg %p71
      %p78 = scmp.eq.s32.totalorder %s13, 63
      %p79 = por %p77, %p78
      %p80 = scmp.ne.s32.totalorder %s72, %s75
      %p81 = scmp.eq.s32.totalorder %s13, 0
      %p82 = por %p80, %p81
      %p83 = scmp.ne.s32.totalorder %s72, %s75
      %p84 = scmp.eq.s32.totalorder %s18, 63
      %p85 = por %p83, %p84
      %p86 = scmp.ne.s32.totalorder %s75, %s76
      %p87 = scmp.eq.s32.totalorder %s18, 0
      %p88 = por %p86, %p87
      %p89 = scmp.ne.s32.totalorder %s75, %s76
      %p90 = scmp.eq.s32.totalorder %s19, 63
      %p91 = por %p89, %p90
      %p93 = scmp.ne.s32.totalorder %s76, %s92
      %p94 = scmp.eq.s32.totalorder %s19, 0
      %p95 = por %p93, %p94
      %s96 = ssub.s32 %s21, %s35
      %p97 = scmp.eq.s32.totalorder %s96, 0
      %s99 = sadd.s32 %s98, 1
      %s100 = scalar_select %p97, %s98, %s99
      %p103 = pneg %p97
      %p104 = scmp.eq.s32.totalorder %s13, 63
      %p105 = por %p103, %p104
      %p106 = scmp.ne.s32.totalorder %s98, %s101
      %p107 = scmp.eq.s32.totalorder %s13, 0
      %p108 = por %p106, %p107
      %p109 = scmp.ne.s32.totalorder %s98, %s101
      %p110 = scmp.eq.s32.totalorder %s18, 63
      %p111 = por %p109, %p110
      %p112 = scmp.ne.s32.totalorder %s101, %s102
      %p113 = scmp.eq.s32.totalorder %s18, 0
      %p114 = por %p112, %p113
      %p115 = scmp.ne.s32.totalorder %s101, %s102
      %p116 = scmp.eq.s32.totalorder %s19, 63
      %p117 = por %p115, %p116
      %p119 = scmp.ne.s32.totalorder %s102, %s118
      %p120 = scmp.eq.s32.totalorder %s19, 0
      %p121 = por %p119, %p120
      %s122 = ssub.s32 %s20, %s39
      %s123 = ssub.s32 %s21, %s35
      %s124 = sor.u32 %s122, %s123
      %p125 = scmp.eq.s32.totalorder %s124, 0
      %s127 = sadd.s32 %s126, 1
      %s128 = scalar_select %p125, %s126, %s127
      %p131 = pneg %p125
      %p132 = scmp.eq.s32.totalorder %s13, 63
      %p133 = por %p131, %p132
      %p134 = scmp.ne.s32.totalorder %s126, %s129
      %p135 = scmp.eq.s32.totalorder %s13, 0
      %p136 = por %p134, %p135
      %p137 = scmp.ne.s32.totalorder %s126, %s129
      %p138 = scmp.eq.s32.totalorder %s18, 63
      %p139 = por %p137, %p138
      %p140 = scmp.ne.s32.totalorder %s129, %s130
      %p141 = scmp.eq.s32.totalorder %s18, 0
      %p142 = por %p140, %p141
      %p143 = scmp.ne.s32.totalorder %s129, %s130
      %p144 = scmp.eq.s32.totalorder %s19, 63
      %p145 = por %p143, %p144
      %p147 = scmp.ne.s32.totalorder %s130, %s146
      %p148 = scmp.eq.s32.totalorder %s19, 0
      %p149 = por %p147, %p148
      %p150 = scmp.le.s32.totalorder 1, %s13
      %p151 = scmp.lt.s32.totalorder %s13, 65
      %p152 = pnand %p150, %p151
      %p153 = pneg %p152
      // Predicated region
      $region9: #{conv3d_bn.1} parent=5 // pred_check
        _
      $region10: #{conv3d_bn.1} parent=5 // pred_check_branch
        %155 = sbr.rel (%p152) target = $region12
      $region11: #{conv3d_bn.1} parent=5 // pred_region
        %s156 = ssub.s32 %s13, 1
        // Predicated region
        $region13: #{conv3d_bn.1} parent=11 // pred_check
          %p157 = pneg %p88
        $region14: #{conv3d_bn.1} parent=11 // pred_check_branch
          %159 = sbr.rel (%p157) target = $region16
        $region15: #{conv3d_bn.1} parent=11 // pred_region
          %s160 = smul.u32 96, %s25
          %s162 = ssub.s32 6144, 6144
          %163 = vsyncadd [#allocation6], %s162
          %s164 = sadd.s32 %s24, %s160
          %s165 = smul.addr %s164, 64
          %s166 = scalar_lea.hbm %s1, %s165
          %s167 = sshll.u32 [#allocation5], 4
          %s168 = int_to_ptr.vmem [resolvable:$true] %s167
          %173 = dma.hbm_to_vmem [thread:$0]  %s166, 6144, %s168, [#allocation6], 64, 64, 4
        $region16: #{conv3d_bn.1} parent=11 // pred_fallthru
          _
        // Predicated region
        $region17: #{conv3d_bn.1} parent=11 // pred_check
          %p174 = pneg %p114
        $region18: #{conv3d_bn.1} parent=11 // pred_check_branch
          %176 = sbr.rel (%p174) target = $region20
        $region19: #{conv3d_bn.1} parent=11 // pred_region
          %s178 = ssub.s32 16, 16
          %179 = vsyncadd [#allocation6], %s178
          %s180 = smul.addr %s24, 16
          %s181 = scalar_lea.hbm %s2, %s180
          %s183 = sshll.u32 [#allocation7], 4
          %s184 = int_to_ptr.vmem [resolvable:$true] %s183
          %186 = dma.hbm_to_vmem [thread:$0]  %s181, 16, %s184, [#allocation6]
        $region20: #{conv3d_bn.1} parent=11 // pred_fallthru
          _
      $region12: #{conv3d_bn.1} parent=5 // pred_fallthru
        _
      %p187 = scmp.lt.s32.totalorder %s13, 64
      // Predicated region
      $region21: #{conv3d_bn.1} parent=5 // pred_check
        %p188 = pneg %p187
      $region22: #{conv3d_bn.1} parent=5 // pred_check_branch
        %190 = sbr.rel (%p188) target = $region24
      $region23: #{conv3d_bn.1} parent=5 // pred_region
        // Predicated region
        $region25: #{conv3d_bn.1} parent=23 // pred_check
          %p191 = pneg %p54
        $region26: #{conv3d_bn.1} parent=23 // pred_check_branch
          %193 = sbr.rel (%p191) target = $region28
        $region27: #{conv3d_bn.1} parent=23 // pred_region
          %s194 = sand.u32 %s44, 1
          %s195 = scalar_lea.sflag [#allocation4], %s194
          %s196 = sand.u32 %s44, 1
          %s197 = smul.addr %s196, 3072
          %s198 = scalar_lea.vmem [#allocation3], %s197
          %s199 = smul.u32 128, %s20
          %s200 = smul.u32 6, %s22
          %s202 = ssub.s32 49152, 49152
          %203 = vsyncadd %s195, %s202
          %s204 = smul.addr %s199, 6
          %s205 = sadd.s32 %s200, %s204
          %s206 = smul.addr %s205, 64
          %s207 = scalar_lea.hbm %s0, %s206
          %s208 = sshll.u32 %s198, 4
          %s209 = int_to_ptr.vmem [resolvable:$true] %s208
          %214 = dma.hbm_to_vmem [thread:$0]  %s207, 49152, %s209, %s195, 384, 384, 24
        $region28: #{conv3d_bn.1} parent=23 // pred_fallthru
          _
      $region24: #{conv3d_bn.1} parent=5 // pred_fallthru
        _
      %p215 = scmp.le.s32.totalorder 1, %s13
      %p216 = scmp.lt.s32.totalorder %s13, 65
      %p217 = pnand %p215, %p216
      %p218 = pneg %p217
      // Predicated region
      $region29: #{conv3d_bn.1} parent=5 // pred_check
        _
      $region30: #{conv3d_bn.1} parent=5 // pred_check_branch
        %220 = sbr.rel (%p217) target = $region32
      $region31: #{conv3d_bn.1} parent=5 // pred_region
        %s221 = ssub.s32 %s13, 1
        %s222 = sand.u32 %s47, 1
        %s223 = scalar_lea.sflag [#allocation4], %s222
        %s224 = sand.u32 %s47, 1
        %s225 = smul.addr %s224, 3072
        %s226 = scalar_lea.vmem [#allocation3], %s225
        // Predicated region
        $region33: #{conv3d_bn.1} parent=31 // pred_check
          %p227 = pneg %p60
        $region34: #{conv3d_bn.1} parent=31 // pred_check_branch
          %229 = sbr.rel (%p227) target = $region36
        $region35: #{conv3d_bn.1} parent=31 // pred_region
          %230 = dma.done %s223, 49152
        $region36: #{conv3d_bn.1} parent=31 // pred_fallthru
          _
        // Predicated region
        $region37: #{conv3d_bn.1} parent=31 // pred_check
          %p231 = pneg %p88
        $region38: #{conv3d_bn.1} parent=31 // pred_check_branch
          %233 = sbr.rel (%p231) target = $region40
        $region39: #{conv3d_bn.1} parent=31 // pred_region
          %234 = dma.done [#allocation6], 6144
        $region40: #{conv3d_bn.1} parent=31 // pred_fallthru
          _
        // Predicated region
        $region41: #{conv3d_bn.1} parent=31 // pred_check
          %p235 = pneg %p114
        $region42: #{conv3d_bn.1} parent=31 // pred_check_branch
          %237 = sbr.rel (%p235) target = $region44
        $region43: #{conv3d_bn.1} parent=31 // pred_region
          %238 = dma.done [#allocation6], 16
        $region44: #{conv3d_bn.1} parent=31 // pred_fallthru
          _
        %s239 = sand.u32 %s47, 1
        %s240 = scalar_lea.sflag [#allocation4], %s239
        %s241 = sand.u32 %s47, 1
        %s242 = smul.addr %s241, 3072
        %s243 = scalar_lea.vmem [#allocation3], %s242
        %p244 = pneg %p60
        %p245 = pneg %p57
        %p246 = pneg %p88
        %p247 = pneg %p85
        %p248 = pneg %p114
        %p249 = pneg %p111
        %p250 = pneg %p142
        %p251 = pneg %p139
        %s252 = smul.u32 128, %s23
        %p253 = scmp.lt.s32.totalorder %s252, 8191
        %s254 = scalar_select %p253, %s252, 8191
        %p255 = scmp.lt.s32.totalorder %s24, 0
        %s256 = scalar_select %p255, %s24, 0
        %s257 = sadd.s32 %s256, %s254
        %s258 = smul.addr %s257, 4
        %s259 = scalar_lea.vmem %s3, %s258
        %s260 = smul.u32 128, %s23
        %s261 = smul.u32 6, %s25
        %s262 = smul.u32 96, %s25
        %s263 = smul.u32 128, %s23
        %p264 = scmp.lt.s32.totalorder %s263, 8191
        %s265 = scalar_select %p264, %s263, 8191
        %p266 = scmp.lt.s32.totalorder %s24, 0
        %s267 = scalar_select %p266, %s24, 0
        %s268 = sadd.s32 %s267, %s265
        %s269 = smul.addr %s268, 4
        %s270 = scalar_lea.vmem %s3, %s269
        %s271 = smul.u32 128, %s23
        %p273 = scmp.eq.s32.totalorder %s25, 0
        // Predicated region
        $region45: #{conv3d_bn.1} parent=31 // pred_check
          %p274 = pneg %p273
        $region46: #{conv3d_bn.1} parent=31 // pred_check_branch
          %276 = sbr.rel (%p274) target = $region48
        $region47: #{conv3d_bn.1} parent=31 // pred_region
          %vm277 = vcmask 64512
          %278 = vst.msk [vmem:[#allocation2] sm:$0xff] %vm277, 0.0
          %279 = vst.msk [vmem:[#allocation2 + $0x8] sm:$0xff] %vm277, 0.0
          %280 = vst.msk [vmem:[#allocation2 + $0x10] sm:$0xff] %vm277, 0.0
          %281 = vst.msk [vmem:[#allocation2 + $0x18] sm:$0xff] %vm277, 0.0
          %282 = vst.msk [vmem:[#allocation2 + $0x20] sm:$0xff] %vm277, 0.0
          %283 = vst.msk [vmem:[#allocation2 + $0x28] sm:$0xff] %vm277, 0.0
          %284 = vst.msk [vmem:[#allocation2 + $0x30] sm:$0xff] %vm277, 0.0
          %285 = vst.msk [vmem:[#allocation2 + $0x38] sm:$0xff] %vm277, 0.0
          %286 = vst.msk [vmem:[#allocation2 + $0x40] sm:$0xff] %vm277, 0.0
          %287 = vst.msk [vmem:[#allocation2 + $0x48] sm:$0xff] %vm277, 0.0
          %288 = vst.msk [vmem:[#allocation2 + $0x50] sm:$0xff] %vm277, 0.0
          %289 = vst.msk [vmem:[#allocation2 + $0x58] sm:$0xff] %vm277, 0.0
          %290 = vst.msk [vmem:[#allocation2 + $0x60] sm:$0xff] %vm277, 0.0
          %291 = vst.msk [vmem:[#allocation2 + $0x68] sm:$0xff] %vm277, 0.0
          %292 = vst.msk [vmem:[#allocation2 + $0x70] sm:$0xff] %vm277, 0.0
          %293 = vst.msk [vmem:[#allocation2 + $0x78] sm:$0xff] %vm277, 0.0
          %294 = vst.msk [vmem:[#allocation2 + $0x80] sm:$0xff] %vm277, 0.0
          %295 = vst.msk [vmem:[#allocation2 + $0x88] sm:$0xff] %vm277, 0.0
          %296 = vst.msk [vmem:[#allocation2 + $0x90] sm:$0xff] %vm277, 0.0
          %297 = vst.msk [vmem:[#allocation2 + $0x98] sm:$0xff] %vm277, 0.0
          %298 = vst.msk [vmem:[#allocation2 + $0xa0] sm:$0xff] %vm277, 0.0
          %299 = vst.msk [vmem:[#allocation2 + $0xa8] sm:$0xff] %vm277, 0.0
          %300 = vst.msk [vmem:[#allocation2 + $0xb0] sm:$0xff] %vm277, 0.0
          %301 = vst.msk [vmem:[#allocation2 + $0xb8] sm:$0xff] %vm277, 0.0
          %302 = vst.msk [vmem:[#allocation2 + $0xc0] sm:$0xff] %vm277, 0.0
          %303 = vst.msk [vmem:[#allocation2 + $0xc8] sm:$0xff] %vm277, 0.0
          %304 = vst.msk [vmem:[#allocation2 + $0xd0] sm:$0xff] %vm277, 0.0
          %305 = vst.msk [vmem:[#allocation2 + $0xd8] sm:$0xff] %vm277, 0.0
          %306 = vst.msk [vmem:[#allocation2 + $0xe0] sm:$0xff] %vm277, 0.0
          %307 = vst.msk [vmem:[#allocation2 + $0xe8] sm:$0xff] %vm277, 0.0
          %308 = vst.msk [vmem:[#allocation2 + $0xf0] sm:$0xff] %vm277, 0.0
          %309 = vst.msk [vmem:[#allocation2 + $0xf8] sm:$0xff] %vm277, 0.0
          %310 = vst.msk [vmem:[#allocation2 + $0x100] sm:$0xff] %vm277, 0.0
          %311 = vst.msk [vmem:[#allocation2 + $0x108] sm:$0xff] %vm277, 0.0
          %312 = vst.msk [vmem:[#allocation2 + $0x110] sm:$0xff] %vm277, 0.0
          %313 = vst.msk [vmem:[#allocation2 + $0x118] sm:$0xff] %vm277, 0.0
          %314 = vst.msk [vmem:[#allocation2 + $0x120] sm:$0xff] %vm277, 0.0
          %315 = vst.msk [vmem:[#allocation2 + $0x128] sm:$0xff] %vm277, 0.0
          %316 = vst.msk [vmem:[#allocation2 + $0x130] sm:$0xff] %vm277, 0.0
          %317 = vst.msk [vmem:[#allocation2 + $0x138] sm:$0xff] %vm277, 0.0
          %318 = vst.msk [vmem:[#allocation2 + $0x140] sm:$0xff] %vm277, 0.0
          %319 = vst.msk [vmem:[#allocation2 + $0x148] sm:$0xff] %vm277, 0.0
          %320 = vst.msk [vmem:[#allocation2 + $0x150] sm:$0xff] %vm277, 0.0
          %321 = vst.msk [vmem:[#allocation2 + $0x158] sm:$0xff] %vm277, 0.0
          %322 = vst.msk [vmem:[#allocation2 + $0x160] sm:$0xff] %vm277, 0.0
          %323 = vst.msk [vmem:[#allocation2 + $0x168] sm:$0xff] %vm277, 0.0
          %324 = vst.msk [vmem:[#allocation2 + $0x170] sm:$0xff] %vm277, 0.0
          %325 = vst.msk [vmem:[#allocation2 + $0x178] sm:$0xff] %vm277, 0.0
          %326 = vst.msk [vmem:[#allocation2 + $0x180] sm:$0xff] %vm277, 0.0
          %327 = vst.msk [vmem:[#allocation2 + $0x188] sm:$0xff] %vm277, 0.0
          %328 = vst.msk [vmem:[#allocation2 + $0x190] sm:$0xff] %vm277, 0.0
          %329 = vst.msk [vmem:[#allocation2 + $0x198] sm:$0xff] %vm277, 0.0
          %330 = vst.msk [vmem:[#allocation2 + $0x1a0] sm:$0xff] %vm277, 0.0
          %331 = vst.msk [vmem:[#allocation2 + $0x1a8] sm:$0xff] %vm277, 0.0
          %332 = vst.msk [vmem:[#allocation2 + $0x1b0] sm:$0xff] %vm277, 0.0
          %333 = vst.msk [vmem:[#allocation2 + $0x1b8] sm:$0xff] %vm277, 0.0
          %334 = vst.msk [vmem:[#allocation2 + $0x1c0] sm:$0xff] %vm277, 0.0
          %335 = vst.msk [vmem:[#allocation2 + $0x1c8] sm:$0xff] %vm277, 0.0
          %336 = vst.msk [vmem:[#allocation2 + $0x1d0] sm:$0xff] %vm277, 0.0
          %337 = vst.msk [vmem:[#allocation2 + $0x1d8] sm:$0xff] %vm277, 0.0
          %338 = vst.msk [vmem:[#allocation2 + $0x1e0] sm:$0xff] %vm277, 0.0
          %339 = vst.msk [vmem:[#allocation2 + $0x1e8] sm:$0xff] %vm277, 0.0
          %340 = vst.msk [vmem:[#allocation2 + $0x1f0] sm:$0xff] %vm277, 0.0
          %341 = vst.msk [vmem:[#allocation2 + $0x1f8] sm:$0xff] %vm277, 0.0
          %342 = vst.msk [vmem:[#allocation2 + $0x200] sm:$0xff] %vm277, 0.0
          %343 = vst.msk [vmem:[#allocation2 + $0x208] sm:$0xff] %vm277, 0.0
          %344 = vst.msk [vmem:[#allocation2 + $0x210] sm:$0xff] %vm277, 0.0
          %345 = vst.msk [vmem:[#allocation2 + $0x218] sm:$0xff] %vm277, 0.0
          %346 = vst.msk [vmem:[#allocation2 + $0x220] sm:$0xff] %vm277, 0.0
          %347 = vst.msk [vmem:[#allocation2 + $0x228] sm:$0xff] %vm277, 0.0
          %348 = vst.msk [vmem:[#allocation2 + $0x230] sm:$0xff] %vm277, 0.0
          %349 = vst.msk [vmem:[#allocation2 + $0x238] sm:$0xff] %vm277, 0.0
          %350 = vst.msk [vmem:[#allocation2 + $0x240] sm:$0xff] %vm277, 0.0
          %351 = vst.msk [vmem:[#allocation2 + $0x248] sm:$0xff] %vm277, 0.0
          %352 = vst.msk [vmem:[#allocation2 + $0x250] sm:$0xff] %vm277, 0.0
          %353 = vst.msk [vmem:[#allocation2 + $0x258] sm:$0xff] %vm277, 0.0
          %354 = vst.msk [vmem:[#allocation2 + $0x260] sm:$0xff] %vm277, 0.0
          %355 = vst.msk [vmem:[#allocation2 + $0x268] sm:$0xff] %vm277, 0.0
          %356 = vst.msk [vmem:[#allocation2 + $0x270] sm:$0xff] %vm277, 0.0
          %357 = vst.msk [vmem:[#allocation2 + $0x278] sm:$0xff] %vm277, 0.0
          %358 = vst.msk [vmem:[#allocation2 + $0x280] sm:$0xff] %vm277, 0.0
          %359 = vst.msk [vmem:[#allocation2 + $0x288] sm:$0xff] %vm277, 0.0
          %360 = vst.msk [vmem:[#allocation2 + $0x290] sm:$0xff] %vm277, 0.0
          %361 = vst.msk [vmem:[#allocation2 + $0x298] sm:$0xff] %vm277, 0.0
          %362 = vst.msk [vmem:[#allocation2 + $0x2a0] sm:$0xff] %vm277, 0.0
          %363 = vst.msk [vmem:[#allocation2 + $0x2a8] sm:$0xff] %vm277, 0.0
          %364 = vst.msk [vmem:[#allocation2 + $0x2b0] sm:$0xff] %vm277, 0.0
          %365 = vst.msk [vmem:[#allocation2 + $0x2b8] sm:$0xff] %vm277, 0.0
          %366 = vst.msk [vmem:[#allocation2 + $0x2c0] sm:$0xff] %vm277, 0.0
          %367 = vst.msk [vmem:[#allocation2 + $0x2c8] sm:$0xff] %vm277, 0.0
          %368 = vst.msk [vmem:[#allocation2 + $0x2d0] sm:$0xff] %vm277, 0.0
          %369 = vst.msk [vmem:[#allocation2 + $0x2d8] sm:$0xff] %vm277, 0.0
          %370 = vst.msk [vmem:[#allocation2 + $0x2e0] sm:$0xff] %vm277, 0.0
          %371 = vst.msk [vmem:[#allocation2 + $0x2e8] sm:$0xff] %vm277, 0.0
          %372 = vst.msk [vmem:[#allocation2 + $0x2f0] sm:$0xff] %vm277, 0.0
          %373 = vst.msk [vmem:[#allocation2 + $0x2f8] sm:$0xff] %vm277, 0.0
          %374 = vst.msk [vmem:[#allocation2 + $0x300] sm:$0xff] %vm277, 0.0
          %375 = vst.msk [vmem:[#allocation2 + $0x308] sm:$0xff] %vm277, 0.0
          %376 = vst.msk [vmem:[#allocation2 + $0x310] sm:$0xff] %vm277, 0.0
          %377 = vst.msk [vmem:[#allocation2 + $0x318] sm:$0xff] %vm277, 0.0
          %378 = vst.msk [vmem:[#allocation2 + $0x320] sm:$0xff] %vm277, 0.0
          %379 = vst.msk [vmem:[#allocation2 + $0x328] sm:$0xff] %vm277, 0.0
          %380 = vst.msk [vmem:[#allocation2 + $0x330] sm:$0xff] %vm277, 0.0
          %381 = vst.msk [vmem:[#allocation2 + $0x338] sm:$0xff] %vm277, 0.0
          %382 = vst.msk [vmem:[#allocation2 + $0x340] sm:$0xff] %vm277, 0.0
          %383 = vst.msk [vmem:[#allocation2 + $0x348] sm:$0xff] %vm277, 0.0
          %384 = vst.msk [vmem:[#allocation2 + $0x350] sm:$0xff] %vm277, 0.0
          %385 = vst.msk [vmem:[#allocation2 + $0x358] sm:$0xff] %vm277, 0.0
          %386 = vst.msk [vmem:[#allocation2 + $0x360] sm:$0xff] %vm277, 0.0
          %387 = vst.msk [vmem:[#allocation2 + $0x368] sm:$0xff] %vm277, 0.0
          %388 = vst.msk [vmem:[#allocation2 + $0x370] sm:$0xff] %vm277, 0.0
          %389 = vst.msk [vmem:[#allocation2 + $0x378] sm:$0xff] %vm277, 0.0
          %390 = vst.msk [vmem:[#allocation2 + $0x380] sm:$0xff] %vm277, 0.0
          %391 = vst.msk [vmem:[#allocation2 + $0x388] sm:$0xff] %vm277, 0.0
          %392 = vst.msk [vmem:[#allocation2 + $0x390] sm:$0xff] %vm277, 0.0
          %393 = vst.msk [vmem:[#allocation2 + $0x398] sm:$0xff] %vm277, 0.0
          %394 = vst.msk [vmem:[#allocation2 + $0x3a0] sm:$0xff] %vm277, 0.0
          %395 = vst.msk [vmem:[#allocation2 + $0x3a8] sm:$0xff] %vm277, 0.0
          %396 = vst.msk [vmem:[#allocation2 + $0x3b0] sm:$0xff] %vm277, 0.0
          %397 = vst.msk [vmem:[#allocation2 + $0x3b8] sm:$0xff] %vm277, 0.0
          %398 = vst.msk [vmem:[#allocation2 + $0x3c0] sm:$0xff] %vm277, 0.0
          %399 = vst.msk [vmem:[#allocation2 + $0x3c8] sm:$0xff] %vm277, 0.0
          %400 = vst.msk [vmem:[#allocation2 + $0x3d0] sm:$0xff] %vm277, 0.0
          %401 = vst.msk [vmem:[#allocation2 + $0x3d8] sm:$0xff] %vm277, 0.0
          %402 = vst.msk [vmem:[#allocation2 + $0x3e0] sm:$0xff] %vm277, 0.0
          %403 = vst.msk [vmem:[#allocation2 + $0x3e8] sm:$0xff] %vm277, 0.0
          %404 = vst.msk [vmem:[#allocation2 + $0x3f0] sm:$0xff] %vm277, 0.0
          %405 = vst.msk [vmem:[#allocation2 + $0x3f8] sm:$0xff] %vm277, 0.0
        $region48: #{conv3d_bn.1} parent=31 // pred_fallthru
          _
        %v406 = vld [vmem:[#allocation2] sm:$0xff]
        %v407 = vld [vmem:[#allocation2 + $0x8] sm:$0xff]
        %v408 = vld [vmem:[#allocation2 + $0x10] sm:$0xff]
        %v409 = vld [vmem:[#allocation2 + $0x18] sm:$0xff]
        %v410 = vld [vmem:[#allocation2 + $0x20] sm:$0xff]
        %v411 = vld [vmem:[#allocation2 + $0x28] sm:$0xff]
        %v412 = vld [vmem:[#allocation2 + $0x30] sm:$0xff]
        %v413 = vld [vmem:[#allocation2 + $0x38] sm:$0xff]
        %v414 = vld [vmem:[#allocation2 + $0x40] sm:$0xff]
        %v415 = vld [vmem:[#allocation2 + $0x48] sm:$0xff]
        %v416 = vld [vmem:[#allocation2 + $0x50] sm:$0xff]
        %v417 = vld [vmem:[#allocation2 + $0x58] sm:$0xff]
        %v418 = vld [vmem:[#allocation2 + $0x60] sm:$0xff]
        %v419 = vld [vmem:[#allocation2 + $0x68] sm:$0xff]
        %v420 = vld [vmem:[#allocation2 + $0x70] sm:$0xff]
        %v421 = vld [vmem:[#allocation2 + $0x78] sm:$0xff]
        %v422 = vld [vmem:[#allocation2 + $0x80] sm:$0xff]
        %v423 = vld [vmem:[#allocation2 + $0x88] sm:$0xff]
        %v424 = vld [vmem:[#allocation2 + $0x90] sm:$0xff]
        %v425 = vld [vmem:[#allocation2 + $0x98] sm:$0xff]
        %v426 = vld [vmem:[#allocation2 + $0xa0] sm:$0xff]
        %v427 = vld [vmem:[#allocation2 + $0xa8] sm:$0xff]
        %v428 = vld [vmem:[#allocation2 + $0xb0] sm:$0xff]
        %v429 = vld [vmem:[#allocation2 + $0xb8] sm:$0xff]
        %v430 = vld [vmem:[#allocation2 + $0xc0] sm:$0xff]
        %v431 = vld [vmem:[#allocation2 + $0xc8] sm:$0xff]
        %v432 = vld [vmem:[#allocation2 + $0xd0] sm:$0xff]
        %v433 = vld [vmem:[#allocation2 + $0xd8] sm:$0xff]
        %v434 = vld [vmem:[#allocation2 + $0xe0] sm:$0xff]
        %v435 = vld [vmem:[#allocation2 + $0xe8] sm:$0xff]
        %v436 = vld [vmem:[#allocation2 + $0xf0] sm:$0xff]
        %v437 = vld [vmem:[#allocation2 + $0xf8] sm:$0xff]
        %v438 = vld [vmem:[#allocation2 + $0x100] sm:$0xff]
        %v439 = vld [vmem:[#allocation2 + $0x108] sm:$0xff]
        %v440 = vld [vmem:[#allocation2 + $0x110] sm:$0xff]
        %v441 = vld [vmem:[#allocation2 + $0x118] sm:$0xff]
        %v442 = vld [vmem:[#allocation2 + $0x120] sm:$0xff]
        %v443 = vld [vmem:[#allocation2 + $0x128] sm:$0xff]
        %v444 = vld [vmem:[#allocation2 + $0x130] sm:$0xff]
        %v445 = vld [vmem:[#allocation2 + $0x138] sm:$0xff]
        %v446 = vld [vmem:[#allocation2 + $0x140] sm:$0xff]
        %v447 = vld [vmem:[#allocation2 + $0x148] sm:$0xff]
        %v448 = vld [vmem:[#allocation2 + $0x150] sm:$0xff]
        %v449 = vld [vmem:[#allocation2 + $0x158] sm:$0xff]
        %v450 = vld [vmem:[#allocation2 + $0x160] sm:$0xff]
        %v451 = vld [vmem:[#allocation2 + $0x168] sm:$0xff]
        %v452 = vld [vmem:[#allocation2 + $0x170] sm:$0xff]
        %v453 = vld [vmem:[#allocation2 + $0x178] sm:$0xff]
        %v454 = vld [vmem:[#allocation2 + $0x180] sm:$0xff]
        %v455 = vld [vmem:[#allocation2 + $0x188] sm:$0xff]
        %v456 = vld [vmem:[#allocation2 + $0x190] sm:$0xff]
        %v457 = vld [vmem:[#allocation2 + $0x198] sm:$0xff]
        %v458 = vld [vmem:[#allocation2 + $0x1a0] sm:$0xff]
        %v459 = vld [vmem:[#allocation2 + $0x1a8] sm:$0xff]
        %v460 = vld [vmem:[#allocation2 + $0x1b0] sm:$0xff]
        %v461 = vld [vmem:[#allocation2 + $0x1b8] sm:$0xff]
        %v462 = vld [vmem:[#allocation2 + $0x1c0] sm:$0xff]
        %v463 = vld [vmem:[#allocation2 + $0x1c8] sm:$0xff]
        %v464 = vld [vmem:[#allocation2 + $0x1d0] sm:$0xff]
        %v465 = vld [vmem:[#allocation2 + $0x1d8] sm:$0xff]
        %v466 = vld [vmem:[#allocation2 + $0x1e0] sm:$0xff]
        %v467 = vld [vmem:[#allocation2 + $0x1e8] sm:$0xff]
        %v468 = vld [vmem:[#allocation2 + $0x1f0] sm:$0xff]
        %v469 = vld [vmem:[#allocation2 + $0x1f8] sm:$0xff]
        %v470 = vld [vmem:[#allocation2 + $0x200] sm:$0xff]
        %v471 = vld [vmem:[#allocation2 + $0x208] sm:$0xff]
        %v472 = vld [vmem:[#allocation2 + $0x210] sm:$0xff]
        %v473 = vld [vmem:[#allocation2 + $0x218] sm:$0xff]
        %v474 = vld [vmem:[#allocation2 + $0x220] sm:$0xff]
        %v475 = vld [vmem:[#allocation2 + $0x228] sm:$0xff]
        %v476 = vld [vmem:[#allocation2 + $0x230] sm:$0xff]
        %v477 = vld [vmem:[#allocation2 + $0x238] sm:$0xff]
        %v478 = vld [vmem:[#allocation2 + $0x240] sm:$0xff]
        %v479 = vld [vmem:[#allocation2 + $0x248] sm:$0xff]
        %v480 = vld [vmem:[#allocation2 + $0x250] sm:$0xff]
        %v481 = vld [vmem:[#allocation2 + $0x258] sm:$0xff]
        %v482 = vld [vmem:[#allocation2 + $0x260] sm:$0xff]
        %v483 = vld [vmem:[#allocation2 + $0x268] sm:$0xff]
        %v484 = vld [vmem:[#allocation2 + $0x270] sm:$0xff]
        %v485 = vld [vmem:[#allocation2 + $0x278] sm:$0xff]
        %v486 = vld [vmem:[#allocation2 + $0x280] sm:$0xff]
        %v487 = vld [vmem:[#allocation2 + $0x288] sm:$0xff]
        %v488 = vld [vmem:[#allocation2 + $0x290] sm:$0xff]
        %v489 = vld [vmem:[#allocation2 + $0x298] sm:$0xff]
        %v490 = vld [vmem:[#allocation2 + $0x2a0] sm:$0xff]
        %v491 = vld [vmem:[#allocation2 + $0x2a8] sm:$0xff]
        %v492 = vld [vmem:[#allocation2 + $0x2b0] sm:$0xff]
        %v493 = vld [vmem:[#allocation2 + $0x2b8] sm:$0xff]
        %v494 = vld [vmem:[#allocation2 + $0x2c0] sm:$0xff]
        %v495 = vld [vmem:[#allocation2 + $0x2c8] sm:$0xff]
        %v496 = vld [vmem:[#allocation2 + $0x2d0] sm:$0xff]
        %v497 = vld [vmem:[#allocation2 + $0x2d8] sm:$0xff]
        %v498 = vld [vmem:[#allocation2 + $0x2e0] sm:$0xff]
        %v499 = vld [vmem:[#allocation2 + $0x2e8] sm:$0xff]
        %v500 = vld [vmem:[#allocation2 + $0x2f0] sm:$0xff]
        %v501 = vld [vmem:[#allocation2 + $0x2f8] sm:$0xff]
        %v502 = vld [vmem:[#allocation2 + $0x300] sm:$0xff]
        %v503 = vld [vmem:[#allocation2 + $0x308] sm:$0xff]
        %v504 = vld [vmem:[#allocation2 + $0x310] sm:$0xff]
        %v505 = vld [vmem:[#allocation2 + $0x318] sm:$0xff]
        %v506 = vld [vmem:[#allocation2 + $0x320] sm:$0xff]
        %v507 = vld [vmem:[#allocation2 + $0x328] sm:$0xff]
        %v508 = vld [vmem:[#allocation2 + $0x330] sm:$0xff]
        %v509 = vld [vmem:[#allocation2 + $0x338] sm:$0xff]
        %v510 = vld [vmem:[#allocation2 + $0x340] sm:$0xff]
        %v511 = vld [vmem:[#allocation2 + $0x348] sm:$0xff]
        %v512 = vld [vmem:[#allocation2 + $0x350] sm:$0xff]
        %v513 = vld [vmem:[#allocation2 + $0x358] sm:$0xff]
        %v514 = vld [vmem:[#allocation2 + $0x360] sm:$0xff]
        %v515 = vld [vmem:[#allocation2 + $0x368] sm:$0xff]
        %v516 = vld [vmem:[#allocation2 + $0x370] sm:$0xff]
        %v517 = vld [vmem:[#allocation2 + $0x378] sm:$0xff]
        %v518 = vld [vmem:[#allocation2 + $0x380] sm:$0xff]
        %v519 = vld [vmem:[#allocation2 + $0x388] sm:$0xff]
        %v520 = vld [vmem:[#allocation2 + $0x390] sm:$0xff]
        %v521 = vld [vmem:[#allocation2 + $0x398] sm:$0xff]
        %v522 = vld [vmem:[#allocation2 + $0x3a0] sm:$0xff]
        %v523 = vld [vmem:[#allocation2 + $0x3a8] sm:$0xff]
        %v524 = vld [vmem:[#allocation2 + $0x3b0] sm:$0xff]
        %v525 = vld [vmem:[#allocation2 + $0x3b8] sm:$0xff]
        %v526 = vld [vmem:[#allocation2 + $0x3c0] sm:$0xff]
        %v527 = vld [vmem:[#allocation2 + $0x3c8] sm:$0xff]
        %v528 = vld [vmem:[#allocation2 + $0x3d0] sm:$0xff]
        %v529 = vld [vmem:[#allocation2 + $0x3d8] sm:$0xff]
        %v530 = vld [vmem:[#allocation2 + $0x3e0] sm:$0xff]
        %v531 = vld [vmem:[#allocation2 + $0x3e8] sm:$0xff]
        %v532 = vld [vmem:[#allocation2 + $0x3f0] sm:$0xff]
        %v533 = vld [vmem:[#allocation2 + $0x3f8] sm:$0xff]
        %v534 = vld [vmem:[%s226] sm:$0xff]
        %v535 = vld [vmem:[%s226 + $0x8] sm:$0xff]
        %v536 = vld [vmem:[%s226 + $0x10] sm:$0xff]
        %v537 = vld [vmem:[%s226 + $0x18] sm:$0xff]
        %v538 = vld [vmem:[%s226 + $0x20] sm:$0xff]
        %v539 = vld [vmem:[%s226 + $0x28] sm:$0xff]
        %v540 = vld [vmem:[%s226 + $0x30] sm:$0xff]
        %v541 = vld [vmem:[%s226 + $0x38] sm:$0xff]
        %v542 = vld [vmem:[%s226 + $0x40] sm:$0xff]
        %v543 = vld [vmem:[%s226 + $0x48] sm:$0xff]
        %v544 = vld [vmem:[%s226 + $0x50] sm:$0xff]
        %v545 = vld [vmem:[%s226 + $0x58] sm:$0xff]
        %v546 = vld [vmem:[%s226 + $0x60] sm:$0xff]
        %v547 = vld [vmem:[%s226 + $0x68] sm:$0xff]
        %v548 = vld [vmem:[%s226 + $0x70] sm:$0xff]
        %v549 = vld [vmem:[%s226 + $0x78] sm:$0xff]
        %v550 = vld [vmem:[%s226 + $0x80] sm:$0xff]
        %v551 = vld [vmem:[%s226 + $0x88] sm:$0xff]
        %v552 = vld [vmem:[%s226 + $0x90] sm:$0xff]
        %v553 = vld [vmem:[%s226 + $0x98] sm:$0xff]
        %v554 = vld [vmem:[%s226 + $0xa0] sm:$0xff]
        %v555 = vld [vmem:[%s226 + $0xa8] sm:$0xff]
        %v556 = vld [vmem:[%s226 + $0xb0] sm:$0xff]
        %v557 = vld [vmem:[%s226 + $0xb8] sm:$0xff]
        %v558 = vld [vmem:[%s226 + $0xc0] sm:$0xff]
        %v559 = vld [vmem:[%s226 + $0xc8] sm:$0xff]
        %v560 = vld [vmem:[%s226 + $0xd0] sm:$0xff]
        %v561 = vld [vmem:[%s226 + $0xd8] sm:$0xff]
        %v562 = vld [vmem:[%s226 + $0xe0] sm:$0xff]
        %v563 = vld [vmem:[%s226 + $0xe8] sm:$0xff]
        %v564 = vld [vmem:[%s226 + $0xf0] sm:$0xff]
        %v565 = vld [vmem:[%s226 + $0xf8] sm:$0xff]
        %v566 = vld [vmem:[%s226 + $0x100] sm:$0xff]
        %v567 = vld [vmem:[%s226 + $0x108] sm:$0xff]
        %v568 = vld [vmem:[%s226 + $0x110] sm:$0xff]
        %v569 = vld [vmem:[%s226 + $0x118] sm:$0xff]
        %v570 = vld [vmem:[%s226 + $0x120] sm:$0xff]
        %v571 = vld [vmem:[%s226 + $0x128] sm:$0xff]
        %v572 = vld [vmem:[%s226 + $0x130] sm:$0xff]
        %v573 = vld [vmem:[%s226 + $0x138] sm:$0xff]
        %v574 = vld [vmem:[%s226 + $0x140] sm:$0xff]
        %v575 = vld [vmem:[%s226 + $0x148] sm:$0xff]
        %v576 = vld [vmem:[%s226 + $0x150] sm:$0xff]
        %v577 = vld [vmem:[%s226 + $0x158] sm:$0xff]
        %v578 = vld [vmem:[%s226 + $0x160] sm:$0xff]
        %v579 = vld [vmem:[%s226 + $0x168] sm:$0xff]
        %v580 = vld [vmem:[%s226 + $0x170] sm:$0xff]
        %v581 = vld [vmem:[%s226 + $0x178] sm:$0xff]
        %v582 = vld [vmem:[%s226 + $0x180] sm:$0xff]
        %v583 = vld [vmem:[%s226 + $0x188] sm:$0xff]
        %v584 = vld [vmem:[%s226 + $0x190] sm:$0xff]
        %v585 = vld [vmem:[%s226 + $0x198] sm:$0xff]
        %v586 = vld [vmem:[%s226 + $0x1a0] sm:$0xff]
        %v587 = vld [vmem:[%s226 + $0x1a8] sm:$0xff]
        %v588 = vld [vmem:[%s226 + $0x1b0] sm:$0xff]
        %v589 = vld [vmem:[%s226 + $0x1b8] sm:$0xff]
        %v590 = vld [vmem:[%s226 + $0x1c0] sm:$0xff]
        %v591 = vld [vmem:[%s226 + $0x1c8] sm:$0xff]
        %v592 = vld [vmem:[%s226 + $0x1d0] sm:$0xff]
        %v593 = vld [vmem:[%s226 + $0x1d8] sm:$0xff]
        %v594 = vld [vmem:[%s226 + $0x1e0] sm:$0xff]
        %v595 = vld [vmem:[%s226 + $0x1e8] sm:$0xff]
        %v596 = vld [vmem:[%s226 + $0x1f0] sm:$0xff]
        %v597 = vld [vmem:[%s226 + $0x1f8] sm:$0xff]
        %v598 = vld [vmem:[%s226 + $0x200] sm:$0xff]
        %v599 = vld [vmem:[%s226 + $0x208] sm:$0xff]
        %v600 = vld [vmem:[%s226 + $0x210] sm:$0xff]
        %v601 = vld [vmem:[%s226 + $0x218] sm:$0xff]
        %v602 = vld [vmem:[%s226 + $0x220] sm:$0xff]
        %v603 = vld [vmem:[%s226 + $0x228] sm:$0xff]
        %v604 = vld [vmem:[%s226 + $0x230] sm:$0xff]
        %v605 = vld [vmem:[%s226 + $0x238] sm:$0xff]
        %v606 = vld [vmem:[%s226 + $0x240] sm:$0xff]
        %v607 = vld [vmem:[%s226 + $0x248] sm:$0xff]
        %v608 = vld [vmem:[%s226 + $0x250] sm:$0xff]
        %v609 = vld [vmem:[%s226 + $0x258] sm:$0xff]
        %v610 = vld [vmem:[%s226 + $0x260] sm:$0xff]
        %v611 = vld [vmem:[%s226 + $0x268] sm:$0xff]
        %v612 = vld [vmem:[%s226 + $0x270] sm:$0xff]
        %v613 = vld [vmem:[%s226 + $0x278] sm:$0xff]
        %v614 = vld [vmem:[%s226 + $0x280] sm:$0xff]
        %v615 = vld [vmem:[%s226 + $0x288] sm:$0xff]
        %v616 = vld [vmem:[%s226 + $0x290] sm:$0xff]
        %v617 = vld [vmem:[%s226 + $0x298] sm:$0xff]
        %v618 = vld [vmem:[%s226 + $0x2a0] sm:$0xff]
        %v619 = vld [vmem:[%s226 + $0x2a8] sm:$0xff]
        %v620 = vld [vmem:[%s226 + $0x2b0] sm:$0xff]
        %v621 = vld [vmem:[%s226 + $0x2b8] sm:$0xff]
        %v622 = vld [vmem:[%s226 + $0x2c0] sm:$0xff]
        %v623 = vld [vmem:[%s226 + $0x2c8] sm:$0xff]
        %v624 = vld [vmem:[%s226 + $0x2d0] sm:$0xff]
        %v625 = vld [vmem:[%s226 + $0x2d8] sm:$0xff]
        %v626 = vld [vmem:[%s226 + $0x2e0] sm:$0xff]
        %v627 = vld [vmem:[%s226 + $0x2e8] sm:$0xff]
        %v628 = vld [vmem:[%s226 + $0x2f0] sm:$0xff]
        %v629 = vld [vmem:[%s226 + $0x2f8] sm:$0xff]
        %v630 = vld [vmem:[%s226 + $0x300] sm:$0xff]
        %v631 = vld [vmem:[%s226 + $0x308] sm:$0xff]
        %v632 = vld [vmem:[%s226 + $0x310] sm:$0xff]
        %v633 = vld [vmem:[%s226 + $0x318] sm:$0xff]
        %v634 = vld [vmem:[%s226 + $0x320] sm:$0xff]
        %v635 = vld [vmem:[%s226 + $0x328] sm:$0xff]
        %v636 = vld [vmem:[%s226 + $0x330] sm:$0xff]
        %v637 = vld [vmem:[%s226 + $0x338] sm:$0xff]
        %v638 = vld [vmem:[%s226 + $0x340] sm:$0xff]
        %v639 = vld [vmem:[%s226 + $0x348] sm:$0xff]
        %v640 = vld [vmem:[%s226 + $0x350] sm:$0xff]
        %v641 = vld [vmem:[%s226 + $0x358] sm:$0xff]
        %v642 = vld [vmem:[%s226 + $0x360] sm:$0xff]
        %v643 = vld [vmem:[%s226 + $0x368] sm:$0xff]
        %v644 = vld [vmem:[%s226 + $0x370] sm:$0xff]
        %v645 = vld [vmem:[%s226 + $0x378] sm:$0xff]
        %v646 = vld [vmem:[%s226 + $0x380] sm:$0xff]
        %v647 = vld [vmem:[%s226 + $0x388] sm:$0xff]
        %v648 = vld [vmem:[%s226 + $0x390] sm:$0xff]
        %v649 = vld [vmem:[%s226 + $0x398] sm:$0xff]
        %v650 = vld [vmem:[%s226 + $0x3a0] sm:$0xff]
        %v651 = vld [vmem:[%s226 + $0x3a8] sm:$0xff]
        %v652 = vld [vmem:[%s226 + $0x3b0] sm:$0xff]
        %v653 = vld [vmem:[%s226 + $0x3b8] sm:$0xff]
        %v654 = vld [vmem:[%s226 + $0x3c0] sm:$0xff]
        %v655 = vld [vmem:[%s226 + $0x3c8] sm:$0xff]
        %v656 = vld [vmem:[%s226 + $0x3d0] sm:$0xff]
        %v657 = vld [vmem:[%s226 + $0x3d8] sm:$0xff]
        %v658 = vld [vmem:[%s226 + $0x3e0] sm:$0xff]
        %v659 = vld [vmem:[%s226 + $0x3e8] sm:$0xff]
        %v660 = vld [vmem:[%s226 + $0x3f0] sm:$0xff]
        %v661 = vld [vmem:[%s226 + $0x3f8] sm:$0xff]
        %v662 = vld [vmem:[%s226 + $0x400] sm:$0xff]
        %v663 = vld [vmem:[%s226 + $0x408] sm:$0xff]
        %v664 = vld [vmem:[%s226 + $0x410] sm:$0xff]
        %v665 = vld [vmem:[%s226 + $0x418] sm:$0xff]
        %v666 = vld [vmem:[%s226 + $0x420] sm:$0xff]
        %v667 = vld [vmem:[%s226 + $0x428] sm:$0xff]
        %v668 = vld [vmem:[%s226 + $0x430] sm:$0xff]
        %v669 = vld [vmem:[%s226 + $0x438] sm:$0xff]
        %v670 = vld [vmem:[%s226 + $0x440] sm:$0xff]
        %v671 = vld [vmem:[%s226 + $0x448] sm:$0xff]
        %v672 = vld [vmem:[%s226 + $0x450] sm:$0xff]
        %v673 = vld [vmem:[%s226 + $0x458] sm:$0xff]
        %v674 = vld [vmem:[%s226 + $0x460] sm:$0xff]
        %v675 = vld [vmem:[%s226 + $0x468] sm:$0xff]
        %v676 = vld [vmem:[%s226 + $0x470] sm:$0xff]
        %v677 = vld [vmem:[%s226 + $0x478] sm:$0xff]
        %v678 = vld [vmem:[%s226 + $0x480] sm:$0xff]
        %v679 = vld [vmem:[%s226 + $0x488] sm:$0xff]
        %v680 = vld [vmem:[%s226 + $0x490] sm:$0xff]
        %v681 = vld [vmem:[%s226 + $0x498] sm:$0xff]
        %v682 = vld [vmem:[%s226 + $0x4a0] sm:$0xff]
        %v683 = vld [vmem:[%s226 + $0x4a8] sm:$0xff]
        %v684 = vld [vmem:[%s226 + $0x4b0] sm:$0xff]
        %v685 = vld [vmem:[%s226 + $0x4b8] sm:$0xff]
        %v686 = vld [vmem:[%s226 + $0x4c0] sm:$0xff]
        %v687 = vld [vmem:[%s226 + $0x4c8] sm:$0xff]
        %v688 = vld [vmem:[%s226 + $0x4d0] sm:$0xff]
        %v689 = vld [vmem:[%s226 + $0x4d8] sm:$0xff]
        %v690 = vld [vmem:[%s226 + $0x4e0] sm:$0xff]
        %v691 = vld [vmem:[%s226 + $0x4e8] sm:$0xff]
        %v692 = vld [vmem:[%s226 + $0x4f0] sm:$0xff]
        %v693 = vld [vmem:[%s226 + $0x4f8] sm:$0xff]
        %v694 = vld [vmem:[%s226 + $0x500] sm:$0xff]
        %v695 = vld [vmem:[%s226 + $0x508] sm:$0xff]
        %v696 = vld [vmem:[%s226 + $0x510] sm:$0xff]
        %v697 = vld [vmem:[%s226 + $0x518] sm:$0xff]
        %v698 = vld [vmem:[%s226 + $0x520] sm:$0xff]
        %v699 = vld [vmem:[%s226 + $0x528] sm:$0xff]
        %v700 = vld [vmem:[%s226 + $0x530] sm:$0xff]
        %v701 = vld [vmem:[%s226 + $0x538] sm:$0xff]
        %v702 = vld [vmem:[%s226 + $0x540] sm:$0xff]
        %v703 = vld [vmem:[%s226 + $0x548] sm:$0xff]
        %v704 = vld [vmem:[%s226 + $0x550] sm:$0xff]
        %v705 = vld [vmem:[%s226 + $0x558] sm:$0xff]
        %v706 = vld [vmem:[%s226 + $0x560] sm:$0xff]
        %v707 = vld [vmem:[%s226 + $0x568] sm:$0xff]
        %v708 = vld [vmem:[%s226 + $0x570] sm:$0xff]
        %v709 = vld [vmem:[%s226 + $0x578] sm:$0xff]
        %v710 = vld [vmem:[%s226 + $0x580] sm:$0xff]
        %v711 = vld [vmem:[%s226 + $0x588] sm:$0xff]
        %v712 = vld [vmem:[%s226 + $0x590] sm:$0xff]
        %v713 = vld [vmem:[%s226 + $0x598] sm:$0xff]
        %v714 = vld [vmem:[%s226 + $0x5a0] sm:$0xff]
        %v715 = vld [vmem:[%s226 + $0x5a8] sm:$0xff]
        %v716 = vld [vmem:[%s226 + $0x5b0] sm:$0xff]
        %v717 = vld [vmem:[%s226 + $0x5b8] sm:$0xff]
        %v718 = vld [vmem:[%s226 + $0x5c0] sm:$0xff]
        %v719 = vld [vmem:[%s226 + $0x5c8] sm:$0xff]
        %v720 = vld [vmem:[%s226 + $0x5d0] sm:$0xff]
        %v721 = vld [vmem:[%s226 + $0x5d8] sm:$0xff]
        %v722 = vld [vmem:[%s226 + $0x5e0] sm:$0xff]
        %v723 = vld [vmem:[%s226 + $0x5e8] sm:$0xff]
        %v724 = vld [vmem:[%s226 + $0x5f0] sm:$0xff]
        %v725 = vld [vmem:[%s226 + $0x5f8] sm:$0xff]
        %v726 = vld [vmem:[%s226 + $0x600] sm:$0xff]
        %v727 = vld [vmem:[%s226 + $0x608] sm:$0xff]
        %v728 = vld [vmem:[%s226 + $0x610] sm:$0xff]
        %v729 = vld [vmem:[%s226 + $0x618] sm:$0xff]
        %v730 = vld [vmem:[%s226 + $0x620] sm:$0xff]
        %v731 = vld [vmem:[%s226 + $0x628] sm:$0xff]
        %v732 = vld [vmem:[%s226 + $0x630] sm:$0xff]
        %v733 = vld [vmem:[%s226 + $0x638] sm:$0xff]
        %v734 = vld [vmem:[%s226 + $0x640] sm:$0xff]
        %v735 = vld [vmem:[%s226 + $0x648] sm:$0xff]
        %v736 = vld [vmem:[%s226 + $0x650] sm:$0xff]
        %v737 = vld [vmem:[%s226 + $0x658] sm:$0xff]
        %v738 = vld [vmem:[%s226 + $0x660] sm:$0xff]
        %v739 = vld [vmem:[%s226 + $0x668] sm:$0xff]
        %v740 = vld [vmem:[%s226 + $0x670] sm:$0xff]
        %v741 = vld [vmem:[%s226 + $0x678] sm:$0xff]
        %v742 = vld [vmem:[%s226 + $0x680] sm:$0xff]
        %v743 = vld [vmem:[%s226 + $0x688] sm:$0xff]
        %v744 = vld [vmem:[%s226 + $0x690] sm:$0xff]
        %v745 = vld [vmem:[%s226 + $0x698] sm:$0xff]
        %v746 = vld [vmem:[%s226 + $0x6a0] sm:$0xff]
        %v747 = vld [vmem:[%s226 + $0x6a8] sm:$0xff]
        %v748 = vld [vmem:[%s226 + $0x6b0] sm:$0xff]
        %v749 = vld [vmem:[%s226 + $0x6b8] sm:$0xff]
        %v750 = vld [vmem:[%s226 + $0x6c0] sm:$0xff]
        %v751 = vld [vmem:[%s226 + $0x6c8] sm:$0xff]
        %v752 = vld [vmem:[%s226 + $0x6d0] sm:$0xff]
        %v753 = vld [vmem:[%s226 + $0x6d8] sm:$0xff]
        %v754 = vld [vmem:[%s226 + $0x6e0] sm:$0xff]
        %v755 = vld [vmem:[%s226 + $0x6e8] sm:$0xff]
        %v756 = vld [vmem:[%s226 + $0x6f0] sm:$0xff]
        %v757 = vld [vmem:[%s226 + $0x6f8] sm:$0xff]
        %v758 = vld [vmem:[%s226 + $0x700] sm:$0xff]
        %v759 = vld [vmem:[%s226 + $0x708] sm:$0xff]
        %v760 = vld [vmem:[%s226 + $0x710] sm:$0xff]
        %v761 = vld [vmem:[%s226 + $0x718] sm:$0xff]
        %v762 = vld [vmem:[%s226 + $0x720] sm:$0xff]
        %v763 = vld [vmem:[%s226 + $0x728] sm:$0xff]
        %v764 = vld [vmem:[%s226 + $0x730] sm:$0xff]
        %v765 = vld [vmem:[%s226 + $0x738] sm:$0xff]
        %v766 = vld [vmem:[%s226 + $0x740] sm:$0xff]
        %v767 = vld [vmem:[%s226 + $0x748] sm:$0xff]
        %v768 = vld [vmem:[%s226 + $0x750] sm:$0xff]
        %v769 = vld [vmem:[%s226 + $0x758] sm:$0xff]
        %v770 = vld [vmem:[%s226 + $0x760] sm:$0xff]
        %v771 = vld [vmem:[%s226 + $0x768] sm:$0xff]
        %v772 = vld [vmem:[%s226 + $0x770] sm:$0xff]
        %v773 = vld [vmem:[%s226 + $0x778] sm:$0xff]
        %v774 = vld [vmem:[%s226 + $0x780] sm:$0xff]
        %v775 = vld [vmem:[%s226 + $0x788] sm:$0xff]
        %v776 = vld [vmem:[%s226 + $0x790] sm:$0xff]
        %v777 = vld [vmem:[%s226 + $0x798] sm:$0xff]
        %v778 = vld [vmem:[%s226 + $0x7a0] sm:$0xff]
        %v779 = vld [vmem:[%s226 + $0x7a8] sm:$0xff]
        %v780 = vld [vmem:[%s226 + $0x7b0] sm:$0xff]
        %v781 = vld [vmem:[%s226 + $0x7b8] sm:$0xff]
        %v782 = vld [vmem:[%s226 + $0x7c0] sm:$0xff]
        %v783 = vld [vmem:[%s226 + $0x7c8] sm:$0xff]
        %v784 = vld [vmem:[%s226 + $0x7d0] sm:$0xff]
        %v785 = vld [vmem:[%s226 + $0x7d8] sm:$0xff]
        %v786 = vld [vmem:[%s226 + $0x7e0] sm:$0xff]
        %v787 = vld [vmem:[%s226 + $0x7e8] sm:$0xff]
        %v788 = vld [vmem:[%s226 + $0x7f0] sm:$0xff]
        %v789 = vld [vmem:[%s226 + $0x7f8] sm:$0xff]
        %v790 = vld [vmem:[%s226 + $0x800] sm:$0xff]
        %v791 = vld [vmem:[%s226 + $0x808] sm:$0xff]
        %v792 = vld [vmem:[%s226 + $0x810] sm:$0xff]
        %v793 = vld [vmem:[%s226 + $0x818] sm:$0xff]
        %v794 = vld [vmem:[%s226 + $0x820] sm:$0xff]
        %v795 = vld [vmem:[%s226 + $0x828] sm:$0xff]
        %v796 = vld [vmem:[%s226 + $0x830] sm:$0xff]
        %v797 = vld [vmem:[%s226 + $0x838] sm:$0xff]
        %v798 = vld [vmem:[%s226 + $0x840] sm:$0xff]
        %v799 = vld [vmem:[%s226 + $0x848] sm:$0xff]
        %v800 = vld [vmem:[%s226 + $0x850] sm:$0xff]
        %v801 = vld [vmem:[%s226 + $0x858] sm:$0xff]
        %v802 = vld [vmem:[%s226 + $0x860] sm:$0xff]
        %v803 = vld [vmem:[%s226 + $0x868] sm:$0xff]
        %v804 = vld [vmem:[%s226 + $0x870] sm:$0xff]
        %v805 = vld [vmem:[%s226 + $0x878] sm:$0xff]
        %v806 = vld [vmem:[%s226 + $0x880] sm:$0xff]
        %v807 = vld [vmem:[%s226 + $0x888] sm:$0xff]
        %v808 = vld [vmem:[%s226 + $0x890] sm:$0xff]
        %v809 = vld [vmem:[%s226 + $0x898] sm:$0xff]
        %v810 = vld [vmem:[%s226 + $0x8a0] sm:$0xff]
        %v811 = vld [vmem:[%s226 + $0x8a8] sm:$0xff]
        %v812 = vld [vmem:[%s226 + $0x8b0] sm:$0xff]
        %v813 = vld [vmem:[%s226 + $0x8b8] sm:$0xff]
        %v814 = vld [vmem:[%s226 + $0x8c0] sm:$0xff]
        %v815 = vld [vmem:[%s226 + $0x8c8] sm:$0xff]
        %v816 = vld [vmem:[%s226 + $0x8d0] sm:$0xff]
        %v817 = vld [vmem:[%s226 + $0x8d8] sm:$0xff]
        %v818 = vld [vmem:[%s226 + $0x8e0] sm:$0xff]
        %v819 = vld [vmem:[%s226 + $0x8e8] sm:$0xff]
        %v820 = vld [vmem:[%s226 + $0x8f0] sm:$0xff]
        %v821 = vld [vmem:[%s226 + $0x8f8] sm:$0xff]
        %v822 = vld [vmem:[%s226 + $0x900] sm:$0xff]
        %v823 = vld [vmem:[%s226 + $0x908] sm:$0xff]
        %v824 = vld [vmem:[%s226 + $0x910] sm:$0xff]
        %v825 = vld [vmem:[%s226 + $0x918] sm:$0xff]
        %v826 = vld [vmem:[%s226 + $0x920] sm:$0xff]
        %v827 = vld [vmem:[%s226 + $0x928] sm:$0xff]
        %v828 = vld [vmem:[%s226 + $0x930] sm:$0xff]
        %v829 = vld [vmem:[%s226 + $0x938] sm:$0xff]
        %v830 = vld [vmem:[%s226 + $0x940] sm:$0xff]
        %v831 = vld [vmem:[%s226 + $0x948] sm:$0xff]
        %v832 = vld [vmem:[%s226 + $0x950] sm:$0xff]
        %v833 = vld [vmem:[%s226 + $0x958] sm:$0xff]
        %v834 = vld [vmem:[%s226 + $0x960] sm:$0xff]
        %v835 = vld [vmem:[%s226 + $0x968] sm:$0xff]
        %v836 = vld [vmem:[%s226 + $0x970] sm:$0xff]
        %v837 = vld [vmem:[%s226 + $0x978] sm:$0xff]
        %v838 = vld [vmem:[%s226 + $0x980] sm:$0xff]
        %v839 = vld [vmem:[%s226 + $0x988] sm:$0xff]
        %v840 = vld [vmem:[%s226 + $0x990] sm:$0xff]
        %v841 = vld [vmem:[%s226 + $0x998] sm:$0xff]
        %v842 = vld [vmem:[%s226 + $0x9a0] sm:$0xff]
        %v843 = vld [vmem:[%s226 + $0x9a8] sm:$0xff]
        %v844 = vld [vmem:[%s226 + $0x9b0] sm:$0xff]
        %v845 = vld [vmem:[%s226 + $0x9b8] sm:$0xff]
        %v846 = vld [vmem:[%s226 + $0x9c0] sm:$0xff]
        %v847 = vld [vmem:[%s226 + $0x9c8] sm:$0xff]
        %v848 = vld [vmem:[%s226 + $0x9d0] sm:$0xff]
        %v849 = vld [vmem:[%s226 + $0x9d8] sm:$0xff]
        %v850 = vld [vmem:[%s226 + $0x9e0] sm:$0xff]
        %v851 = vld [vmem:[%s226 + $0x9e8] sm:$0xff]
        %v852 = vld [vmem:[%s226 + $0x9f0] sm:$0xff]
        %v853 = vld [vmem:[%s226 + $0x9f8] sm:$0xff]
        %v854 = vld [vmem:[%s226 + $0xa00] sm:$0xff]
        %v855 = vld [vmem:[%s226 + $0xa08] sm:$0xff]
        %v856 = vld [vmem:[%s226 + $0xa10] sm:$0xff]
        %v857 = vld [vmem:[%s226 + $0xa18] sm:$0xff]
        %v858 = vld [vmem:[%s226 + $0xa20] sm:$0xff]
        %v859 = vld [vmem:[%s226 + $0xa28] sm:$0xff]
        %v860 = vld [vmem:[%s226 + $0xa30] sm:$0xff]
        %v861 = vld [vmem:[%s226 + $0xa38] sm:$0xff]
        %v862 = vld [vmem:[%s226 + $0xa40] sm:$0xff]
        %v863 = vld [vmem:[%s226 + $0xa48] sm:$0xff]
        %v864 = vld [vmem:[%s226 + $0xa50] sm:$0xff]
        %v865 = vld [vmem:[%s226 + $0xa58] sm:$0xff]
        %v866 = vld [vmem:[%s226 + $0xa60] sm:$0xff]
        %v867 = vld [vmem:[%s226 + $0xa68] sm:$0xff]
        %v868 = vld [vmem:[%s226 + $0xa70] sm:$0xff]
        %v869 = vld [vmem:[%s226 + $0xa78] sm:$0xff]
        %v870 = vld [vmem:[%s226 + $0xa80] sm:$0xff]
        %v871 = vld [vmem:[%s226 + $0xa88] sm:$0xff]
        %v872 = vld [vmem:[%s226 + $0xa90] sm:$0xff]
        %v873 = vld [vmem:[%s226 + $0xa98] sm:$0xff]
        %v874 = vld [vmem:[%s226 + $0xaa0] sm:$0xff]
        %v875 = vld [vmem:[%s226 + $0xaa8] sm:$0xff]
        %v876 = vld [vmem:[%s226 + $0xab0] sm:$0xff]
        %v877 = vld [vmem:[%s226 + $0xab8] sm:$0xff]
        %v878 = vld [vmem:[%s226 + $0xac0] sm:$0xff]
        %v879 = vld [vmem:[%s226 + $0xac8] sm:$0xff]
        %v880 = vld [vmem:[%s226 + $0xad0] sm:$0xff]
        %v881 = vld [vmem:[%s226 + $0xad8] sm:$0xff]
        %v882 = vld [vmem:[%s226 + $0xae0] sm:$0xff]
        %v883 = vld [vmem:[%s226 + $0xae8] sm:$0xff]
        %v884 = vld [vmem:[%s226 + $0xaf0] sm:$0xff]
        %v885 = vld [vmem:[%s226 + $0xaf8] sm:$0xff]
        %v886 = vld [vmem:[%s226 + $0xb00] sm:$0xff]
        %v887 = vld [vmem:[%s226 + $0xb08] sm:$0xff]
        %v888 = vld [vmem:[%s226 + $0xb10] sm:$0xff]
        %v889 = vld [vmem:[%s226 + $0xb18] sm:$0xff]
        %v890 = vld [vmem:[%s226 + $0xb20] sm:$0xff]
        %v891 = vld [vmem:[%s226 + $0xb28] sm:$0xff]
        %v892 = vld [vmem:[%s226 + $0xb30] sm:$0xff]
        %v893 = vld [vmem:[%s226 + $0xb38] sm:$0xff]
        %v894 = vld [vmem:[%s226 + $0xb40] sm:$0xff]
        %v895 = vld [vmem:[%s226 + $0xb48] sm:$0xff]
        %v896 = vld [vmem:[%s226 + $0xb50] sm:$0xff]
        %v897 = vld [vmem:[%s226 + $0xb58] sm:$0xff]
        %v898 = vld [vmem:[%s226 + $0xb60] sm:$0xff]
        %v899 = vld [vmem:[%s226 + $0xb68] sm:$0xff]
        %v900 = vld [vmem:[%s226 + $0xb70] sm:$0xff]
        %v901 = vld [vmem:[%s226 + $0xb78] sm:$0xff]
        %v902 = vld [vmem:[%s226 + $0xb80] sm:$0xff]
        %v903 = vld [vmem:[%s226 + $0xb88] sm:$0xff]
        %v904 = vld [vmem:[%s226 + $0xb90] sm:$0xff]
        %v905 = vld [vmem:[%s226 + $0xb98] sm:$0xff]
        %v906 = vld [vmem:[%s226 + $0xba0] sm:$0xff]
        %v907 = vld [vmem:[%s226 + $0xba8] sm:$0xff]
        %v908 = vld [vmem:[%s226 + $0xbb0] sm:$0xff]
        %v909 = vld [vmem:[%s226 + $0xbb8] sm:$0xff]
        %v910 = vld [vmem:[%s226 + $0xbc0] sm:$0xff]
        %v911 = vld [vmem:[%s226 + $0xbc8] sm:$0xff]
        %v912 = vld [vmem:[%s226 + $0xbd0] sm:$0xff]
        %v913 = vld [vmem:[%s226 + $0xbd8] sm:$0xff]
        %v914 = vld [vmem:[%s226 + $0xbe0] sm:$0xff]
        %v915 = vld [vmem:[%s226 + $0xbe8] sm:$0xff]
        %v916 = vld [vmem:[%s226 + $0xbf0] sm:$0xff]
        %v917 = vld [vmem:[%s226 + $0xbf8] sm:$0xff]
        %v918 = vld [vmem:[#allocation5] sm:$0xf]
        %v919 = vld [vmem:[#allocation5 + $0x4] sm:$0xf]
        %v920 = vld [vmem:[#allocation5 + $0x8] sm:$0xf]
        %v921 = vld [vmem:[#allocation5 + $0xc] sm:$0xf]
        %v922 = vld [vmem:[#allocation5 + $0x10] sm:$0xf]
        %v923 = vld [vmem:[#allocation5 + $0x14] sm:$0xf]
        %v924 = vld [vmem:[#allocation5 + $0x18] sm:$0xf]
        %v925 = vld [vmem:[#allocation5 + $0x1c] sm:$0xf]
        %v926 = vld [vmem:[#allocation5 + $0x20] sm:$0xf]
        %v927 = vld [vmem:[#allocation5 + $0x24] sm:$0xf]
        %v928 = vld [vmem:[#allocation5 + $0x28] sm:$0xf]
        %v929 = vld [vmem:[#allocation5 + $0x2c] sm:$0xf]
        %v930 = vld [vmem:[#allocation5 + $0x30] sm:$0xf]
        %v931 = vld [vmem:[#allocation5 + $0x34] sm:$0xf]
        %v932 = vld [vmem:[#allocation5 + $0x38] sm:$0xf]
        %v933 = vld [vmem:[#allocation5 + $0x3c] sm:$0xf]
        %v934 = vld [vmem:[#allocation5 + $0x40] sm:$0xf]
        %v935 = vld [vmem:[#allocation5 + $0x44] sm:$0xf]
        %v936 = vld [vmem:[#allocation5 + $0x48] sm:$0xf]
        %v937 = vld [vmem:[#allocation5 + $0x4c] sm:$0xf]
        %v938 = vld [vmem:[#allocation5 + $0x50] sm:$0xf]
        %v939 = vld [vmem:[#allocation5 + $0x54] sm:$0xf]
        %v940 = vld [vmem:[#allocation5 + $0x58] sm:$0xf]
        %v941 = vld [vmem:[#allocation5 + $0x5c] sm:$0xf]
        %v942 = vld [vmem:[#allocation5 + $0x60] sm:$0xf]
        %v943 = vld [vmem:[#allocation5 + $0x64] sm:$0xf]
        %v944 = vld [vmem:[#allocation5 + $0x68] sm:$0xf]
        %v945 = vld [vmem:[#allocation5 + $0x6c] sm:$0xf]
        %v946 = vld [vmem:[#allocation5 + $0x70] sm:$0xf]
        %v947 = vld [vmem:[#allocation5 + $0x74] sm:$0xf]
        %v948 = vld [vmem:[#allocation5 + $0x78] sm:$0xf]
        %v949 = vld [vmem:[#allocation5 + $0x7c] sm:$0xf]
        %v950 = vld [vmem:[#allocation5 + $0x80] sm:$0xf]
        %v951 = vld [vmem:[#allocation5 + $0x84] sm:$0xf]
        %v952 = vld [vmem:[#allocation5 + $0x88] sm:$0xf]
        %v953 = vld [vmem:[#allocation5 + $0x8c] sm:$0xf]
        %v954 = vld [vmem:[#allocation5 + $0x90] sm:$0xf]
        %v955 = vld [vmem:[#allocation5 + $0x94] sm:$0xf]
        %v956 = vld [vmem:[#allocation5 + $0x98] sm:$0xf]
        %v957 = vld [vmem:[#allocation5 + $0x9c] sm:$0xf]
        %v958 = vld [vmem:[#allocation5 + $0xa0] sm:$0xf]
        %v959 = vld [vmem:[#allocation5 + $0xa4] sm:$0xf]
        %v960 = vld [vmem:[#allocation5 + $0xa8] sm:$0xf]
        %v961 = vld [vmem:[#allocation5 + $0xac] sm:$0xf]
        %v962 = vld [vmem:[#allocation5 + $0xb0] sm:$0xf]
        %v963 = vld [vmem:[#allocation5 + $0xb4] sm:$0xf]
        %v964 = vld [vmem:[#allocation5 + $0xb8] sm:$0xf]
        %v965 = vld [vmem:[#allocation5 + $0xbc] sm:$0xf]
        %v966 = vld [vmem:[#allocation5 + $0xc0] sm:$0xf]
        %v967 = vld [vmem:[#allocation5 + $0xc4] sm:$0xf]
        %v968 = vld [vmem:[#allocation5 + $0xc8] sm:$0xf]
        %v969 = vld [vmem:[#allocation5 + $0xcc] sm:$0xf]
        %v970 = vld [vmem:[#allocation5 + $0xd0] sm:$0xf]
        %v971 = vld [vmem:[#allocation5 + $0xd4] sm:$0xf]
        %v972 = vld [vmem:[#allocation5 + $0xd8] sm:$0xf]
        %v973 = vld [vmem:[#allocation5 + $0xdc] sm:$0xf]
        %v974 = vld [vmem:[#allocation5 + $0xe0] sm:$0xf]
        %v975 = vld [vmem:[#allocation5 + $0xe4] sm:$0xf]
        %v976 = vld [vmem:[#allocation5 + $0xe8] sm:$0xf]
        %v977 = vld [vmem:[#allocation5 + $0xec] sm:$0xf]
        %v978 = vld [vmem:[#allocation5 + $0xf0] sm:$0xf]
        %v979 = vld [vmem:[#allocation5 + $0xf4] sm:$0xf]
        %v980 = vld [vmem:[#allocation5 + $0xf8] sm:$0xf]
        %v981 = vld [vmem:[#allocation5 + $0xfc] sm:$0xf]
        %v982 = vld [vmem:[#allocation5 + $0x100] sm:$0xf]
        %v983 = vld [vmem:[#allocation5 + $0x104] sm:$0xf]
        %v984 = vld [vmem:[#allocation5 + $0x108] sm:$0xf]
        %v985 = vld [vmem:[#allocation5 + $0x10c] sm:$0xf]
        %v986 = vld [vmem:[#allocation5 + $0x110] sm:$0xf]
        %v987 = vld [vmem:[#allocation5 + $0x114] sm:$0xf]
        %v988 = vld [vmem:[#allocation5 + $0x118] sm:$0xf]
        %v989 = vld [vmem:[#allocation5 + $0x11c] sm:$0xf]
        %v990 = vld [vmem:[#allocation5 + $0x120] sm:$0xf]
        %v991 = vld [vmem:[#allocation5 + $0x124] sm:$0xf]
        %v992 = vld [vmem:[#allocation5 + $0x128] sm:$0xf]
        %v993 = vld [vmem:[#allocation5 + $0x12c] sm:$0xf]
        %v994 = vld [vmem:[#allocation5 + $0x130] sm:$0xf]
        %v995 = vld [vmem:[#allocation5 + $0x134] sm:$0xf]
        %v996 = vld [vmem:[#allocation5 + $0x138] sm:$0xf]
        %v997 = vld [vmem:[#allocation5 + $0x13c] sm:$0xf]
        %v998 = vld [vmem:[#allocation5 + $0x140] sm:$0xf]
        %v999 = vld [vmem:[#allocation5 + $0x144] sm:$0xf]
        %v1000 = vld [vmem:[#allocation5 + $0x148] sm:$0xf]
        %v1001 = vld [vmem:[#allocation5 + $0x14c] sm:$0xf]
        %v1002 = vld [vmem:[#allocation5 + $0x150] sm:$0xf]
        %v1003 = vld [vmem:[#allocation5 + $0x154] sm:$0xf]
        %v1004 = vld [vmem:[#allocation5 + $0x158] sm:$0xf]
        %v1005 = vld [vmem:[#allocation5 + $0x15c] sm:$0xf]
        %v1006 = vld [vmem:[#allocation5 + $0x160] sm:$0xf]
        %v1007 = vld [vmem:[#allocation5 + $0x164] sm:$0xf]
        %v1008 = vld [vmem:[#allocation5 + $0x168] sm:$0xf]
        %v1009 = vld [vmem:[#allocation5 + $0x16c] sm:$0xf]
        %v1010 = vld [vmem:[#allocation5 + $0x170] sm:$0xf]
        %v1011 = vld [vmem:[#allocation5 + $0x174] sm:$0xf]
        %v1012 = vld [vmem:[#allocation5 + $0x178] sm:$0xf]
        %v1013 = vld [vmem:[#allocation5 + $0x17c] sm:$0xf]
        %v1398 = vunpack.c.l.b16 %v534
        %v1399 = vunpack.c.h.b16 %v534
        %v1400 = vunpack.c.l.b16 %v535
        %v1401 = vunpack.c.h.b16 %v535
        %v1402 = vunpack.c.l.b16 %v536
        %v1403 = vunpack.c.h.b16 %v536
        %v1404 = vunpack.c.l.b16 %v537
        %v1405 = vunpack.c.h.b16 %v537
        %v1406 = vunpack.c.l.b16 %v538
        %v1407 = vunpack.c.h.b16 %v538
        %v1408 = vunpack.c.l.b16 %v539
        %v1409 = vunpack.c.h.b16 %v539
        %v1410 = vunpack.c.l.b16 %v540
        %v1411 = vunpack.c.h.b16 %v540
        %v1412 = vunpack.c.l.b16 %v541
        %v1413 = vunpack.c.h.b16 %v541
        %v1414 = vunpack.c.l.b16 %v542
        %v1415 = vunpack.c.h.b16 %v542
        %v1416 = vunpack.c.l.b16 %v543
        %v1417 = vunpack.c.h.b16 %v543
        %v1418 = vunpack.c.l.b16 %v544
        %v1419 = vunpack.c.h.b16 %v544
        %v1420 = vunpack.c.l.b16 %v545
        %v1421 = vunpack.c.h.b16 %v545
        %v1422 = vunpack.c.l.b16 %v546
        %v1423 = vunpack.c.h.b16 %v546
        %v1424 = vunpack.c.l.b16 %v547
        %v1425 = vunpack.c.h.b16 %v547
        %v1426 = vunpack.c.l.b16 %v548
        %v1427 = vunpack.c.h.b16 %v548
        %v1428 = vunpack.c.l.b16 %v549
        %v1429 = vunpack.c.h.b16 %v549
        %v1430 = vunpack.c.l.b16 %v550
        %v1431 = vunpack.c.h.b16 %v550
        %v1432 = vunpack.c.l.b16 %v551
        %v1433 = vunpack.c.h.b16 %v551
        %v1434 = vunpack.c.l.b16 %v552
        %v1435 = vunpack.c.h.b16 %v552
        %v1436 = vunpack.c.l.b16 %v553
        %v1437 = vunpack.c.h.b16 %v553
        %v1438 = vunpack.c.l.b16 %v554
        %v1439 = vunpack.c.h.b16 %v554
        %v1440 = vunpack.c.l.b16 %v555
        %v1441 = vunpack.c.h.b16 %v555
        %v1442 = vunpack.c.l.b16 %v556
        %v1443 = vunpack.c.h.b16 %v556
        %v1444 = vunpack.c.l.b16 %v557
        %v1445 = vunpack.c.h.b16 %v557
        %v1446 = vunpack.c.l.b16 %v558
        %v1447 = vunpack.c.h.b16 %v558
        %v1448 = vunpack.c.l.b16 %v559
        %v1449 = vunpack.c.h.b16 %v559
        %v1450 = vunpack.c.l.b16 %v560
        %v1451 = vunpack.c.h.b16 %v560
        %v1452 = vunpack.c.l.b16 %v561
        %v1453 = vunpack.c.h.b16 %v561
        %v1454 = vunpack.c.l.b16 %v562
        %v1455 = vunpack.c.h.b16 %v562
        %v1456 = vunpack.c.l.b16 %v563
        %v1457 = vunpack.c.h.b16 %v563
        %v1458 = vunpack.c.l.b16 %v564
        %v1459 = vunpack.c.h.b16 %v564
        %v1460 = vunpack.c.l.b16 %v565
        %v1461 = vunpack.c.h.b16 %v565
        %v1462 = vunpack.c.l.b16 %v566
        %v1463 = vunpack.c.h.b16 %v566
        %v1464 = vunpack.c.l.b16 %v567
        %v1465 = vunpack.c.h.b16 %v567
        %v1466 = vunpack.c.l.b16 %v568
        %v1467 = vunpack.c.h.b16 %v568
        %v1468 = vunpack.c.l.b16 %v569
        %v1469 = vunpack.c.h.b16 %v569
        %v1470 = vunpack.c.l.b16 %v570
        %v1471 = vunpack.c.h.b16 %v570
        %v1472 = vunpack.c.l.b16 %v571
        %v1473 = vunpack.c.h.b16 %v571
        %v1474 = vunpack.c.l.b16 %v572
        %v1475 = vunpack.c.h.b16 %v572
        %v1476 = vunpack.c.l.b16 %v573
        %v1477 = vunpack.c.h.b16 %v573
        %v1478 = vunpack.c.l.b16 %v574
        %v1479 = vunpack.c.h.b16 %v574
        %v1480 = vunpack.c.l.b16 %v575
        %v1481 = vunpack.c.h.b16 %v575
        %v1482 = vunpack.c.l.b16 %v576
        %v1483 = vunpack.c.h.b16 %v576
        %v1484 = vunpack.c.l.b16 %v577
        %v1485 = vunpack.c.h.b16 %v577
        %v1486 = vunpack.c.l.b16 %v578
        %v1487 = vunpack.c.h.b16 %v578
        %v1488 = vunpack.c.l.b16 %v579
        %v1489 = vunpack.c.h.b16 %v579
        %v1490 = vunpack.c.l.b16 %v580
        %v1491 = vunpack.c.h.b16 %v580
        %v1492 = vunpack.c.l.b16 %v581
        %v1493 = vunpack.c.h.b16 %v581
        %v1494 = vunpack.c.l.b16 %v582
        %v1495 = vunpack.c.h.b16 %v582
        %v1496 = vunpack.c.l.b16 %v583
        %v1497 = vunpack.c.h.b16 %v583
        %v1498 = vunpack.c.l.b16 %v584
        %v1499 = vunpack.c.h.b16 %v584
        %v1500 = vunpack.c.l.b16 %v585
        %v1501 = vunpack.c.h.b16 %v585
        %v1502 = vunpack.c.l.b16 %v586
        %v1503 = vunpack.c.h.b16 %v586
        %v1504 = vunpack.c.l.b16 %v587
        %v1505 = vunpack.c.h.b16 %v587
        %v1506 = vunpack.c.l.b16 %v588
        %v1507 = vunpack.c.h.b16 %v588
        %v1508 = vunpack.c.l.b16 %v589
        %v1509 = vunpack.c.h.b16 %v589
        %v1510 = vunpack.c.l.b16 %v590
        %v1511 = vunpack.c.h.b16 %v590
        %v1512 = vunpack.c.l.b16 %v591
        %v1513 = vunpack.c.h.b16 %v591
        %v1514 = vunpack.c.l.b16 %v592
        %v1515 = vunpack.c.h.b16 %v592
        %v1516 = vunpack.c.l.b16 %v593
        %v1517 = vunpack.c.h.b16 %v593
        %v1518 = vunpack.c.l.b16 %v594
        %v1519 = vunpack.c.h.b16 %v594
        %v1520 = vunpack.c.l.b16 %v595
        %v1521 = vunpack.c.h.b16 %v595
        %v1522 = vunpack.c.l.b16 %v596
        %v1523 = vunpack.c.h.b16 %v596
        %v1524 = vunpack.c.l.b16 %v597
        %v1525 = vunpack.c.h.b16 %v597
        %v1526 = vunpack.c.l.b16 %v598
        %v1527 = vunpack.c.h.b16 %v598
        %v1528 = vunpack.c.l.b16 %v599
        %v1529 = vunpack.c.h.b16 %v599
        %v1530 = vunpack.c.l.b16 %v600
        %v1531 = vunpack.c.h.b16 %v600
        %v1532 = vunpack.c.l.b16 %v601
        %v1533 = vunpack.c.h.b16 %v601
        %v1534 = vunpack.c.l.b16 %v602
        %v1535 = vunpack.c.h.b16 %v602
        %v1536 = vunpack.c.l.b16 %v603
        %v1537 = vunpack.c.h.b16 %v603
        %v1538 = vunpack.c.l.b16 %v604
        %v1539 = vunpack.c.h.b16 %v604
        %v1540 = vunpack.c.l.b16 %v605
        %v1541 = vunpack.c.h.b16 %v605
        %v1542 = vunpack.c.l.b16 %v606
        %v1543 = vunpack.c.h.b16 %v606
        %v1544 = vunpack.c.l.b16 %v607
        %v1545 = vunpack.c.h.b16 %v607
        %v1546 = vunpack.c.l.b16 %v608
        %v1547 = vunpack.c.h.b16 %v608
        %v1548 = vunpack.c.l.b16 %v609
        %v1549 = vunpack.c.h.b16 %v609
        %v1550 = vunpack.c.l.b16 %v610
        %v1551 = vunpack.c.h.b16 %v610
        %v1552 = vunpack.c.l.b16 %v611
        %v1553 = vunpack.c.h.b16 %v611
        %v1554 = vunpack.c.l.b16 %v612
        %v1555 = vunpack.c.h.b16 %v612
        %v1556 = vunpack.c.l.b16 %v613
        %v1557 = vunpack.c.h.b16 %v613
        %v1558 = vunpack.c.l.b16 %v614
        %v1559 = vunpack.c.h.b16 %v614
        %v1560 = vunpack.c.l.b16 %v615
        %v1561 = vunpack.c.h.b16 %v615
        %v1562 = vunpack.c.l.b16 %v616
        %v1563 = vunpack.c.h.b16 %v616
        %v1564 = vunpack.c.l.b16 %v617
        %v1565 = vunpack.c.h.b16 %v617
        %v1566 = vunpack.c.l.b16 %v618
        %v1567 = vunpack.c.h.b16 %v618
        %v1568 = vunpack.c.l.b16 %v619
        %v1569 = vunpack.c.h.b16 %v619
        %v1570 = vunpack.c.l.b16 %v620
        %v1571 = vunpack.c.h.b16 %v620
        %v1572 = vunpack.c.l.b16 %v621
        %v1573 = vunpack.c.h.b16 %v621
        %v1574 = vunpack.c.l.b16 %v622
        %v1575 = vunpack.c.h.b16 %v622
        %v1576 = vunpack.c.l.b16 %v623
        %v1577 = vunpack.c.h.b16 %v623
        %v1578 = vunpack.c.l.b16 %v624
        %v1579 = vunpack.c.h.b16 %v624
        %v1580 = vunpack.c.l.b16 %v625
        %v1581 = vunpack.c.h.b16 %v625
        %v1582 = vunpack.c.l.b16 %v626
        %v1583 = vunpack.c.h.b16 %v626
        %v1584 = vunpack.c.l.b16 %v627
        %v1585 = vunpack.c.h.b16 %v627
        %v1586 = vunpack.c.l.b16 %v628
        %v1587 = vunpack.c.h.b16 %v628
        %v1588 = vunpack.c.l.b16 %v629
        %v1589 = vunpack.c.h.b16 %v629
        %v1590 = vunpack.c.l.b16 %v630
        %v1591 = vunpack.c.h.b16 %v630
        %v1592 = vunpack.c.l.b16 %v631
        %v1593 = vunpack.c.h.b16 %v631
        %v1594 = vunpack.c.l.b16 %v632
        %v1595 = vunpack.c.h.b16 %v632
        %v1596 = vunpack.c.l.b16 %v633
        %v1597 = vunpack.c.h.b16 %v633
        %v1598 = vunpack.c.l.b16 %v634
        %v1599 = vunpack.c.h.b16 %v634
        %v1600 = vunpack.c.l.b16 %v635
        %v1601 = vunpack.c.h.b16 %v635
        %v1602 = vunpack.c.l.b16 %v636
        %v1603 = vunpack.c.h.b16 %v636
        %v1604 = vunpack.c.l.b16 %v637
        %v1605 = vunpack.c.h.b16 %v637
        %v1606 = vunpack.c.l.b16 %v638
        %v1607 = vunpack.c.h.b16 %v638
        %v1608 = vunpack.c.l.b16 %v639
        %v1609 = vunpack.c.h.b16 %v639
        %v1610 = vunpack.c.l.b16 %v640
        %v1611 = vunpack.c.h.b16 %v640
        %v1612 = vunpack.c.l.b16 %v641
        %v1613 = vunpack.c.h.b16 %v641
        %v1614 = vunpack.c.l.b16 %v642
        %v1615 = vunpack.c.h.b16 %v642
        %v1616 = vunpack.c.l.b16 %v643
        %v1617 = vunpack.c.h.b16 %v643
        %v1618 = vunpack.c.l.b16 %v644
        %v1619 = vunpack.c.h.b16 %v644
        %v1620 = vunpack.c.l.b16 %v645
        %v1621 = vunpack.c.h.b16 %v645
        %v1622 = vunpack.c.l.b16 %v646
        %v1623 = vunpack.c.h.b16 %v646
        %v1624 = vunpack.c.l.b16 %v647
        %v1625 = vunpack.c.h.b16 %v647
        %v1626 = vunpack.c.l.b16 %v648
        %v1627 = vunpack.c.h.b16 %v648
        %v1628 = vunpack.c.l.b16 %v649
        %v1629 = vunpack.c.h.b16 %v649
        %v1630 = vunpack.c.l.b16 %v650
        %v1631 = vunpack.c.h.b16 %v650
        %v1632 = vunpack.c.l.b16 %v651
        %v1633 = vunpack.c.h.b16 %v651
        %v1634 = vunpack.c.l.b16 %v652
        %v1635 = vunpack.c.h.b16 %v652
        %v1636 = vunpack.c.l.b16 %v653
        %v1637 = vunpack.c.h.b16 %v653
        %v1638 = vunpack.c.l.b16 %v654
        %v1639 = vunpack.c.h.b16 %v654
        %v1640 = vunpack.c.l.b16 %v655
        %v1641 = vunpack.c.h.b16 %v655
        %v1642 = vunpack.c.l.b16 %v656
        %v1643 = vunpack.c.h.b16 %v656
        %v1644 = vunpack.c.l.b16 %v657
        %v1645 = vunpack.c.h.b16 %v657
        %v1646 = vunpack.c.l.b16 %v658
        %v1647 = vunpack.c.h.b16 %v658
        %v1648 = vunpack.c.l.b16 %v659
        %v1649 = vunpack.c.h.b16 %v659
        %v1650 = vunpack.c.l.b16 %v660
        %v1651 = vunpack.c.h.b16 %v660
        %v1652 = vunpack.c.l.b16 %v661
        %v1653 = vunpack.c.h.b16 %v661
        %v1654 = vunpack.c.l.b16 %v662
        %v1655 = vunpack.c.h.b16 %v662
        %v1656 = vunpack.c.l.b16 %v663
        %v1657 = vunpack.c.h.b16 %v663
        %v1658 = vunpack.c.l.b16 %v664
        %v1659 = vunpack.c.h.b16 %v664
        %v1660 = vunpack.c.l.b16 %v665
        %v1661 = vunpack.c.h.b16 %v665
        %v1662 = vunpack.c.l.b16 %v666
        %v1663 = vunpack.c.h.b16 %v666
        %v1664 = vunpack.c.l.b16 %v667
        %v1665 = vunpack.c.h.b16 %v667
        %v1666 = vunpack.c.l.b16 %v668
        %v1667 = vunpack.c.h.b16 %v668
        %v1668 = vunpack.c.l.b16 %v669
        %v1669 = vunpack.c.h.b16 %v669
        %v1670 = vunpack.c.l.b16 %v670
        %v1671 = vunpack.c.h.b16 %v670
        %v1672 = vunpack.c.l.b16 %v671
        %v1673 = vunpack.c.h.b16 %v671
        %v1674 = vunpack.c.l.b16 %v672
        %v1675 = vunpack.c.h.b16 %v672
        %v1676 = vunpack.c.l.b16 %v673
        %v1677 = vunpack.c.h.b16 %v673
        %v1678 = vunpack.c.l.b16 %v674
        %v1679 = vunpack.c.h.b16 %v674
        %v1680 = vunpack.c.l.b16 %v675
        %v1681 = vunpack.c.h.b16 %v675
        %v1682 = vunpack.c.l.b16 %v676
        %v1683 = vunpack.c.h.b16 %v676
        %v1684 = vunpack.c.l.b16 %v677
        %v1685 = vunpack.c.h.b16 %v677
        %v1686 = vunpack.c.l.b16 %v678
        %v1687 = vunpack.c.h.b16 %v678
        %v1688 = vunpack.c.l.b16 %v679
        %v1689 = vunpack.c.h.b16 %v679
        %v1690 = vunpack.c.l.b16 %v680
        %v1691 = vunpack.c.h.b16 %v680
        %v1692 = vunpack.c.l.b16 %v681
        %v1693 = vunpack.c.h.b16 %v681
        %v1694 = vunpack.c.l.b16 %v682
        %v1695 = vunpack.c.h.b16 %v682
        %v1696 = vunpack.c.l.b16 %v683
        %v1697 = vunpack.c.h.b16 %v683
        %v1698 = vunpack.c.l.b16 %v684
        %v1699 = vunpack.c.h.b16 %v684
        %v1700 = vunpack.c.l.b16 %v685
        %v1701 = vunpack.c.h.b16 %v685
        %v1702 = vunpack.c.l.b16 %v686
        %v1703 = vunpack.c.h.b16 %v686
        %v1704 = vunpack.c.l.b16 %v687
        %v1705 = vunpack.c.h.b16 %v687
        %v1706 = vunpack.c.l.b16 %v688
        %v1707 = vunpack.c.h.b16 %v688
        %v1708 = vunpack.c.l.b16 %v689
        %v1709 = vunpack.c.h.b16 %v689
        %v1710 = vunpack.c.l.b16 %v690
        %v1711 = vunpack.c.h.b16 %v690
        %v1712 = vunpack.c.l.b16 %v691
        %v1713 = vunpack.c.h.b16 %v691
        %v1714 = vunpack.c.l.b16 %v692
        %v1715 = vunpack.c.h.b16 %v692
        %v1716 = vunpack.c.l.b16 %v693
        %v1717 = vunpack.c.h.b16 %v693
        %v1718 = vunpack.c.l.b16 %v694
        %v1719 = vunpack.c.h.b16 %v694
        %v1720 = vunpack.c.l.b16 %v695
        %v1721 = vunpack.c.h.b16 %v695
        %v1722 = vunpack.c.l.b16 %v696
        %v1723 = vunpack.c.h.b16 %v696
        %v1724 = vunpack.c.l.b16 %v697
        %v1725 = vunpack.c.h.b16 %v697
        %v1726 = vunpack.c.l.b16 %v698
        %v1727 = vunpack.c.h.b16 %v698
        %v1728 = vunpack.c.l.b16 %v699
        %v1729 = vunpack.c.h.b16 %v699
        %v1730 = vunpack.c.l.b16 %v700
        %v1731 = vunpack.c.h.b16 %v700
        %v1732 = vunpack.c.l.b16 %v701
        %v1733 = vunpack.c.h.b16 %v701
        %v1734 = vunpack.c.l.b16 %v702
        %v1735 = vunpack.c.h.b16 %v702
        %v1736 = vunpack.c.l.b16 %v703
        %v1737 = vunpack.c.h.b16 %v703
        %v1738 = vunpack.c.l.b16 %v704
        %v1739 = vunpack.c.h.b16 %v704
        %v1740 = vunpack.c.l.b16 %v705
        %v1741 = vunpack.c.h.b16 %v705
        %v1742 = vunpack.c.l.b16 %v706
        %v1743 = vunpack.c.h.b16 %v706
        %v1744 = vunpack.c.l.b16 %v707
        %v1745 = vunpack.c.h.b16 %v707
        %v1746 = vunpack.c.l.b16 %v708
        %v1747 = vunpack.c.h.b16 %v708
        %v1748 = vunpack.c.l.b16 %v709
        %v1749 = vunpack.c.h.b16 %v709
        %v1750 = vunpack.c.l.b16 %v710
        %v1751 = vunpack.c.h.b16 %v710
        %v1752 = vunpack.c.l.b16 %v711
        %v1753 = vunpack.c.h.b16 %v711
        %v1754 = vunpack.c.l.b16 %v712
        %v1755 = vunpack.c.h.b16 %v712
        %v1756 = vunpack.c.l.b16 %v713
        %v1757 = vunpack.c.h.b16 %v713
        %v1758 = vunpack.c.l.b16 %v714
        %v1759 = vunpack.c.h.b16 %v714
        %v1760 = vunpack.c.l.b16 %v715
        %v1761 = vunpack.c.h.b16 %v715
        %v1762 = vunpack.c.l.b16 %v716
        %v1763 = vunpack.c.h.b16 %v716
        %v1764 = vunpack.c.l.b16 %v717
        %v1765 = vunpack.c.h.b16 %v717
        %v1766 = vunpack.c.l.b16 %v718
        %v1767 = vunpack.c.h.b16 %v718
        %v1768 = vunpack.c.l.b16 %v719
        %v1769 = vunpack.c.h.b16 %v719
        %v1770 = vunpack.c.l.b16 %v720
        %v1771 = vunpack.c.h.b16 %v720
        %v1772 = vunpack.c.l.b16 %v721
        %v1773 = vunpack.c.h.b16 %v721
        %v1774 = vunpack.c.l.b16 %v722
        %v1775 = vunpack.c.h.b16 %v722
        %v1776 = vunpack.c.l.b16 %v723
        %v1777 = vunpack.c.h.b16 %v723
        %v1778 = vunpack.c.l.b16 %v724
        %v1779 = vunpack.c.h.b16 %v724
        %v1780 = vunpack.c.l.b16 %v725
        %v1781 = vunpack.c.h.b16 %v725
        %v1782 = vunpack.c.l.b16 %v726
        %v1783 = vunpack.c.h.b16 %v726
        %v1784 = vunpack.c.l.b16 %v727
        %v1785 = vunpack.c.h.b16 %v727
        %v1786 = vunpack.c.l.b16 %v728
        %v1787 = vunpack.c.h.b16 %v728
        %v1788 = vunpack.c.l.b16 %v729
        %v1789 = vunpack.c.h.b16 %v729
        %v1790 = vunpack.c.l.b16 %v730
        %v1791 = vunpack.c.h.b16 %v730
        %v1792 = vunpack.c.l.b16 %v731
        %v1793 = vunpack.c.h.b16 %v731
        %v1794 = vunpack.c.l.b16 %v732
        %v1795 = vunpack.c.h.b16 %v732
        %v1796 = vunpack.c.l.b16 %v733
        %v1797 = vunpack.c.h.b16 %v733
        %v1798 = vunpack.c.l.b16 %v734
        %v1799 = vunpack.c.h.b16 %v734
        %v1800 = vunpack.c.l.b16 %v735
        %v1801 = vunpack.c.h.b16 %v735
        %v1802 = vunpack.c.l.b16 %v736
        %v1803 = vunpack.c.h.b16 %v736
        %v1804 = vunpack.c.l.b16 %v737
        %v1805 = vunpack.c.h.b16 %v737
        %v1806 = vunpack.c.l.b16 %v738
        %v1807 = vunpack.c.h.b16 %v738
        %v1808 = vunpack.c.l.b16 %v739
        %v1809 = vunpack.c.h.b16 %v739
        %v1810 = vunpack.c.l.b16 %v740
        %v1811 = vunpack.c.h.b16 %v740
        %v1812 = vunpack.c.l.b16 %v741
        %v1813 = vunpack.c.h.b16 %v741
        %v1814 = vunpack.c.l.b16 %v742
        %v1815 = vunpack.c.h.b16 %v742
        %v1816 = vunpack.c.l.b16 %v743
        %v1817 = vunpack.c.h.b16 %v743
        %v1818 = vunpack.c.l.b16 %v744
        %v1819 = vunpack.c.h.b16 %v744
        %v1820 = vunpack.c.l.b16 %v745
        %v1821 = vunpack.c.h.b16 %v745
        %v1822 = vunpack.c.l.b16 %v746
        %v1823 = vunpack.c.h.b16 %v746
        %v1824 = vunpack.c.l.b16 %v747
        %v1825 = vunpack.c.h.b16 %v747
        %v1826 = vunpack.c.l.b16 %v748
        %v1827 = vunpack.c.h.b16 %v748
        %v1828 = vunpack.c.l.b16 %v749
        %v1829 = vunpack.c.h.b16 %v749
        %v1830 = vunpack.c.l.b16 %v750
        %v1831 = vunpack.c.h.b16 %v750
        %v1832 = vunpack.c.l.b16 %v751
        %v1833 = vunpack.c.h.b16 %v751
        %v1834 = vunpack.c.l.b16 %v752
        %v1835 = vunpack.c.h.b16 %v752
        %v1836 = vunpack.c.l.b16 %v753
        %v1837 = vunpack.c.h.b16 %v753
        %v1838 = vunpack.c.l.b16 %v754
        %v1839 = vunpack.c.h.b16 %v754
        %v1840 = vunpack.c.l.b16 %v755
        %v1841 = vunpack.c.h.b16 %v755
        %v1842 = vunpack.c.l.b16 %v756
        %v1843 = vunpack.c.h.b16 %v756
        %v1844 = vunpack.c.l.b16 %v757
        %v1845 = vunpack.c.h.b16 %v757
        %v1846 = vunpack.c.l.b16 %v758
        %v1847 = vunpack.c.h.b16 %v758
        %v1848 = vunpack.c.l.b16 %v759
        %v1849 = vunpack.c.h.b16 %v759
        %v1850 = vunpack.c.l.b16 %v760
        %v1851 = vunpack.c.h.b16 %v760
        %v1852 = vunpack.c.l.b16 %v761
        %v1853 = vunpack.c.h.b16 %v761
        %v1854 = vunpack.c.l.b16 %v762
        %v1855 = vunpack.c.h.b16 %v762
        %v1856 = vunpack.c.l.b16 %v763
        %v1857 = vunpack.c.h.b16 %v763
        %v1858 = vunpack.c.l.b16 %v764
        %v1859 = vunpack.c.h.b16 %v764
        %v1860 = vunpack.c.l.b16 %v765
        %v1861 = vunpack.c.h.b16 %v765
        %v1862 = vunpack.c.l.b16 %v766
        %v1863 = vunpack.c.h.b16 %v766
        %v1864 = vunpack.c.l.b16 %v767
        %v1865 = vunpack.c.h.b16 %v767
        %v1866 = vunpack.c.l.b16 %v768
        %v1867 = vunpack.c.h.b16 %v768
        %v1868 = vunpack.c.l.b16 %v769
        %v1869 = vunpack.c.h.b16 %v769
        %v1870 = vunpack.c.l.b16 %v770
        %v1871 = vunpack.c.h.b16 %v770
        %v1872 = vunpack.c.l.b16 %v771
        %v1873 = vunpack.c.h.b16 %v771
        %v1874 = vunpack.c.l.b16 %v772
        %v1875 = vunpack.c.h.b16 %v772
        %v1876 = vunpack.c.l.b16 %v773
        %v1877 = vunpack.c.h.b16 %v773
        %v1878 = vunpack.c.l.b16 %v774
        %v1879 = vunpack.c.h.b16 %v774
        %v1880 = vunpack.c.l.b16 %v775
        %v1881 = vunpack.c.h.b16 %v775
        %v1882 = vunpack.c.l.b16 %v776
        %v1883 = vunpack.c.h.b16 %v776
        %v1884 = vunpack.c.l.b16 %v777
        %v1885 = vunpack.c.h.b16 %v777
        %v1886 = vunpack.c.l.b16 %v778
        %v1887 = vunpack.c.h.b16 %v778
        %v1888 = vunpack.c.l.b16 %v779
        %v1889 = vunpack.c.h.b16 %v779
        %v1890 = vunpack.c.l.b16 %v780
        %v1891 = vunpack.c.h.b16 %v780
        %v1892 = vunpack.c.l.b16 %v781
        %v1893 = vunpack.c.h.b16 %v781
        %v1894 = vunpack.c.l.b16 %v782
        %v1895 = vunpack.c.h.b16 %v782
        %v1896 = vunpack.c.l.b16 %v783
        %v1897 = vunpack.c.h.b16 %v783
        %v1898 = vunpack.c.l.b16 %v784
        %v1899 = vunpack.c.h.b16 %v784
        %v1900 = vunpack.c.l.b16 %v785
        %v1901 = vunpack.c.h.b16 %v785
        %v1902 = vunpack.c.l.b16 %v786
        %v1903 = vunpack.c.h.b16 %v786
        %v1904 = vunpack.c.l.b16 %v787
        %v1905 = vunpack.c.h.b16 %v787
        %v1906 = vunpack.c.l.b16 %v788
        %v1907 = vunpack.c.h.b16 %v788
        %v1908 = vunpack.c.l.b16 %v789
        %v1909 = vunpack.c.h.b16 %v789
        %v1910 = vunpack.c.l.b16 %v790
        %v1911 = vunpack.c.h.b16 %v790
        %v1912 = vunpack.c.l.b16 %v791
        %v1913 = vunpack.c.h.b16 %v791
        %v1914 = vunpack.c.l.b16 %v792
        %v1915 = vunpack.c.h.b16 %v792
        %v1916 = vunpack.c.l.b16 %v793
        %v1917 = vunpack.c.h.b16 %v793
        %v1918 = vunpack.c.l.b16 %v794
        %v1919 = vunpack.c.h.b16 %v794
        %v1920 = vunpack.c.l.b16 %v795
        %v1921 = vunpack.c.h.b16 %v795
        %v1922 = vunpack.c.l.b16 %v796
        %v1923 = vunpack.c.h.b16 %v796
        %v1924 = vunpack.c.l.b16 %v797
        %v1925 = vunpack.c.h.b16 %v797
        %v1926 = vunpack.c.l.b16 %v798
        %v1927 = vunpack.c.h.b16 %v798
        %v1928 = vunpack.c.l.b16 %v799
        %v1929 = vunpack.c.h.b16 %v799
        %v1930 = vunpack.c.l.b16 %v800
        %v1931 = vunpack.c.h.b16 %v800
        %v1932 = vunpack.c.l.b16 %v801
        %v1933 = vunpack.c.h.b16 %v801
        %v1934 = vunpack.c.l.b16 %v802
        %v1935 = vunpack.c.h.b16 %v802
        %v1936 = vunpack.c.l.b16 %v803
        %v1937 = vunpack.c.h.b16 %v803
        %v1938 = vunpack.c.l.b16 %v804
        %v1939 = vunpack.c.h.b16 %v804
        %v1940 = vunpack.c.l.b16 %v805
        %v1941 = vunpack.c.h.b16 %v805
        %v1942 = vunpack.c.l.b16 %v806
        %v1943 = vunpack.c.h.b16 %v806
        %v1944 = vunpack.c.l.b16 %v807
        %v1945 = vunpack.c.h.b16 %v807
        %v1946 = vunpack.c.l.b16 %v808
        %v1947 = vunpack.c.h.b16 %v808
        %v1948 = vunpack.c.l.b16 %v809
        %v1949 = vunpack.c.h.b16 %v809
        %v1950 = vunpack.c.l.b16 %v810
        %v1951 = vunpack.c.h.b16 %v810
        %v1952 = vunpack.c.l.b16 %v811
        %v1953 = vunpack.c.h.b16 %v811
        %v1954 = vunpack.c.l.b16 %v812
        %v1955 = vunpack.c.h.b16 %v812
        %v1956 = vunpack.c.l.b16 %v813
        %v1957 = vunpack.c.h.b16 %v813
        %v1958 = vunpack.c.l.b16 %v814
        %v1959 = vunpack.c.h.b16 %v814
        %v1960 = vunpack.c.l.b16 %v815
        %v1961 = vunpack.c.h.b16 %v815
        %v1962 = vunpack.c.l.b16 %v816
        %v1963 = vunpack.c.h.b16 %v816
        %v1964 = vunpack.c.l.b16 %v817
        %v1965 = vunpack.c.h.b16 %v817
        %v1966 = vunpack.c.l.b16 %v818
        %v1967 = vunpack.c.h.b16 %v818
        %v1968 = vunpack.c.l.b16 %v819
        %v1969 = vunpack.c.h.b16 %v819
        %v1970 = vunpack.c.l.b16 %v820
        %v1971 = vunpack.c.h.b16 %v820
        %v1972 = vunpack.c.l.b16 %v821
        %v1973 = vunpack.c.h.b16 %v821
        %v1974 = vunpack.c.l.b16 %v822
        %v1975 = vunpack.c.h.b16 %v822
        %v1976 = vunpack.c.l.b16 %v823
        %v1977 = vunpack.c.h.b16 %v823
        %v1978 = vunpack.c.l.b16 %v824
        %v1979 = vunpack.c.h.b16 %v824
        %v1980 = vunpack.c.l.b16 %v825
        %v1981 = vunpack.c.h.b16 %v825
        %v1982 = vunpack.c.l.b16 %v826
        %v1983 = vunpack.c.h.b16 %v826
        %v1984 = vunpack.c.l.b16 %v827
        %v1985 = vunpack.c.h.b16 %v827
        %v1986 = vunpack.c.l.b16 %v828
        %v1987 = vunpack.c.h.b16 %v828
        %v1988 = vunpack.c.l.b16 %v829
        %v1989 = vunpack.c.h.b16 %v829
        %v1990 = vunpack.c.l.b16 %v830
        %v1991 = vunpack.c.h.b16 %v830
        %v1992 = vunpack.c.l.b16 %v831
        %v1993 = vunpack.c.h.b16 %v831
        %v1994 = vunpack.c.l.b16 %v832
        %v1995 = vunpack.c.h.b16 %v832
        %v1996 = vunpack.c.l.b16 %v833
        %v1997 = vunpack.c.h.b16 %v833
        %v1998 = vunpack.c.l.b16 %v834
        %v1999 = vunpack.c.h.b16 %v834
        %v2000 = vunpack.c.l.b16 %v835
        %v2001 = vunpack.c.h.b16 %v835
        %v2002 = vunpack.c.l.b16 %v836
        %v2003 = vunpack.c.h.b16 %v836
        %v2004 = vunpack.c.l.b16 %v837
        %v2005 = vunpack.c.h.b16 %v837
        %v2006 = vunpack.c.l.b16 %v838
        %v2007 = vunpack.c.h.b16 %v838
        %v2008 = vunpack.c.l.b16 %v839
        %v2009 = vunpack.c.h.b16 %v839
        %v2010 = vunpack.c.l.b16 %v840
        %v2011 = vunpack.c.h.b16 %v840
        %v2012 = vunpack.c.l.b16 %v841
        %v2013 = vunpack.c.h.b16 %v841
        %v2014 = vunpack.c.l.b16 %v842
        %v2015 = vunpack.c.h.b16 %v842
        %v2016 = vunpack.c.l.b16 %v843
        %v2017 = vunpack.c.h.b16 %v843
        %v2018 = vunpack.c.l.b16 %v844
        %v2019 = vunpack.c.h.b16 %v844
        %v2020 = vunpack.c.l.b16 %v845
        %v2021 = vunpack.c.h.b16 %v845
        %v2022 = vunpack.c.l.b16 %v846
        %v2023 = vunpack.c.h.b16 %v846
        %v2024 = vunpack.c.l.b16 %v847
        %v2025 = vunpack.c.h.b16 %v847
        %v2026 = vunpack.c.l.b16 %v848
        %v2027 = vunpack.c.h.b16 %v848
        %v2028 = vunpack.c.l.b16 %v849
        %v2029 = vunpack.c.h.b16 %v849
        %v2030 = vunpack.c.l.b16 %v850
        %v2031 = vunpack.c.h.b16 %v850
        %v2032 = vunpack.c.l.b16 %v851
        %v2033 = vunpack.c.h.b16 %v851
        %v2034 = vunpack.c.l.b16 %v852
        %v2035 = vunpack.c.h.b16 %v852
        %v2036 = vunpack.c.l.b16 %v853
        %v2037 = vunpack.c.h.b16 %v853
        %v2038 = vunpack.c.l.b16 %v854
        %v2039 = vunpack.c.h.b16 %v854
        %v2040 = vunpack.c.l.b16 %v855
        %v2041 = vunpack.c.h.b16 %v855
        %v2042 = vunpack.c.l.b16 %v856
        %v2043 = vunpack.c.h.b16 %v856
        %v2044 = vunpack.c.l.b16 %v857
        %v2045 = vunpack.c.h.b16 %v857
        %v2046 = vunpack.c.l.b16 %v858
        %v2047 = vunpack.c.h.b16 %v858
        %v2048 = vunpack.c.l.b16 %v859
        %v2049 = vunpack.c.h.b16 %v859
        %v2050 = vunpack.c.l.b16 %v860
        %v2051 = vunpack.c.h.b16 %v860
        %v2052 = vunpack.c.l.b16 %v861
        %v2053 = vunpack.c.h.b16 %v861
        %v2054 = vunpack.c.l.b16 %v862
        %v2055 = vunpack.c.h.b16 %v862
        %v2056 = vunpack.c.l.b16 %v863
        %v2057 = vunpack.c.h.b16 %v863
        %v2058 = vunpack.c.l.b16 %v864
        %v2059 = vunpack.c.h.b16 %v864
        %v2060 = vunpack.c.l.b16 %v865
        %v2061 = vunpack.c.h.b16 %v865
        %v2062 = vunpack.c.l.b16 %v866
        %v2063 = vunpack.c.h.b16 %v866
        %v2064 = vunpack.c.l.b16 %v867
        %v2065 = vunpack.c.h.b16 %v867
        %v2066 = vunpack.c.l.b16 %v868
        %v2067 = vunpack.c.h.b16 %v868
        %v2068 = vunpack.c.l.b16 %v869
        %v2069 = vunpack.c.h.b16 %v869
        %v2070 = vunpack.c.l.b16 %v870
        %v2071 = vunpack.c.h.b16 %v870
        %v2072 = vunpack.c.l.b16 %v871
        %v2073 = vunpack.c.h.b16 %v871
        %v2074 = vunpack.c.l.b16 %v872
        %v2075 = vunpack.c.h.b16 %v872
        %v2076 = vunpack.c.l.b16 %v873
        %v2077 = vunpack.c.h.b16 %v873
        %v2078 = vunpack.c.l.b16 %v874
        %v2079 = vunpack.c.h.b16 %v874
        %v2080 = vunpack.c.l.b16 %v875
        %v2081 = vunpack.c.h.b16 %v875
        %v2082 = vunpack.c.l.b16 %v876
        %v2083 = vunpack.c.h.b16 %v876
        %v2084 = vunpack.c.l.b16 %v877
        %v2085 = vunpack.c.h.b16 %v877
        %v2086 = vunpack.c.l.b16 %v878
        %v2087 = vunpack.c.h.b16 %v878
        %v2088 = vunpack.c.l.b16 %v879
        %v2089 = vunpack.c.h.b16 %v879
        %v2090 = vunpack.c.l.b16 %v880
        %v2091 = vunpack.c.h.b16 %v880
        %v2092 = vunpack.c.l.b16 %v881
        %v2093 = vunpack.c.h.b16 %v881
        %v2094 = vunpack.c.l.b16 %v882
        %v2095 = vunpack.c.h.b16 %v882
        %v2096 = vunpack.c.l.b16 %v883
        %v2097 = vunpack.c.h.b16 %v883
        %v2098 = vunpack.c.l.b16 %v884
        %v2099 = vunpack.c.h.b16 %v884
        %v2100 = vunpack.c.l.b16 %v885
        %v2101 = vunpack.c.h.b16 %v885
        %v2102 = vunpack.c.l.b16 %v886
        %v2103 = vunpack.c.h.b16 %v886
        %v2104 = vunpack.c.l.b16 %v887
        %v2105 = vunpack.c.h.b16 %v887
        %v2106 = vunpack.c.l.b16 %v888
        %v2107 = vunpack.c.h.b16 %v888
        %v2108 = vunpack.c.l.b16 %v889
        %v2109 = vunpack.c.h.b16 %v889
        %v2110 = vunpack.c.l.b16 %v890
        %v2111 = vunpack.c.h.b16 %v890
        %v2112 = vunpack.c.l.b16 %v891
        %v2113 = vunpack.c.h.b16 %v891
        %v2114 = vunpack.c.l.b16 %v892
        %v2115 = vunpack.c.h.b16 %v892
        %v2116 = vunpack.c.l.b16 %v893
        %v2117 = vunpack.c.h.b16 %v893
        %v2118 = vunpack.c.l.b16 %v894
        %v2119 = vunpack.c.h.b16 %v894
        %v2120 = vunpack.c.l.b16 %v895
        %v2121 = vunpack.c.h.b16 %v895
        %v2122 = vunpack.c.l.b16 %v896
        %v2123 = vunpack.c.h.b16 %v896
        %v2124 = vunpack.c.l.b16 %v897
        %v2125 = vunpack.c.h.b16 %v897
        %v2126 = vunpack.c.l.b16 %v898
        %v2127 = vunpack.c.h.b16 %v898
        %v2128 = vunpack.c.l.b16 %v899
        %v2129 = vunpack.c.h.b16 %v899
        %v2130 = vunpack.c.l.b16 %v900
        %v2131 = vunpack.c.h.b16 %v900
        %v2132 = vunpack.c.l.b16 %v901
        %v2133 = vunpack.c.h.b16 %v901
        %v2134 = vunpack.c.l.b16 %v902
        %v2135 = vunpack.c.h.b16 %v902
        %v2136 = vunpack.c.l.b16 %v903
        %v2137 = vunpack.c.h.b16 %v903
        %v2138 = vunpack.c.l.b16 %v904
        %v2139 = vunpack.c.h.b16 %v904
        %v2140 = vunpack.c.l.b16 %v905
        %v2141 = vunpack.c.h.b16 %v905
        %v2142 = vunpack.c.l.b16 %v906
        %v2143 = vunpack.c.h.b16 %v906
        %v2144 = vunpack.c.l.b16 %v907
        %v2145 = vunpack.c.h.b16 %v907
        %v2146 = vunpack.c.l.b16 %v908
        %v2147 = vunpack.c.h.b16 %v908
        %v2148 = vunpack.c.l.b16 %v909
        %v2149 = vunpack.c.h.b16 %v909
        %v2150 = vunpack.c.l.b16 %v910
        %v2151 = vunpack.c.h.b16 %v910
        %v2152 = vunpack.c.l.b16 %v911
        %v2153 = vunpack.c.h.b16 %v911
        %v2154 = vunpack.c.l.b16 %v912
        %v2155 = vunpack.c.h.b16 %v912
        %v2156 = vunpack.c.l.b16 %v913
        %v2157 = vunpack.c.h.b16 %v913
        %v2158 = vunpack.c.l.b16 %v914
        %v2159 = vunpack.c.h.b16 %v914
        %v2160 = vunpack.c.l.b16 %v915
        %v2161 = vunpack.c.h.b16 %v915
        %v2162 = vunpack.c.l.b16 %v916
        %v2163 = vunpack.c.h.b16 %v916
        %v2164 = vunpack.c.l.b16 %v917
        %v2165 = vunpack.c.h.b16 %v917
        %v2166 = vpack.c.b16 %v1404, %v1398
        %v2167 = vpack.c.b16 %v1405, %v1399
        %v2168 = vpack.c.b16 %v1406, %v1400
        %v2169 = vpack.c.b16 %v1407, %v1401
        %v2170 = vpack.c.b16 %v1408, %v1402
        %v2171 = vpack.c.b16 %v1409, %v1403
        %v2172 = vpack.c.b16 %v1416, %v1410
        %v2173 = vpack.c.b16 %v1417, %v1411
        %v2174 = vpack.c.b16 %v1418, %v1412
        %v2175 = vpack.c.b16 %v1419, %v1413
        %v2176 = vpack.c.b16 %v1420, %v1414
        %v2177 = vpack.c.b16 %v1421, %v1415
        %v2178 = vpack.c.b16 %v1428, %v1422
        %v2179 = vpack.c.b16 %v1429, %v1423
        %v2180 = vpack.c.b16 %v1430, %v1424
        %v2181 = vpack.c.b16 %v1431, %v1425
        %v2182 = vpack.c.b16 %v1432, %v1426
        %v2183 = vpack.c.b16 %v1433, %v1427
        %v2184 = vpack.c.b16 %v1440, %v1434
        %v2185 = vpack.c.b16 %v1441, %v1435
        %v2186 = vpack.c.b16 %v1442, %v1436
        %v2187 = vpack.c.b16 %v1443, %v1437
        %v2188 = vpack.c.b16 %v1444, %v1438
        %v2189 = vpack.c.b16 %v1445, %v1439
        %v2190 = vpack.c.b16 %v1452, %v1446
        %v2191 = vpack.c.b16 %v1453, %v1447
        %v2192 = vpack.c.b16 %v1454, %v1448
        %v2193 = vpack.c.b16 %v1455, %v1449
        %v2194 = vpack.c.b16 %v1456, %v1450
        %v2195 = vpack.c.b16 %v1457, %v1451
        %v2196 = vpack.c.b16 %v1464, %v1458
        %v2197 = vpack.c.b16 %v1465, %v1459
        %v2198 = vpack.c.b16 %v1466, %v1460
        %v2199 = vpack.c.b16 %v1467, %v1461
        %v2200 = vpack.c.b16 %v1468, %v1462
        %v2201 = vpack.c.b16 %v1469, %v1463
        %v2202 = vpack.c.b16 %v1476, %v1470
        %v2203 = vpack.c.b16 %v1477, %v1471
        %v2204 = vpack.c.b16 %v1478, %v1472
        %v2205 = vpack.c.b16 %v1479, %v1473
        %v2206 = vpack.c.b16 %v1480, %v1474
        %v2207 = vpack.c.b16 %v1481, %v1475
        %v2208 = vpack.c.b16 %v1488, %v1482
        %v2209 = vpack.c.b16 %v1489, %v1483
        %v2210 = vpack.c.b16 %v1490, %v1484
        %v2211 = vpack.c.b16 %v1491, %v1485
        %v2212 = vpack.c.b16 %v1492, %v1486
        %v2213 = vpack.c.b16 %v1493, %v1487
        %v2214 = vpack.c.b16 %v1500, %v1494
        %v2215 = vpack.c.b16 %v1501, %v1495
        %v2216 = vpack.c.b16 %v1502, %v1496
        %v2217 = vpack.c.b16 %v1503, %v1497
        %v2218 = vpack.c.b16 %v1504, %v1498
        %v2219 = vpack.c.b16 %v1505, %v1499
        %v2220 = vpack.c.b16 %v1512, %v1506
        %v2221 = vpack.c.b16 %v1513, %v1507
        %v2222 = vpack.c.b16 %v1514, %v1508
        %v2223 = vpack.c.b16 %v1515, %v1509
        %v2224 = vpack.c.b16 %v1516, %v1510
        %v2225 = vpack.c.b16 %v1517, %v1511
        %v2226 = vpack.c.b16 %v1524, %v1518
        %v2227 = vpack.c.b16 %v1525, %v1519
        %v2228 = vpack.c.b16 %v1526, %v1520
        %v2229 = vpack.c.b16 %v1527, %v1521
        %v2230 = vpack.c.b16 %v1528, %v1522
        %v2231 = vpack.c.b16 %v1529, %v1523
        %v2232 = vpack.c.b16 %v1536, %v1530
        %v2233 = vpack.c.b16 %v1537, %v1531
        %v2234 = vpack.c.b16 %v1538, %v1532
        %v2235 = vpack.c.b16 %v1539, %v1533
        %v2236 = vpack.c.b16 %v1540, %v1534
        %v2237 = vpack.c.b16 %v1541, %v1535
        %v2238 = vpack.c.b16 %v1548, %v1542
        %v2239 = vpack.c.b16 %v1549, %v1543
        %v2240 = vpack.c.b16 %v1550, %v1544
        %v2241 = vpack.c.b16 %v1551, %v1545
        %v2242 = vpack.c.b16 %v1552, %v1546
        %v2243 = vpack.c.b16 %v1553, %v1547
        %v2244 = vpack.c.b16 %v1560, %v1554
        %v2245 = vpack.c.b16 %v1561, %v1555
        %v2246 = vpack.c.b16 %v1562, %v1556
        %v2247 = vpack.c.b16 %v1563, %v1557
        %v2248 = vpack.c.b16 %v1564, %v1558
        %v2249 = vpack.c.b16 %v1565, %v1559
        %v2250 = vpack.c.b16 %v1572, %v1566
        %v2251 = vpack.c.b16 %v1573, %v1567
        %v2252 = vpack.c.b16 %v1574, %v1568
        %v2253 = vpack.c.b16 %v1575, %v1569
        %v2254 = vpack.c.b16 %v1576, %v1570
        %v2255 = vpack.c.b16 %v1577, %v1571
        %v2256 = vpack.c.b16 %v1584, %v1578
        %v2257 = vpack.c.b16 %v1585, %v1579
        %v2258 = vpack.c.b16 %v1586, %v1580
        %v2259 = vpack.c.b16 %v1587, %v1581
        %v2260 = vpack.c.b16 %v1588, %v1582
        %v2261 = vpack.c.b16 %v1589, %v1583
        %v2262 = vpack.c.b16 %v1596, %v1590
        %v2263 = vpack.c.b16 %v1597, %v1591
        %v2264 = vpack.c.b16 %v1598, %v1592
        %v2265 = vpack.c.b16 %v1599, %v1593
        %v2266 = vpack.c.b16 %v1600, %v1594
        %v2267 = vpack.c.b16 %v1601, %v1595
        %v2268 = vpack.c.b16 %v1608, %v1602
        %v2269 = vpack.c.b16 %v1609, %v1603
        %v2270 = vpack.c.b16 %v1610, %v1604
        %v2271 = vpack.c.b16 %v1611, %v1605
        %v2272 = vpack.c.b16 %v1612, %v1606
        %v2273 = vpack.c.b16 %v1613, %v1607
        %v2274 = vpack.c.b16 %v1620, %v1614
        %v2275 = vpack.c.b16 %v1621, %v1615
        %v2276 = vpack.c.b16 %v1622, %v1616
        %v2277 = vpack.c.b16 %v1623, %v1617
        %v2278 = vpack.c.b16 %v1624, %v1618
        %v2279 = vpack.c.b16 %v1625, %v1619
        %v2280 = vpack.c.b16 %v1632, %v1626
        %v2281 = vpack.c.b16 %v1633, %v1627
        %v2282 = vpack.c.b16 %v1634, %v1628
        %v2283 = vpack.c.b16 %v1635, %v1629
        %v2284 = vpack.c.b16 %v1636, %v1630
        %v2285 = vpack.c.b16 %v1637, %v1631
        %v2286 = vpack.c.b16 %v1644, %v1638
        %v2287 = vpack.c.b16 %v1645, %v1639
        %v2288 = vpack.c.b16 %v1646, %v1640
        %v2289 = vpack.c.b16 %v1647, %v1641
        %v2290 = vpack.c.b16 %v1648, %v1642
        %v2291 = vpack.c.b16 %v1649, %v1643
        %v2292 = vpack.c.b16 %v1656, %v1650
        %v2293 = vpack.c.b16 %v1657, %v1651
        %v2294 = vpack.c.b16 %v1658, %v1652
        %v2295 = vpack.c.b16 %v1659, %v1653
        %v2296 = vpack.c.b16 %v1660, %v1654
        %v2297 = vpack.c.b16 %v1661, %v1655
        %v2298 = vpack.c.b16 %v1668, %v1662
        %v2299 = vpack.c.b16 %v1669, %v1663
        %v2300 = vpack.c.b16 %v1670, %v1664
        %v2301 = vpack.c.b16 %v1671, %v1665
        %v2302 = vpack.c.b16 %v1672, %v1666
        %v2303 = vpack.c.b16 %v1673, %v1667
        %v2304 = vpack.c.b16 %v1680, %v1674
        %v2305 = vpack.c.b16 %v1681, %v1675
        %v2306 = vpack.c.b16 %v1682, %v1676
        %v2307 = vpack.c.b16 %v1683, %v1677
        %v2308 = vpack.c.b16 %v1684, %v1678
        %v2309 = vpack.c.b16 %v1685, %v1679
        %v2310 = vpack.c.b16 %v1692, %v1686
        %v2311 = vpack.c.b16 %v1693, %v1687
        %v2312 = vpack.c.b16 %v1694, %v1688
        %v2313 = vpack.c.b16 %v1695, %v1689
        %v2314 = vpack.c.b16 %v1696, %v1690
        %v2315 = vpack.c.b16 %v1697, %v1691
        %v2316 = vpack.c.b16 %v1704, %v1698
        %v2317 = vpack.c.b16 %v1705, %v1699
        %v2318 = vpack.c.b16 %v1706, %v1700
        %v2319 = vpack.c.b16 %v1707, %v1701
        %v2320 = vpack.c.b16 %v1708, %v1702
        %v2321 = vpack.c.b16 %v1709, %v1703
        %v2322 = vpack.c.b16 %v1716, %v1710
        %v2323 = vpack.c.b16 %v1717, %v1711
        %v2324 = vpack.c.b16 %v1718, %v1712
        %v2325 = vpack.c.b16 %v1719, %v1713
        %v2326 = vpack.c.b16 %v1720, %v1714
        %v2327 = vpack.c.b16 %v1721, %v1715
        %v2328 = vpack.c.b16 %v1728, %v1722
        %v2329 = vpack.c.b16 %v1729, %v1723
        %v2330 = vpack.c.b16 %v1730, %v1724
        %v2331 = vpack.c.b16 %v1731, %v1725
        %v2332 = vpack.c.b16 %v1732, %v1726
        %v2333 = vpack.c.b16 %v1733, %v1727
        %v2334 = vpack.c.b16 %v1740, %v1734
        %v2335 = vpack.c.b16 %v1741, %v1735
        %v2336 = vpack.c.b16 %v1742, %v1736
        %v2337 = vpack.c.b16 %v1743, %v1737
        %v2338 = vpack.c.b16 %v1744, %v1738
        %v2339 = vpack.c.b16 %v1745, %v1739
        %v2340 = vpack.c.b16 %v1752, %v1746
        %v2341 = vpack.c.b16 %v1753, %v1747
        %v2342 = vpack.c.b16 %v1754, %v1748
        %v2343 = vpack.c.b16 %v1755, %v1749
        %v2344 = vpack.c.b16 %v1756, %v1750
        %v2345 = vpack.c.b16 %v1757, %v1751
        %v2346 = vpack.c.b16 %v1764, %v1758
        %v2347 = vpack.c.b16 %v1765, %v1759
        %v2348 = vpack.c.b16 %v1766, %v1760
        %v2349 = vpack.c.b16 %v1767, %v1761
        %v2350 = vpack.c.b16 %v1768, %v1762
        %v2351 = vpack.c.b16 %v1769, %v1763
        %v2352 = vpack.c.b16 %v1776, %v1770
        %v2353 = vpack.c.b16 %v1777, %v1771
        %v2354 = vpack.c.b16 %v1778, %v1772
        %v2355 = vpack.c.b16 %v1779, %v1773
        %v2356 = vpack.c.b16 %v1780, %v1774
        %v2357 = vpack.c.b16 %v1781, %v1775
        %v2358 = vpack.c.b16 %v1788, %v1782
        %v2359 = vpack.c.b16 %v1789, %v1783
        %v2360 = vpack.c.b16 %v1790, %v1784
        %v2361 = vpack.c.b16 %v1791, %v1785
        %v2362 = vpack.c.b16 %v1792, %v1786
        %v2363 = vpack.c.b16 %v1793, %v1787
        %v2364 = vpack.c.b16 %v1800, %v1794
        %v2365 = vpack.c.b16 %v1801, %v1795
        %v2366 = vpack.c.b16 %v1802, %v1796
        %v2367 = vpack.c.b16 %v1803, %v1797
        %v2368 = vpack.c.b16 %v1804, %v1798
        %v2369 = vpack.c.b16 %v1805, %v1799
        %v2370 = vpack.c.b16 %v1812, %v1806
        %v2371 = vpack.c.b16 %v1813, %v1807
        %v2372 = vpack.c.b16 %v1814, %v1808
        %v2373 = vpack.c.b16 %v1815, %v1809
        %v2374 = vpack.c.b16 %v1816, %v1810
        %v2375 = vpack.c.b16 %v1817, %v1811
        %v2376 = vpack.c.b16 %v1824, %v1818
        %v2377 = vpack.c.b16 %v1825, %v1819
        %v2378 = vpack.c.b16 %v1826, %v1820
        %v2379 = vpack.c.b16 %v1827, %v1821
        %v2380 = vpack.c.b16 %v1828, %v1822
        %v2381 = vpack.c.b16 %v1829, %v1823
        %v2382 = vpack.c.b16 %v1836, %v1830
        %v2383 = vpack.c.b16 %v1837, %v1831
        %v2384 = vpack.c.b16 %v1838, %v1832
        %v2385 = vpack.c.b16 %v1839, %v1833
        %v2386 = vpack.c.b16 %v1840, %v1834
        %v2387 = vpack.c.b16 %v1841, %v1835
        %v2388 = vpack.c.b16 %v1848, %v1842
        %v2389 = vpack.c.b16 %v1849, %v1843
        %v2390 = vpack.c.b16 %v1850, %v1844
        %v2391 = vpack.c.b16 %v1851, %v1845
        %v2392 = vpack.c.b16 %v1852, %v1846
        %v2393 = vpack.c.b16 %v1853, %v1847
        %v2394 = vpack.c.b16 %v1860, %v1854
        %v2395 = vpack.c.b16 %v1861, %v1855
        %v2396 = vpack.c.b16 %v1862, %v1856
        %v2397 = vpack.c.b16 %v1863, %v1857
        %v2398 = vpack.c.b16 %v1864, %v1858
        %v2399 = vpack.c.b16 %v1865, %v1859
        %v2400 = vpack.c.b16 %v1872, %v1866
        %v2401 = vpack.c.b16 %v1873, %v1867
        %v2402 = vpack.c.b16 %v1874, %v1868
        %v2403 = vpack.c.b16 %v1875, %v1869
        %v2404 = vpack.c.b16 %v1876, %v1870
        %v2405 = vpack.c.b16 %v1877, %v1871
        %v2406 = vpack.c.b16 %v1884, %v1878
        %v2407 = vpack.c.b16 %v1885, %v1879
        %v2408 = vpack.c.b16 %v1886, %v1880
        %v2409 = vpack.c.b16 %v1887, %v1881
        %v2410 = vpack.c.b16 %v1888, %v1882
        %v2411 = vpack.c.b16 %v1889, %v1883
        %v2412 = vpack.c.b16 %v1896, %v1890
        %v2413 = vpack.c.b16 %v1897, %v1891
        %v2414 = vpack.c.b16 %v1898, %v1892
        %v2415 = vpack.c.b16 %v1899, %v1893
        %v2416 = vpack.c.b16 %v1900, %v1894
        %v2417 = vpack.c.b16 %v1901, %v1895
        %v2418 = vpack.c.b16 %v1908, %v1902
        %v2419 = vpack.c.b16 %v1909, %v1903
        %v2420 = vpack.c.b16 %v1910, %v1904
        %v2421 = vpack.c.b16 %v1911, %v1905
        %v2422 = vpack.c.b16 %v1912, %v1906
        %v2423 = vpack.c.b16 %v1913, %v1907
        %v2424 = vpack.c.b16 %v1920, %v1914
        %v2425 = vpack.c.b16 %v1921, %v1915
        %v2426 = vpack.c.b16 %v1922, %v1916
        %v2427 = vpack.c.b16 %v1923, %v1917
        %v2428 = vpack.c.b16 %v1924, %v1918
        %v2429 = vpack.c.b16 %v1925, %v1919
        %v2430 = vpack.c.b16 %v1932, %v1926
        %v2431 = vpack.c.b16 %v1933, %v1927
        %v2432 = vpack.c.b16 %v1934, %v1928
        %v2433 = vpack.c.b16 %v1935, %v1929
        %v2434 = vpack.c.b16 %v1936, %v1930
        %v2435 = vpack.c.b16 %v1937, %v1931
        %v2436 = vpack.c.b16 %v1944, %v1938
        %v2437 = vpack.c.b16 %v1945, %v1939
        %v2438 = vpack.c.b16 %v1946, %v1940
        %v2439 = vpack.c.b16 %v1947, %v1941
        %v2440 = vpack.c.b16 %v1948, %v1942
        %v2441 = vpack.c.b16 %v1949, %v1943
        %v2442 = vpack.c.b16 %v1956, %v1950
        %v2443 = vpack.c.b16 %v1957, %v1951
        %v2444 = vpack.c.b16 %v1958, %v1952
        %v2445 = vpack.c.b16 %v1959, %v1953
        %v2446 = vpack.c.b16 %v1960, %v1954
        %v2447 = vpack.c.b16 %v1961, %v1955
        %v2448 = vpack.c.b16 %v1968, %v1962
        %v2449 = vpack.c.b16 %v1969, %v1963
        %v2450 = vpack.c.b16 %v1970, %v1964
        %v2451 = vpack.c.b16 %v1971, %v1965
        %v2452 = vpack.c.b16 %v1972, %v1966
        %v2453 = vpack.c.b16 %v1973, %v1967
        %v2454 = vpack.c.b16 %v1980, %v1974
        %v2455 = vpack.c.b16 %v1981, %v1975
        %v2456 = vpack.c.b16 %v1982, %v1976
        %v2457 = vpack.c.b16 %v1983, %v1977
        %v2458 = vpack.c.b16 %v1984, %v1978
        %v2459 = vpack.c.b16 %v1985, %v1979
        %v2460 = vpack.c.b16 %v1992, %v1986
        %v2461 = vpack.c.b16 %v1993, %v1987
        %v2462 = vpack.c.b16 %v1994, %v1988
        %v2463 = vpack.c.b16 %v1995, %v1989
        %v2464 = vpack.c.b16 %v1996, %v1990
        %v2465 = vpack.c.b16 %v1997, %v1991
        %v2466 = vpack.c.b16 %v2004, %v1998
        %v2467 = vpack.c.b16 %v2005, %v1999
        %v2468 = vpack.c.b16 %v2006, %v2000
        %v2469 = vpack.c.b16 %v2007, %v2001
        %v2470 = vpack.c.b16 %v2008, %v2002
        %v2471 = vpack.c.b16 %v2009, %v2003
        %v2472 = vpack.c.b16 %v2016, %v2010
        %v2473 = vpack.c.b16 %v2017, %v2011
        %v2474 = vpack.c.b16 %v2018, %v2012
        %v2475 = vpack.c.b16 %v2019, %v2013
        %v2476 = vpack.c.b16 %v2020, %v2014
        %v2477 = vpack.c.b16 %v2021, %v2015
        %v2478 = vpack.c.b16 %v2028, %v2022
        %v2479 = vpack.c.b16 %v2029, %v2023
        %v2480 = vpack.c.b16 %v2030, %v2024
        %v2481 = vpack.c.b16 %v2031, %v2025
        %v2482 = vpack.c.b16 %v2032, %v2026
        %v2483 = vpack.c.b16 %v2033, %v2027
        %v2484 = vpack.c.b16 %v2040, %v2034
        %v2485 = vpack.c.b16 %v2041, %v2035
        %v2486 = vpack.c.b16 %v2042, %v2036
        %v2487 = vpack.c.b16 %v2043, %v2037
        %v2488 = vpack.c.b16 %v2044, %v2038
        %v2489 = vpack.c.b16 %v2045, %v2039
        %v2490 = vpack.c.b16 %v2052, %v2046
        %v2491 = vpack.c.b16 %v2053, %v2047
        %v2492 = vpack.c.b16 %v2054, %v2048
        %v2493 = vpack.c.b16 %v2055, %v2049
        %v2494 = vpack.c.b16 %v2056, %v2050
        %v2495 = vpack.c.b16 %v2057, %v2051
        %v2496 = vpack.c.b16 %v2064, %v2058
        %v2497 = vpack.c.b16 %v2065, %v2059
        %v2498 = vpack.c.b16 %v2066, %v2060
        %v2499 = vpack.c.b16 %v2067, %v2061
        %v2500 = vpack.c.b16 %v2068, %v2062
        %v2501 = vpack.c.b16 %v2069, %v2063
        %v2502 = vpack.c.b16 %v2076, %v2070
        %v2503 = vpack.c.b16 %v2077, %v2071
        %v2504 = vpack.c.b16 %v2078, %v2072
        %v2505 = vpack.c.b16 %v2079, %v2073
        %v2506 = vpack.c.b16 %v2080, %v2074
        %v2507 = vpack.c.b16 %v2081, %v2075
        %v2508 = vpack.c.b16 %v2088, %v2082
        %v2509 = vpack.c.b16 %v2089, %v2083
        %v2510 = vpack.c.b16 %v2090, %v2084
        %v2511 = vpack.c.b16 %v2091, %v2085
        %v2512 = vpack.c.b16 %v2092, %v2086
        %v2513 = vpack.c.b16 %v2093, %v2087
        %v2514 = vpack.c.b16 %v2100, %v2094
        %v2515 = vpack.c.b16 %v2101, %v2095
        %v2516 = vpack.c.b16 %v2102, %v2096
        %v2517 = vpack.c.b16 %v2103, %v2097
        %v2518 = vpack.c.b16 %v2104, %v2098
        %v2519 = vpack.c.b16 %v2105, %v2099
        %v2520 = vpack.c.b16 %v2112, %v2106
        %v2521 = vpack.c.b16 %v2113, %v2107
        %v2522 = vpack.c.b16 %v2114, %v2108
        %v2523 = vpack.c.b16 %v2115, %v2109
        %v2524 = vpack.c.b16 %v2116, %v2110
        %v2525 = vpack.c.b16 %v2117, %v2111
        %v2526 = vpack.c.b16 %v2124, %v2118
        %v2527 = vpack.c.b16 %v2125, %v2119
        %v2528 = vpack.c.b16 %v2126, %v2120
        %v2529 = vpack.c.b16 %v2127, %v2121
        %v2530 = vpack.c.b16 %v2128, %v2122
        %v2531 = vpack.c.b16 %v2129, %v2123
        %v2532 = vpack.c.b16 %v2136, %v2130
        %v2533 = vpack.c.b16 %v2137, %v2131
        %v2534 = vpack.c.b16 %v2138, %v2132
        %v2535 = vpack.c.b16 %v2139, %v2133
        %v2536 = vpack.c.b16 %v2140, %v2134
        %v2537 = vpack.c.b16 %v2141, %v2135
        %v2538 = vpack.c.b16 %v2148, %v2142
        %v2539 = vpack.c.b16 %v2149, %v2143
        %v2540 = vpack.c.b16 %v2150, %v2144
        %v2541 = vpack.c.b16 %v2151, %v2145
        %v2542 = vpack.c.b16 %v2152, %v2146
        %v2543 = vpack.c.b16 %v2153, %v2147
        %v2544 = vpack.c.b16 %v2160, %v2154
        %v2545 = vpack.c.b16 %v2161, %v2155
        %v2546 = vpack.c.b16 %v2162, %v2156
        %v2547 = vpack.c.b16 %v2163, %v2157
        %v2548 = vpack.c.b16 %v2164, %v2158
        %v2549 = vpack.c.b16 %v2165, %v2159
        %v3030 = vunpack.c.l.b16 %v918
        %v3031 = vunpack.c.l.b16 %v919
        %v3032 = vunpack.c.l.b16 %v920
        %v3033 = vunpack.c.l.b16 %v921
        %v3034 = vunpack.c.l.b16 %v922
        %v3035 = vunpack.c.l.b16 %v923
        %v3036 = vunpack.c.l.b16 %v924
        %v3037 = vunpack.c.l.b16 %v925
        %v3038 = vunpack.c.l.b16 %v926
        %v3039 = vunpack.c.l.b16 %v927
        %v3040 = vunpack.c.l.b16 %v928
        %v3041 = vunpack.c.l.b16 %v929
        %v3042 = vunpack.c.l.b16 %v930
        %v3043 = vunpack.c.l.b16 %v931
        %v3044 = vunpack.c.l.b16 %v932
        %v3045 = vunpack.c.l.b16 %v933
        %v3046 = vunpack.c.l.b16 %v934
        %v3047 = vunpack.c.l.b16 %v935
        %v3048 = vunpack.c.l.b16 %v936
        %v3049 = vunpack.c.l.b16 %v937
        %v3050 = vunpack.c.l.b16 %v938
        %v3051 = vunpack.c.l.b16 %v939
        %v3052 = vunpack.c.l.b16 %v940
        %v3053 = vunpack.c.l.b16 %v941
        %v3054 = vunpack.c.l.b16 %v942
        %v3055 = vunpack.c.l.b16 %v943
        %v3056 = vunpack.c.l.b16 %v944
        %v3057 = vunpack.c.l.b16 %v945
        %v3058 = vunpack.c.l.b16 %v946
        %v3059 = vunpack.c.l.b16 %v947
        %v3060 = vunpack.c.l.b16 %v948
        %v3061 = vunpack.c.l.b16 %v949
        %v3062 = vunpack.c.l.b16 %v950
        %v3063 = vunpack.c.l.b16 %v951
        %v3064 = vunpack.c.l.b16 %v952
        %v3065 = vunpack.c.l.b16 %v953
        %v3066 = vunpack.c.l.b16 %v954
        %v3067 = vunpack.c.l.b16 %v955
        %v3068 = vunpack.c.l.b16 %v956
        %v3069 = vunpack.c.l.b16 %v957
        %v3070 = vunpack.c.l.b16 %v958
        %v3071 = vunpack.c.l.b16 %v959
        %v3072 = vunpack.c.l.b16 %v960
        %v3073 = vunpack.c.l.b16 %v961
        %v3074 = vunpack.c.l.b16 %v962
        %v3075 = vunpack.c.l.b16 %v963
        %v3076 = vunpack.c.l.b16 %v964
        %v3077 = vunpack.c.l.b16 %v965
        %v3078 = vunpack.c.l.b16 %v966
        %v3079 = vunpack.c.l.b16 %v967
        %v3080 = vunpack.c.l.b16 %v968
        %v3081 = vunpack.c.l.b16 %v969
        %v3082 = vunpack.c.l.b16 %v970
        %v3083 = vunpack.c.l.b16 %v971
        %v3084 = vunpack.c.l.b16 %v972
        %v3085 = vunpack.c.l.b16 %v973
        %v3086 = vunpack.c.l.b16 %v974
        %v3087 = vunpack.c.l.b16 %v975
        %v3088 = vunpack.c.l.b16 %v976
        %v3089 = vunpack.c.l.b16 %v977
        %v3090 = vunpack.c.l.b16 %v978
        %v3091 = vunpack.c.l.b16 %v979
        %v3092 = vunpack.c.l.b16 %v980
        %v3093 = vunpack.c.l.b16 %v981
        %v3094 = vunpack.c.l.b16 %v982
        %v3095 = vunpack.c.l.b16 %v983
        %v3096 = vunpack.c.l.b16 %v984
        %v3097 = vunpack.c.l.b16 %v985
        %v3098 = vunpack.c.l.b16 %v986
        %v3099 = vunpack.c.l.b16 %v987
        %v3100 = vunpack.c.l.b16 %v988
        %v3101 = vunpack.c.l.b16 %v989
        %v3102 = vunpack.c.l.b16 %v990
        %v3103 = vunpack.c.l.b16 %v991
        %v3104 = vunpack.c.l.b16 %v992
        %v3105 = vunpack.c.l.b16 %v993
        %v3106 = vunpack.c.l.b16 %v994
        %v3107 = vunpack.c.l.b16 %v995
        %v3108 = vunpack.c.l.b16 %v996
        %v3109 = vunpack.c.l.b16 %v997
        %v3110 = vunpack.c.l.b16 %v998
        %v3111 = vunpack.c.l.b16 %v999
        %v3112 = vunpack.c.l.b16 %v1000
        %v3113 = vunpack.c.l.b16 %v1001
        %v3114 = vunpack.c.l.b16 %v1002
        %v3115 = vunpack.c.l.b16 %v1003
        %v3116 = vunpack.c.l.b16 %v1004
        %v3117 = vunpack.c.l.b16 %v1005
        %v3118 = vunpack.c.l.b16 %v1006
        %v3119 = vunpack.c.l.b16 %v1007
        %v3120 = vunpack.c.l.b16 %v1008
        %v3121 = vunpack.c.l.b16 %v1009
        %v3122 = vunpack.c.l.b16 %v1010
        %v3123 = vunpack.c.l.b16 %v1011
        %v3124 = vunpack.c.l.b16 %v1012
        %v3125 = vunpack.c.l.b16 %v1013
        %v3126 = vpack.c.b16 %v3031, %v3030
        %v3127 = vpack.c.b16 %v3033, %v3032
        %v3128 = vpack.c.b16 %v3035, %v3034
        %v3129 = vpack.c.b16 %v3037, %v3036
        %v3130 = vpack.c.b16 %v3039, %v3038
        %v3131 = vpack.c.b16 %v3041, %v3040
        %v3132 = vpack.c.b16 %v3043, %v3042
        %v3133 = vpack.c.b16 %v3045, %v3044
        %v3134 = vpack.c.b16 %v3047, %v3046
        %v3135 = vpack.c.b16 %v3049, %v3048
        %v3136 = vpack.c.b16 %v3051, %v3050
        %v3137 = vpack.c.b16 %v3053, %v3052
        %v3138 = vpack.c.b16 %v3055, %v3054
        %v3139 = vpack.c.b16 %v3057, %v3056
        %v3140 = vpack.c.b16 %v3059, %v3058
        %v3141 = vpack.c.b16 %v3061, %v3060
        %v3142 = vpack.c.b16 %v3063, %v3062
        %v3143 = vpack.c.b16 %v3065, %v3064
        %v3144 = vpack.c.b16 %v3067, %v3066
        %v3145 = vpack.c.b16 %v3069, %v3068
        %v3146 = vpack.c.b16 %v3071, %v3070
        %v3147 = vpack.c.b16 %v3073, %v3072
        %v3148 = vpack.c.b16 %v3075, %v3074
        %v3149 = vpack.c.b16 %v3077, %v3076
        %v3150 = vpack.c.b16 %v3079, %v3078
        %v3151 = vpack.c.b16 %v3081, %v3080
        %v3152 = vpack.c.b16 %v3083, %v3082
        %v3153 = vpack.c.b16 %v3085, %v3084
        %v3154 = vpack.c.b16 %v3087, %v3086
        %v3155 = vpack.c.b16 %v3089, %v3088
        %v3156 = vpack.c.b16 %v3091, %v3090
        %v3157 = vpack.c.b16 %v3093, %v3092
        %v3158 = vpack.c.b16 %v3095, %v3094
        %v3159 = vpack.c.b16 %v3097, %v3096
        %v3160 = vpack.c.b16 %v3099, %v3098
        %v3161 = vpack.c.b16 %v3101, %v3100
        %v3162 = vpack.c.b16 %v3103, %v3102
        %v3163 = vpack.c.b16 %v3105, %v3104
        %v3164 = vpack.c.b16 %v3107, %v3106
        %v3165 = vpack.c.b16 %v3109, %v3108
        %v3166 = vpack.c.b16 %v3111, %v3110
        %v3167 = vpack.c.b16 %v3113, %v3112
        %v3168 = vpack.c.b16 %v3115, %v3114
        %v3169 = vpack.c.b16 %v3117, %v3116
        %v3170 = vpack.c.b16 %v3119, %v3118
        %v3171 = vpack.c.b16 %v3121, %v3120
        %v3172 = vpack.c.b16 %v3123, %v3122
        %v3173 = vpack.c.b16 %v3125, %v3124
        %3222 = vmatprep.subr.bf16.mxu0 0
        %3223 = vmatpush1.bf16.msra.mxu0 %v3126
        %3224 = vmatprep.subr.bf16.mxu0 0
        %3225 = vmatpush1.bf16.msra.mxu0 %v3127
        %3226 = vmatprep.subr.bf16.mxu0 0
        %3227 = vmatpush1.bf16.msra.mxu0 %v3128
        %3228 = vmatprep.subr.bf16.mxu0 0
        %3229 = vmatpush1.bf16.msra.mxu0 %v3129
        %3230 = vmatprep.subr.bf16.mxu0 0
        %3231 = vmatpush1.bf16.msra.mxu0 %v3130
        %3232 = vmatprep.subr.bf16.mxu0 0
        %3233 = vmatpush1.bf16.msra.mxu0 %v3131
        %3234 = vmatprep.subr.bf16.mxu0 0
        %3235 = vmatpush1.bf16.msra.mxu0 %v3132
        %3236 = vmatprep.subr.bf16.mxu0 0
        %3237 = vmatpush1.bf16.msra.mxu0 %v3133
        %3238 = vmatprep.subr.bf16.mxu0 0
        %3239 = vmatpush1.bf16.msra.mxu0 %v3134
        %3240 = vmatprep.subr.bf16.mxu0 0
        %3241 = vmatpush1.bf16.msra.mxu0 %v3135
        %3242 = vmatprep.subr.bf16.mxu0 0
        %3243 = vmatpush1.bf16.msra.mxu0 %v3136
        %3244 = vmatprep.subr.bf16.mxu0 0
        %3245 = vmatpush1.bf16.msra.mxu0 %v3137
        %3246 = vmatprep.subr.bf16.mxu0 0
        %3247 = vmatpush1.bf16.msra.mxu0 %v3138
        %3248 = vmatprep.subr.bf16.mxu0 0
        %3249 = vmatpush1.bf16.msra.mxu0 %v3139
        %3250 = vmatprep.subr.bf16.mxu0 0
        %3251 = vmatpush1.bf16.msra.mxu0 %v3140
        %3252 = vmatprep.subr.bf16.mxu0 0
        %3253 = vmatpush1.bf16.msra.mxu0 %v3141
        %3254 = vmatprep.mubr.bf16.mxu0 %v2167
        %3255 = vmatmul.mubr.bf16.gmra.mrb[0].mxu0 %v2166
        %v3256 = vpop.f32.mrb[0].mxu0
        %v3257 = vadd.f32 0.0, %v3256
        %v3258 = vpop.f32.mrb[0].mxu0
        %v3259 = vpop.f32.mrb[0].mxu0
        %v3260 = vadd.f32 0.0, %v3259
        %v3261 = vpop.f32.mrb[0].mxu0
        %3262 = vmatprep.mubr.bf16.mxu0 %v2173
        %3263 = vmatmul.mubr.bf16.gmra.mrb[0].mxu0 %v2172
        %v3264 = vpop.f32.mrb[0].mxu0
        %v3265 = vadd.f32 0.0, %v3264
        %v3266 = vpop.f32.mrb[0].mxu0
        %v3267 = vpop.f32.mrb[0].mxu0
        %v3268 = vadd.f32 0.0, %v3267
        %v3269 = vpop.f32.mrb[0].mxu0
        %3270 = vmatprep.mubr.bf16.mxu0 %v2179
        %3271 = vmatmul.mubr.bf16.gmra.mrb[0].mxu0 %v2178
        %v3272 = vpop.f32.mrb[0].mxu0
        %v3273 = vadd.f32 0.0, %v3272
        %v3274 = vpop.f32.mrb[0].mxu0
        %v3275 = vpop.f32.mrb[0].mxu0
        %v3276 = vadd.f32 0.0, %v3275
        %v3277 = vpop.f32.mrb[0].mxu0
        %3278 = vmatprep.mubr.bf16.mxu0 %v2185
        %3279 = vmatmul.mubr.bf16.gmra.mrb[0].mxu0 %v2184
        %v3280 = vpop.f32.mrb[0].mxu0
        %v3281 = vadd.f32 0.0, %v3280
        %v3282 = vpop.f32.mrb[0].mxu0
        %v3283 = vpop.f32.mrb[0].mxu0
        %v3284 = vadd.f32 0.0, %v3283
        %v3285 = vpop.f32.mrb[0].mxu0
        %3286 = vmatprep.mubr.bf16.mxu0 %v2191
        %3287 = vmatmul.mubr.bf16.gmra.mrb[0].mxu0 %v2190
        %v3288 = vpop.f32.mrb[0].mxu0
        %v3289 = vadd.f32 0.0, %v3288
        %v3290 = vpop.f32.mrb[0].mxu0
        %v3291 = vpop.f32.mrb[0].mxu0
        %v3292 = vadd.f32 0.0, %v3291
        %v3293 = vpop.f32.mrb[0].mxu0
        %3294 = vmatprep.mubr.bf16.mxu0 %v2197
        %3295 = vmatmul.mubr.bf16.gmra.mrb[0].mxu0 %v2196
        %v3296 = vpop.f32.mrb[0].mxu0
        %v3297 = vadd.f32 0.0, %v3296
        %v3298 = vpop.f32.mrb[0].mxu0
        %v3299 = vpop.f32.mrb[0].mxu0
        %v3300 = vadd.f32 0.0, %v3299
        %v3301 = vpop.f32.mrb[0].mxu0
        %3302 = vmatprep.mubr.bf16.mxu0 %v2203
        %3303 = vmatmul.mubr.bf16.gmra.mrb[0].mxu0 %v2202
        %v3304 = vpop.f32.mrb[0].mxu0
        %v3305 = vadd.f32 0.0, %v3304
        %v3306 = vpop.f32.mrb[0].mxu0
        %v3307 = vpop.f32.mrb[0].mxu0
        %v3308 = vadd.f32 0.0, %v3307
        %v3309 = vpop.f32.mrb[0].mxu0
        %3310 = vmatprep.mubr.bf16.mxu0 %v2209
        %3311 = vmatmul.mubr.bf16.gmra.mrb[0].mxu0 %v2208
        %v3312 = vpop.f32.mrb[0].mxu0
        %v3313 = vadd.f32 0.0, %v3312
        %v3314 = vpop.f32.mrb[0].mxu0
        %v3315 = vpop.f32.mrb[0].mxu0
        %v3316 = vadd.f32 0.0, %v3315
        %v3317 = vpop.f32.mrb[0].mxu0
        %3318 = vmatprep.mubr.bf16.mxu0 %v2215
        %3319 = vmatmul.mubr.bf16.gmra.mrb[0].mxu0 %v2214
        %v3320 = vpop.f32.mrb[0].mxu0
        %v3321 = vadd.f32 0.0, %v3320
        %v3322 = vpop.f32.mrb[0].mxu0
        %v3323 = vpop.f32.mrb[0].mxu0
        %v3324 = vadd.f32 0.0, %v3323
        %v3325 = vpop.f32.mrb[0].mxu0
        %3326 = vmatprep.mubr.bf16.mxu0 %v2221
        %3327 = vmatmul.mubr.bf16.gmra.mrb[0].mxu0 %v2220
        %v3328 = vpop.f32.mrb[0].mxu0
        %v3329 = vadd.f32 0.0, %v3328
        %v3330 = vpop.f32.mrb[0].mxu0
        %v3331 = vpop.f32.mrb[0].mxu0
        %v3332 = vadd.f32 0.0, %v3331
        %v3333 = vpop.f32.mrb[0].mxu0
        %3334 = vmatprep.mubr.bf16.mxu0 %v2227
        %3335 = vmatmul.mubr.bf16.gmra.mrb[0].mxu0 %v2226
        %v3336 = vpop.f32.mrb[0].mxu0
        %v3337 = vadd.f32 0.0, %v3336
        %v3338 = vpop.f32.mrb[0].mxu0
        %v3339 = vpop.f32.mrb[0].mxu0
        %v3340 = vadd.f32 0.0, %v3339
        %v3341 = vpop.f32.mrb[0].mxu0
        %3342 = vmatprep.mubr.bf16.mxu0 %v2233
        %3343 = vmatmul.mubr.bf16.gmra.mrb[0].mxu0 %v2232
        %v3344 = vpop.f32.mrb[0].mxu0
        %v3345 = vadd.f32 0.0, %v3344
        %v3346 = vpop.f32.mrb[0].mxu0
        %v3347 = vpop.f32.mrb[0].mxu0
        %v3348 = vadd.f32 0.0, %v3347
        %v3349 = vpop.f32.mrb[0].mxu0
        %3350 = vmatprep.mubr.bf16.mxu0 %v2239
        %3351 = vmatmul.mubr.bf16.gmra.mrb[0].mxu0 %v2238
        %v3352 = vpop.f32.mrb[0].mxu0
        %v3353 = vadd.f32 0.0, %v3352
        %v3354 = vpop.f32.mrb[0].mxu0
        %v3355 = vpop.f32.mrb[0].mxu0
        %v3356 = vadd.f32 0.0, %v3355
        %v3357 = vpop.f32.mrb[0].mxu0
        %3358 = vmatprep.mubr.bf16.mxu0 %v2245
        %3359 = vmatmul.mubr.bf16.gmra.mrb[0].mxu0 %v2244
        %v3360 = vpop.f32.mrb[0].mxu0
        %v3361 = vadd.f32 0.0, %v3360
        %v3362 = vpop.f32.mrb[0].mxu0
        %v3363 = vpop.f32.mrb[0].mxu0
        %v3364 = vadd.f32 0.0, %v3363
        %v3365 = vpop.f32.mrb[0].mxu0
        %3366 = vmatprep.mubr.bf16.mxu0 %v2251
        %3367 = vmatmul.mubr.bf16.gmra.mrb[0].mxu0 %v2250
        %v3368 = vpop.f32.mrb[0].mxu0
        %v3369 = vadd.f32 0.0, %v3368
        %v3370 = vpop.f32.mrb[0].mxu0
        %v3371 = vpop.f32.mrb[0].mxu0
        %v3372 = vadd.f32 0.0, %v3371
        %v3373 = vpop.f32.mrb[0].mxu0
        %3374 = vmatprep.mubr.bf16.mxu0 %v2257
        %3375 = vmatmul.mubr.bf16.gmra.mrb[0].mxu0 %v2256
        %v3376 = vpop.f32.mrb[0].mxu0
        %v3377 = vadd.f32 0.0, %v3376
        %v3378 = vpop.f32.mrb[0].mxu0
        %v3379 = vpop.f32.mrb[0].mxu0
        %v3380 = vadd.f32 0.0, %v3379
        %v3381 = vpop.f32.mrb[0].mxu0
        %3382 = vmatprep.mubr.bf16.mxu0 %v2263
        %3383 = vmatmul.mubr.bf16.gmra.mrb[0].mxu0 %v2262
        %v3384 = vpop.f32.mrb[0].mxu0
        %v3385 = vadd.f32 0.0, %v3384
        %v3386 = vpop.f32.mrb[0].mxu0
        %v3387 = vpop.f32.mrb[0].mxu0
        %v3388 = vadd.f32 0.0, %v3387
        %v3389 = vpop.f32.mrb[0].mxu0
        %3390 = vmatprep.mubr.bf16.mxu0 %v2269
        %3391 = vmatmul.mubr.bf16.gmra.mrb[0].mxu0 %v2268
        %v3392 = vpop.f32.mrb[0].mxu0
        %v3393 = vadd.f32 0.0, %v3392
        %v3394 = vpop.f32.mrb[0].mxu0
        %v3395 = vpop.f32.mrb[0].mxu0
        %v3396 = vadd.f32 0.0, %v3395
        %v3397 = vpop.f32.mrb[0].mxu0
        %3398 = vmatprep.mubr.bf16.mxu0 %v2275
        %3399 = vmatmul.mubr.bf16.gmra.mrb[0].mxu0 %v2274
        %v3400 = vpop.f32.mrb[0].mxu0
        %v3401 = vadd.f32 0.0, %v3400
        %v3402 = vpop.f32.mrb[0].mxu0
        %v3403 = vpop.f32.mrb[0].mxu0
        %v3404 = vadd.f32 0.0, %v3403
        %v3405 = vpop.f32.mrb[0].mxu0
        %3406 = vmatprep.mubr.bf16.mxu0 %v2281
        %3407 = vmatmul.mubr.bf16.gmra.mrb[0].mxu0 %v2280
        %v3408 = vpop.f32.mrb[0].mxu0
        %v3409 = vadd.f32 0.0, %v3408
        %v3410 = vpop.f32.mrb[0].mxu0
        %v3411 = vpop.f32.mrb[0].mxu0
        %v3412 = vadd.f32 0.0, %v3411
        %v3413 = vpop.f32.mrb[0].mxu0
        %3414 = vmatprep.mubr.bf16.mxu0 %v2287
        %3415 = vmatmul.mubr.bf16.gmra.mrb[0].mxu0 %v2286
        %v3416 = vpop.f32.mrb[0].mxu0
        %v3417 = vadd.f32 0.0, %v3416
        %v3418 = vpop.f32.mrb[0].mxu0
        %v3419 = vpop.f32.mrb[0].mxu0
        %v3420 = vadd.f32 0.0, %v3419
        %v3421 = vpop.f32.mrb[0].mxu0
        %3422 = vmatprep.mubr.bf16.mxu0 %v2293
        %3423 = vmatmul.mubr.bf16.gmra.mrb[0].mxu0 %v2292
        %v3424 = vpop.f32.mrb[0].mxu0
        %v3425 = vadd.f32 0.0, %v3424
        %v3426 = vpop.f32.mrb[0].mxu0
        %v3427 = vpop.f32.mrb[0].mxu0
        %v3428 = vadd.f32 0.0, %v3427
        %v3429 = vpop.f32.mrb[0].mxu0
        %3430 = vmatprep.mubr.bf16.mxu0 %v2299
        %3431 = vmatmul.mubr.bf16.gmra.mrb[0].mxu0 %v2298
        %v3432 = vpop.f32.mrb[0].mxu0
        %v3433 = vadd.f32 0.0, %v3432
        %v3434 = vpop.f32.mrb[0].mxu0
        %v3435 = vpop.f32.mrb[0].mxu0
        %v3436 = vadd.f32 0.0, %v3435
        %v3437 = vpop.f32.mrb[0].mxu0
        %3438 = vmatprep.mubr.bf16.mxu0 %v2305
        %3439 = vmatmul.mubr.bf16.gmra.mrb[0].mxu0 %v2304
        %v3440 = vpop.f32.mrb[0].mxu0
        %v3441 = vadd.f32 0.0, %v3440
        %v3442 = vpop.f32.mrb[0].mxu0
        %v3443 = vpop.f32.mrb[0].mxu0
        %v3444 = vadd.f32 0.0, %v3443
        %v3445 = vpop.f32.mrb[0].mxu0
        %3446 = vmatprep.mubr.bf16.mxu0 %v2311
        %3447 = vmatmul.mubr.bf16.gmra.mrb[0].mxu0 %v2310
        %v3448 = vpop.f32.mrb[0].mxu0
        %v3449 = vadd.f32 0.0, %v3448
        %v3450 = vpop.f32.mrb[0].mxu0
        %v3451 = vpop.f32.mrb[0].mxu0
        %v3452 = vadd.f32 0.0, %v3451
        %v3453 = vpop.f32.mrb[0].mxu0
        %3454 = vmatprep.mubr.bf16.mxu0 %v2317
        %3455 = vmatmul.mubr.bf16.gmra.mrb[0].mxu0 %v2316
        %v3456 = vpop.f32.mrb[0].mxu0
        %v3457 = vadd.f32 0.0, %v3456
        %v3458 = vpop.f32.mrb[0].mxu0
        %v3459 = vpop.f32.mrb[0].mxu0
        %v3460 = vadd.f32 0.0, %v3459
        %v3461 = vpop.f32.mrb[0].mxu0
        %3462 = vmatprep.mubr.bf16.mxu0 %v2323
        %3463 = vmatmul.mubr.bf16.gmra.mrb[0].mxu0 %v2322
        %v3464 = vpop.f32.mrb[0].mxu0
        %v3465 = vadd.f32 0.0, %v3464
        %v3466 = vpop.f32.mrb[0].mxu0
        %v3467 = vpop.f32.mrb[0].mxu0
        %v3468 = vadd.f32 0.0, %v3467
        %v3469 = vpop.f32.mrb[0].mxu0
        %3470 = vmatprep.mubr.bf16.mxu0 %v2329
        %3471 = vmatmul.mubr.bf16.gmra.mrb[0].mxu0 %v2328
        %v3472 = vpop.f32.mrb[0].mxu0
        %v3473 = vadd.f32 0.0, %v3472
        %v3474 = vpop.f32.mrb[0].mxu0
        %v3475 = vpop.f32.mrb[0].mxu0
        %v3476 = vadd.f32 0.0, %v3475
        %v3477 = vpop.f32.mrb[0].mxu0
        %3478 = vmatprep.mubr.bf16.mxu0 %v2335
        %3479 = vmatmul.mubr.bf16.gmra.mrb[0].mxu0 %v2334
        %v3480 = vpop.f32.mrb[0].mxu0
        %v3481 = vadd.f32 0.0, %v3480
        %v3482 = vpop.f32.mrb[0].mxu0
        %v3483 = vpop.f32.mrb[0].mxu0
        %v3484 = vadd.f32 0.0, %v3483
        %v3485 = vpop.f32.mrb[0].mxu0
        %3486 = vmatprep.mubr.bf16.mxu0 %v2341
        %3487 = vmatmul.mubr.bf16.gmra.mrb[0].mxu0 %v2340
        %v3488 = vpop.f32.mrb[0].mxu0
        %v3489 = vadd.f32 0.0, %v3488
        %v3490 = vpop.f32.mrb[0].mxu0
        %v3491 = vpop.f32.mrb[0].mxu0
        %v3492 = vadd.f32 0.0, %v3491
        %v3493 = vpop.f32.mrb[0].mxu0
        %3494 = vmatprep.mubr.bf16.mxu0 %v2347
        %3495 = vmatmul.mubr.bf16.gmra.mrb[0].mxu0 %v2346
        %v3496 = vpop.f32.mrb[0].mxu0
        %v3497 = vadd.f32 0.0, %v3496
        %v3498 = vpop.f32.mrb[0].mxu0
        %v3499 = vpop.f32.mrb[0].mxu0
        %v3500 = vadd.f32 0.0, %v3499
        %v3501 = vpop.f32.mrb[0].mxu0
        %3502 = vmatprep.mubr.bf16.mxu0 %v2353
        %3503 = vmatmul.mubr.bf16.gmra.mrb[0].mxu0 %v2352
        %v3504 = vpop.f32.mrb[0].mxu0
        %v3505 = vadd.f32 0.0, %v3504
        %v3506 = vpop.f32.mrb[0].mxu0
        %v3507 = vpop.f32.mrb[0].mxu0
        %v3508 = vadd.f32 0.0, %v3507
        %v3509 = vpop.f32.mrb[0].mxu0
        %3510 = vmatprep.mubr.bf16.mxu0 %v2359
        %3511 = vmatmul.mubr.bf16.gmra.mrb[0].mxu0 %v2358
        %v3512 = vpop.f32.mrb[0].mxu0
        %v3513 = vadd.f32 0.0, %v3512
        %v3514 = vpop.f32.mrb[0].mxu0
        %v3515 = vpop.f32.mrb[0].mxu0
        %v3516 = vadd.f32 0.0, %v3515
        %v3517 = vpop.f32.mrb[0].mxu0
        %3518 = vmatprep.mubr.bf16.mxu0 %v2365
        %3519 = vmatmul.mubr.bf16.gmra.mrb[0].mxu0 %v2364
        %v3520 = vpop.f32.mrb[0].mxu0
        %v3521 = vadd.f32 0.0, %v3520
        %v3522 = vpop.f32.mrb[0].mxu0
        %v3523 = vpop.f32.mrb[0].mxu0
        %v3524 = vadd.f32 0.0, %v3523
        %v3525 = vpop.f32.mrb[0].mxu0
        %3526 = vmatprep.mubr.bf16.mxu0 %v2371
        %3527 = vmatmul.mubr.bf16.gmra.mrb[0].mxu0 %v2370
        %v3528 = vpop.f32.mrb[0].mxu0
        %v3529 = vadd.f32 0.0, %v3528
        %v3530 = vpop.f32.mrb[0].mxu0
        %v3531 = vpop.f32.mrb[0].mxu0
        %v3532 = vadd.f32 0.0, %v3531
        %v3533 = vpop.f32.mrb[0].mxu0
        %3534 = vmatprep.mubr.bf16.mxu0 %v2377
        %3535 = vmatmul.mubr.bf16.gmra.mrb[0].mxu0 %v2376
        %v3536 = vpop.f32.mrb[0].mxu0
        %v3537 = vadd.f32 0.0, %v3536
        %v3538 = vpop.f32.mrb[0].mxu0
        %v3539 = vpop.f32.mrb[0].mxu0
        %v3540 = vadd.f32 0.0, %v3539
        %v3541 = vpop.f32.mrb[0].mxu0
        %3542 = vmatprep.mubr.bf16.mxu0 %v2383
        %3543 = vmatmul.mubr.bf16.gmra.mrb[0].mxu0 %v2382
        %v3544 = vpop.f32.mrb[0].mxu0
        %v3545 = vadd.f32 0.0, %v3544
        %v3546 = vpop.f32.mrb[0].mxu0
        %v3547 = vpop.f32.mrb[0].mxu0
        %v3548 = vadd.f32 0.0, %v3547
        %v3549 = vpop.f32.mrb[0].mxu0
        %3550 = vmatprep.mubr.bf16.mxu0 %v2389
        %3551 = vmatmul.mubr.bf16.gmra.mrb[0].mxu0 %v2388
        %v3552 = vpop.f32.mrb[0].mxu0
        %v3553 = vadd.f32 0.0, %v3552
        %v3554 = vpop.f32.mrb[0].mxu0
        %v3555 = vpop.f32.mrb[0].mxu0
        %v3556 = vadd.f32 0.0, %v3555
        %v3557 = vpop.f32.mrb[0].mxu0
        %3558 = vmatprep.mubr.bf16.mxu0 %v2395
        %3559 = vmatmul.mubr.bf16.gmra.mrb[0].mxu0 %v2394
        %v3560 = vpop.f32.mrb[0].mxu0
        %v3561 = vadd.f32 0.0, %v3560
        %v3562 = vpop.f32.mrb[0].mxu0
        %v3563 = vpop.f32.mrb[0].mxu0
        %v3564 = vadd.f32 0.0, %v3563
        %v3565 = vpop.f32.mrb[0].mxu0
        %3566 = vmatprep.mubr.bf16.mxu0 %v2401
        %3567 = vmatmul.mubr.bf16.gmra.mrb[0].mxu0 %v2400
        %v3568 = vpop.f32.mrb[0].mxu0
        %v3569 = vadd.f32 0.0, %v3568
        %v3570 = vpop.f32.mrb[0].mxu0
        %v3571 = vpop.f32.mrb[0].mxu0
        %v3572 = vadd.f32 0.0, %v3571
        %v3573 = vpop.f32.mrb[0].mxu0
        %3574 = vmatprep.mubr.bf16.mxu0 %v2407
        %3575 = vmatmul.mubr.bf16.gmra.mrb[0].mxu0 %v2406
        %v3576 = vpop.f32.mrb[0].mxu0
        %v3577 = vadd.f32 0.0, %v3576
        %v3578 = vpop.f32.mrb[0].mxu0
        %v3579 = vpop.f32.mrb[0].mxu0
        %v3580 = vadd.f32 0.0, %v3579
        %v3581 = vpop.f32.mrb[0].mxu0
        %3582 = vmatprep.mubr.bf16.mxu0 %v2413
        %3583 = vmatmul.mubr.bf16.gmra.mrb[0].mxu0 %v2412
        %v3584 = vpop.f32.mrb[0].mxu0
        %v3585 = vadd.f32 0.0, %v3584
        %v3586 = vpop.f32.mrb[0].mxu0
        %v3587 = vpop.f32.mrb[0].mxu0
        %v3588 = vadd.f32 0.0, %v3587
        %v3589 = vpop.f32.mrb[0].mxu0
        %3590 = vmatprep.mubr.bf16.mxu0 %v2419
        %3591 = vmatmul.mubr.bf16.gmra.mrb[0].mxu0 %v2418
        %v3592 = vpop.f32.mrb[0].mxu0
        %v3593 = vadd.f32 0.0, %v3592
        %v3594 = vpop.f32.mrb[0].mxu0
        %v3595 = vpop.f32.mrb[0].mxu0
        %v3596 = vadd.f32 0.0, %v3595
        %v3597 = vpop.f32.mrb[0].mxu0
        %3598 = vmatprep.mubr.bf16.mxu0 %v2425
        %3599 = vmatmul.mubr.bf16.gmra.mrb[0].mxu0 %v2424
        %v3600 = vpop.f32.mrb[0].mxu0
        %v3601 = vadd.f32 0.0, %v3600
        %v3602 = vpop.f32.mrb[0].mxu0
        %v3603 = vpop.f32.mrb[0].mxu0
        %v3604 = vadd.f32 0.0, %v3603
        %v3605 = vpop.f32.mrb[0].mxu0
        %3606 = vmatprep.mubr.bf16.mxu0 %v2431
        %3607 = vmatmul.mubr.bf16.gmra.mrb[0].mxu0 %v2430
        %v3608 = vpop.f32.mrb[0].mxu0
        %v3609 = vadd.f32 0.0, %v3608
        %v3610 = vpop.f32.mrb[0].mxu0
        %v3611 = vpop.f32.mrb[0].mxu0
        %v3612 = vadd.f32 0.0, %v3611
        %v3613 = vpop.f32.mrb[0].mxu0
        %3614 = vmatprep.mubr.bf16.mxu0 %v2437
        %3615 = vmatmul.mubr.bf16.gmra.mrb[0].mxu0 %v2436
        %v3616 = vpop.f32.mrb[0].mxu0
        %v3617 = vadd.f32 0.0, %v3616
        %v3618 = vpop.f32.mrb[0].mxu0
        %v3619 = vpop.f32.mrb[0].mxu0
        %v3620 = vadd.f32 0.0, %v3619
        %v3621 = vpop.f32.mrb[0].mxu0
        %3622 = vmatprep.mubr.bf16.mxu0 %v2443
        %3623 = vmatmul.mubr.bf16.gmra.mrb[0].mxu0 %v2442
        %v3624 = vpop.f32.mrb[0].mxu0
        %v3625 = vadd.f32 0.0, %v3624
        %v3626 = vpop.f32.mrb[0].mxu0
        %v3627 = vpop.f32.mrb[0].mxu0
        %v3628 = vadd.f32 0.0, %v3627
        %v3629 = vpop.f32.mrb[0].mxu0
        %3630 = vmatprep.mubr.bf16.mxu0 %v2449
        %3631 = vmatmul.mubr.bf16.gmra.mrb[0].mxu0 %v2448
        %v3632 = vpop.f32.mrb[0].mxu0
        %v3633 = vadd.f32 0.0, %v3632
        %v3634 = vpop.f32.mrb[0].mxu0
        %v3635 = vpop.f32.mrb[0].mxu0
        %v3636 = vadd.f32 0.0, %v3635
        %v3637 = vpop.f32.mrb[0].mxu0
        %3638 = vmatprep.mubr.bf16.mxu0 %v2455
        %3639 = vmatmul.mubr.bf16.gmra.mrb[0].mxu0 %v2454
        %v3640 = vpop.f32.mrb[0].mxu0
        %v3641 = vadd.f32 0.0, %v3640
        %v3642 = vpop.f32.mrb[0].mxu0
        %v3643 = vpop.f32.mrb[0].mxu0
        %v3644 = vadd.f32 0.0, %v3643
        %v3645 = vpop.f32.mrb[0].mxu0
        %3646 = vmatprep.mubr.bf16.mxu0 %v2461
        %3647 = vmatmul.mubr.bf16.gmra.mrb[0].mxu0 %v2460
        %v3648 = vpop.f32.mrb[0].mxu0
        %v3649 = vadd.f32 0.0, %v3648
        %v3650 = vpop.f32.mrb[0].mxu0
        %v3651 = vpop.f32.mrb[0].mxu0
        %v3652 = vadd.f32 0.0, %v3651
        %v3653 = vpop.f32.mrb[0].mxu0
        %3654 = vmatprep.mubr.bf16.mxu0 %v2467
        %3655 = vmatmul.mubr.bf16.gmra.mrb[0].mxu0 %v2466
        %v3656 = vpop.f32.mrb[0].mxu0
        %v3657 = vadd.f32 0.0, %v3656
        %v3658 = vpop.f32.mrb[0].mxu0
        %v3659 = vpop.f32.mrb[0].mxu0
        %v3660 = vadd.f32 0.0, %v3659
        %v3661 = vpop.f32.mrb[0].mxu0
        %3662 = vmatprep.mubr.bf16.mxu0 %v2473
        %3663 = vmatmul.mubr.bf16.gmra.mrb[0].mxu0 %v2472
        %v3664 = vpop.f32.mrb[0].mxu0
        %v3665 = vadd.f32 0.0, %v3664
        %v3666 = vpop.f32.mrb[0].mxu0
        %v3667 = vpop.f32.mrb[0].mxu0
        %v3668 = vadd.f32 0.0, %v3667
        %v3669 = vpop.f32.mrb[0].mxu0
        %3670 = vmatprep.mubr.bf16.mxu0 %v2479
        %3671 = vmatmul.mubr.bf16.gmra.mrb[0].mxu0 %v2478
        %v3672 = vpop.f32.mrb[0].mxu0
        %v3673 = vadd.f32 0.0, %v3672
        %v3674 = vpop.f32.mrb[0].mxu0
        %v3675 = vpop.f32.mrb[0].mxu0
        %v3676 = vadd.f32 0.0, %v3675
        %v3677 = vpop.f32.mrb[0].mxu0
        %3678 = vmatprep.mubr.bf16.mxu0 %v2485
        %3679 = vmatmul.mubr.bf16.gmra.mrb[0].mxu0 %v2484
        %v3680 = vpop.f32.mrb[0].mxu0
        %v3681 = vadd.f32 0.0, %v3680
        %v3682 = vpop.f32.mrb[0].mxu0
        %v3683 = vpop.f32.mrb[0].mxu0
        %v3684 = vadd.f32 0.0, %v3683
        %v3685 = vpop.f32.mrb[0].mxu0
        %3686 = vmatprep.mubr.bf16.mxu0 %v2491
        %3687 = vmatmul.mubr.bf16.gmra.mrb[0].mxu0 %v2490
        %v3688 = vpop.f32.mrb[0].mxu0
        %v3689 = vadd.f32 0.0, %v3688
        %v3690 = vpop.f32.mrb[0].mxu0
        %v3691 = vpop.f32.mrb[0].mxu0
        %v3692 = vadd.f32 0.0, %v3691
        %v3693 = vpop.f32.mrb[0].mxu0
        %3694 = vmatprep.mubr.bf16.mxu0 %v2497
        %3695 = vmatmul.mubr.bf16.gmra.mrb[0].mxu0 %v2496
        %v3696 = vpop.f32.mrb[0].mxu0
        %v3697 = vadd.f32 0.0, %v3696
        %v3698 = vpop.f32.mrb[0].mxu0
        %v3699 = vpop.f32.mrb[0].mxu0
        %v3700 = vadd.f32 0.0, %v3699
        %v3701 = vpop.f32.mrb[0].mxu0
        %3702 = vmatprep.mubr.bf16.mxu0 %v2503
        %3703 = vmatmul.mubr.bf16.gmra.mrb[0].mxu0 %v2502
        %v3704 = vpop.f32.mrb[0].mxu0
        %v3705 = vadd.f32 0.0, %v3704
        %v3706 = vpop.f32.mrb[0].mxu0
        %v3707 = vpop.f32.mrb[0].mxu0
        %v3708 = vadd.f32 0.0, %v3707
        %v3709 = vpop.f32.mrb[0].mxu0
        %3710 = vmatprep.mubr.bf16.mxu0 %v2509
        %3711 = vmatmul.mubr.bf16.gmra.mrb[0].mxu0 %v2508
        %v3712 = vpop.f32.mrb[0].mxu0
        %v3713 = vadd.f32 0.0, %v3712
        %v3714 = vpop.f32.mrb[0].mxu0
        %v3715 = vpop.f32.mrb[0].mxu0
        %v3716 = vadd.f32 0.0, %v3715
        %v3717 = vpop.f32.mrb[0].mxu0
        %3718 = vmatprep.mubr.bf16.mxu0 %v2515
        %3719 = vmatmul.mubr.bf16.gmra.mrb[0].mxu0 %v2514
        %v3720 = vpop.f32.mrb[0].mxu0
        %v3721 = vadd.f32 0.0, %v3720
        %v3722 = vpop.f32.mrb[0].mxu0
        %v3723 = vpop.f32.mrb[0].mxu0
        %v3724 = vadd.f32 0.0, %v3723
        %v3725 = vpop.f32.mrb[0].mxu0
        %3726 = vmatprep.mubr.bf16.mxu0 %v2521
        %3727 = vmatmul.mubr.bf16.gmra.mrb[0].mxu0 %v2520
        %v3728 = vpop.f32.mrb[0].mxu0
        %v3729 = vadd.f32 0.0, %v3728
        %v3730 = vpop.f32.mrb[0].mxu0
        %v3731 = vpop.f32.mrb[0].mxu0
        %v3732 = vadd.f32 0.0, %v3731
        %v3733 = vpop.f32.mrb[0].mxu0
        %3734 = vmatprep.mubr.bf16.mxu0 %v2527
        %3735 = vmatmul.mubr.bf16.gmra.mrb[0].mxu0 %v2526
        %v3736 = vpop.f32.mrb[0].mxu0
        %v3737 = vadd.f32 0.0, %v3736
        %v3738 = vpop.f32.mrb[0].mxu0
        %v3739 = vpop.f32.mrb[0].mxu0
        %v3740 = vadd.f32 0.0, %v3739
        %v3741 = vpop.f32.mrb[0].mxu0
        %3742 = vmatprep.mubr.bf16.mxu0 %v2533
        %3743 = vmatmul.mubr.bf16.gmra.mrb[0].mxu0 %v2532
        %v3744 = vpop.f32.mrb[0].mxu0
        %v3745 = vadd.f32 0.0, %v3744
        %v3746 = vpop.f32.mrb[0].mxu0
        %v3747 = vpop.f32.mrb[0].mxu0
        %v3748 = vadd.f32 0.0, %v3747
        %v3749 = vpop.f32.mrb[0].mxu0
        %3750 = vmatprep.mubr.bf16.mxu0 %v2539
        %3751 = vmatmul.mubr.bf16.gmra.mrb[0].mxu0 %v2538
        %v3752 = vpop.f32.mrb[0].mxu0
        %v3753 = vadd.f32 0.0, %v3752
        %v3754 = vpop.f32.mrb[0].mxu0
        %v3755 = vpop.f32.mrb[0].mxu0
        %v3756 = vadd.f32 0.0, %v3755
        %v3757 = vpop.f32.mrb[0].mxu0
        %3758 = vmatprep.mubr.bf16.mxu0 %v2545
        %3759 = vmatmul.mubr.bf16.gmra.mrb[0].mxu0 %v2544
        %v3760 = vpop.f32.mrb[0].mxu0
        %v3761 = vadd.f32 0.0, %v3760
        %v3762 = vpop.f32.mrb[0].mxu0
        %v3763 = vpop.f32.mrb[0].mxu0
        %v3764 = vadd.f32 0.0, %v3763
        %v3765 = vpop.f32.mrb[0].mxu0
        %3766 = vdwg.mxu0
        %3767 = vmatprep.subr.bf16.mxu0 0
        %3768 = vmatpush1.bf16.msra.mxu0 %v3142
        %3769 = vmatprep.subr.bf16.mxu0 0
        %3770 = vmatpush1.bf16.msra.mxu0 %v3143
        %3771 = vmatprep.subr.bf16.mxu0 0
        %3772 = vmatpush1.bf16.msra.mxu0 %v3144
        %3773 = vmatprep.subr.bf16.mxu0 0
        %3774 = vmatpush1.bf16.msra.mxu0 %v3145
        %3775 = vmatprep.subr.bf16.mxu0 0
        %3776 = vmatpush1.bf16.msra.mxu0 %v3146
        %3777 = vmatprep.subr.bf16.mxu0 0
        %3778 = vmatpush1.bf16.msra.mxu0 %v3147
        %3779 = vmatprep.subr.bf16.mxu0 0
        %3780 = vmatpush1.bf16.msra.mxu0 %v3148
        %3781 = vmatprep.subr.bf16.mxu0 0
        %3782 = vmatpush1.bf16.msra.mxu0 %v3149
        %3783 = vmatprep.subr.bf16.mxu0 0
        %3784 = vmatpush1.bf16.msra.mxu0 %v3150
        %3785 = vmatprep.subr.bf16.mxu0 0
        %3786 = vmatpush1.bf16.msra.mxu0 %v3151
        %3787 = vmatprep.subr.bf16.mxu0 0
        %3788 = vmatpush1.bf16.msra.mxu0 %v3152
        %3789 = vmatprep.subr.bf16.mxu0 0
        %3790 = vmatpush1.bf16.msra.mxu0 %v3153
        %3791 = vmatprep.subr.bf16.mxu0 0
        %3792 = vmatpush1.bf16.msra.mxu0 %v3154
        %3793 = vmatprep.subr.bf16.mxu0 0
        %3794 = vmatpush1.bf16.msra.mxu0 %v3155
        %3795 = vmatprep.subr.bf16.mxu0 0
        %3796 = vmatpush1.bf16.msra.mxu0 %v3156
        %3797 = vmatprep.subr.bf16.mxu0 0
        %3798 = vmatpush1.bf16.msra.mxu0 %v3157
        %3799 = vmatprep.mubr.bf16.mxu0 %v2169
        %3800 = vmatmul.mubr.bf16.gmra.mrb[0].mxu0 %v2168
        %v3801 = vpop.f32.mrb[0].mxu0
        %v3802 = vadd.f32 %v3257, %v3801
        %v3803 = vpop.f32.mrb[0].mxu0
        %v3804 = vpop.f32.mrb[0].mxu0
        %v3805 = vadd.f32 %v3260, %v3804
        %v3806 = vpop.f32.mrb[0].mxu0
        %3807 = vmatprep.mubr.bf16.mxu0 %v2175
        %3808 = vmatmul.mubr.bf16.gmra.mrb[0].mxu0 %v2174
        %v3809 = vpop.f32.mrb[0].mxu0
        %v3810 = vadd.f32 %v3265, %v3809
        %v3811 = vpop.f32.mrb[0].mxu0
        %v3812 = vpop.f32.mrb[0].mxu0
        %v3813 = vadd.f32 %v3268, %v3812
        %v3814 = vpop.f32.mrb[0].mxu0
        %3815 = vmatprep.mubr.bf16.mxu0 %v2181
        %3816 = vmatmul.mubr.bf16.gmra.mrb[0].mxu0 %v2180
        %v3817 = vpop.f32.mrb[0].mxu0
        %v3818 = vadd.f32 %v3273, %v3817
        %v3819 = vpop.f32.mrb[0].mxu0
        %v3820 = vpop.f32.mrb[0].mxu0
        %v3821 = vadd.f32 %v3276, %v3820
        %v3822 = vpop.f32.mrb[0].mxu0
        %3823 = vmatprep.mubr.bf16.mxu0 %v2187
        %3824 = vmatmul.mubr.bf16.gmra.mrb[0].mxu0 %v2186
        %v3825 = vpop.f32.mrb[0].mxu0
        %v3826 = vadd.f32 %v3281, %v3825
        %v3827 = vpop.f32.mrb[0].mxu0
        %v3828 = vpop.f32.mrb[0].mxu0
        %v3829 = vadd.f32 %v3284, %v3828
        %v3830 = vpop.f32.mrb[0].mxu0
        %3831 = vmatprep.mubr.bf16.mxu0 %v2193
        %3832 = vmatmul.mubr.bf16.gmra.mrb[0].mxu0 %v2192
        %v3833 = vpop.f32.mrb[0].mxu0
        %v3834 = vadd.f32 %v3289, %v3833
        %v3835 = vpop.f32.mrb[0].mxu0
        %v3836 = vpop.f32.mrb[0].mxu0
        %v3837 = vadd.f32 %v3292, %v3836
        %v3838 = vpop.f32.mrb[0].mxu0
        %3839 = vmatprep.mubr.bf16.mxu0 %v2199
        %3840 = vmatmul.mubr.bf16.gmra.mrb[0].mxu0 %v2198
        %v3841 = vpop.f32.mrb[0].mxu0
        %v3842 = vadd.f32 %v3297, %v3841
        %v3843 = vpop.f32.mrb[0].mxu0
        %v3844 = vpop.f32.mrb[0].mxu0
        %v3845 = vadd.f32 %v3300, %v3844
        %v3846 = vpop.f32.mrb[0].mxu0
        %3847 = vmatprep.mubr.bf16.mxu0 %v2205
        %3848 = vmatmul.mubr.bf16.gmra.mrb[0].mxu0 %v2204
        %v3849 = vpop.f32.mrb[0].mxu0
        %v3850 = vadd.f32 %v3305, %v3849
        %v3851 = vpop.f32.mrb[0].mxu0
        %v3852 = vpop.f32.mrb[0].mxu0
        %v3853 = vadd.f32 %v3308, %v3852
        %v3854 = vpop.f32.mrb[0].mxu0
        %3855 = vmatprep.mubr.bf16.mxu0 %v2211
        %3856 = vmatmul.mubr.bf16.gmra.mrb[0].mxu0 %v2210
        %v3857 = vpop.f32.mrb[0].mxu0
        %v3858 = vadd.f32 %v3313, %v3857
        %v3859 = vpop.f32.mrb[0].mxu0
        %v3860 = vpop.f32.mrb[0].mxu0
        %v3861 = vadd.f32 %v3316, %v3860
        %v3862 = vpop.f32.mrb[0].mxu0
        %3863 = vmatprep.mubr.bf16.mxu0 %v2217
        %3864 = vmatmul.mubr.bf16.gmra.mrb[0].mxu0 %v2216
        %v3865 = vpop.f32.mrb[0].mxu0
        %v3866 = vadd.f32 %v3321, %v3865
        %v3867 = vpop.f32.mrb[0].mxu0
        %v3868 = vpop.f32.mrb[0].mxu0
        %v3869 = vadd.f32 %v3324, %v3868
        %v3870 = vpop.f32.mrb[0].mxu0
        %3871 = vmatprep.mubr.bf16.mxu0 %v2223
        %3872 = vmatmul.mubr.bf16.gmra.mrb[0].mxu0 %v2222
        %v3873 = vpop.f32.mrb[0].mxu0
        %v3874 = vadd.f32 %v3329, %v3873
        %v3875 = vpop.f32.mrb[0].mxu0
        %v3876 = vpop.f32.mrb[0].mxu0
        %v3877 = vadd.f32 %v3332, %v3876
        %v3878 = vpop.f32.mrb[0].mxu0
        %3879 = vmatprep.mubr.bf16.mxu0 %v2229
        %3880 = vmatmul.mubr.bf16.gmra.mrb[0].mxu0 %v2228
        %v3881 = vpop.f32.mrb[0].mxu0
        %v3882 = vadd.f32 %v3337, %v3881
        %v3883 = vpop.f32.mrb[0].mxu0
        %v3884 = vpop.f32.mrb[0].mxu0
        %v3885 = vadd.f32 %v3340, %v3884
        %v3886 = vpop.f32.mrb[0].mxu0
        %3887 = vmatprep.mubr.bf16.mxu0 %v2235
        %3888 = vmatmul.mubr.bf16.gmra.mrb[0].mxu0 %v2234
        %v3889 = vpop.f32.mrb[0].mxu0
        %v3890 = vadd.f32 %v3345, %v3889
        %v3891 = vpop.f32.mrb[0].mxu0
        %v3892 = vpop.f32.mrb[0].mxu0
        %v3893 = vadd.f32 %v3348, %v3892
        %v3894 = vpop.f32.mrb[0].mxu0
        %3895 = vmatprep.mubr.bf16.mxu0 %v2241
        %3896 = vmatmul.mubr.bf16.gmra.mrb[0].mxu0 %v2240
        %v3897 = vpop.f32.mrb[0].mxu0
        %v3898 = vadd.f32 %v3353, %v3897
        %v3899 = vpop.f32.mrb[0].mxu0
        %v3900 = vpop.f32.mrb[0].mxu0
        %v3901 = vadd.f32 %v3356, %v3900
        %v3902 = vpop.f32.mrb[0].mxu0
        %3903 = vmatprep.mubr.bf16.mxu0 %v2247
        %3904 = vmatmul.mubr.bf16.gmra.mrb[0].mxu0 %v2246
        %v3905 = vpop.f32.mrb[0].mxu0
        %v3906 = vadd.f32 %v3361, %v3905
        %v3907 = vpop.f32.mrb[0].mxu0
        %v3908 = vpop.f32.mrb[0].mxu0
        %v3909 = vadd.f32 %v3364, %v3908
        %v3910 = vpop.f32.mrb[0].mxu0
        %3911 = vmatprep.mubr.bf16.mxu0 %v2253
        %3912 = vmatmul.mubr.bf16.gmra.mrb[0].mxu0 %v2252
        %v3913 = vpop.f32.mrb[0].mxu0
        %v3914 = vadd.f32 %v3369, %v3913
        %v3915 = vpop.f32.mrb[0].mxu0
        %v3916 = vpop.f32.mrb[0].mxu0
        %v3917 = vadd.f32 %v3372, %v3916
        %v3918 = vpop.f32.mrb[0].mxu0
        %3919 = vmatprep.mubr.bf16.mxu0 %v2259
        %3920 = vmatmul.mubr.bf16.gmra.mrb[0].mxu0 %v2258
        %v3921 = vpop.f32.mrb[0].mxu0
        %v3922 = vadd.f32 %v3377, %v3921
        %v3923 = vpop.f32.mrb[0].mxu0
        %v3924 = vpop.f32.mrb[0].mxu0
        %v3925 = vadd.f32 %v3380, %v3924
        %v3926 = vpop.f32.mrb[0].mxu0
        %3927 = vmatprep.mubr.bf16.mxu0 %v2265
        %3928 = vmatmul.mubr.bf16.gmra.mrb[0].mxu0 %v2264
        %v3929 = vpop.f32.mrb[0].mxu0
        %v3930 = vadd.f32 %v3385, %v3929
        %v3931 = vpop.f32.mrb[0].mxu0
        %v3932 = vpop.f32.mrb[0].mxu0
        %v3933 = vadd.f32 %v3388, %v3932
        %v3934 = vpop.f32.mrb[0].mxu0
        %3935 = vmatprep.mubr.bf16.mxu0 %v2271
        %3936 = vmatmul.mubr.bf16.gmra.mrb[0].mxu0 %v2270
        %v3937 = vpop.f32.mrb[0].mxu0
        %v3938 = vadd.f32 %v3393, %v3937
        %v3939 = vpop.f32.mrb[0].mxu0
        %v3940 = vpop.f32.mrb[0].mxu0
        %v3941 = vadd.f32 %v3396, %v3940
        %v3942 = vpop.f32.mrb[0].mxu0
        %3943 = vmatprep.mubr.bf16.mxu0 %v2277
        %3944 = vmatmul.mubr.bf16.gmra.mrb[0].mxu0 %v2276
        %v3945 = vpop.f32.mrb[0].mxu0
        %v3946 = vadd.f32 %v3401, %v3945
        %v3947 = vpop.f32.mrb[0].mxu0
        %v3948 = vpop.f32.mrb[0].mxu0
        %v3949 = vadd.f32 %v3404, %v3948
        %v3950 = vpop.f32.mrb[0].mxu0
        %3951 = vmatprep.mubr.bf16.mxu0 %v2283
        %3952 = vmatmul.mubr.bf16.gmra.mrb[0].mxu0 %v2282
        %v3953 = vpop.f32.mrb[0].mxu0
        %v3954 = vadd.f32 %v3409, %v3953
        %v3955 = vpop.f32.mrb[0].mxu0
        %v3956 = vpop.f32.mrb[0].mxu0
        %v3957 = vadd.f32 %v3412, %v3956
        %v3958 = vpop.f32.mrb[0].mxu0
        %3959 = vmatprep.mubr.bf16.mxu0 %v2289
        %3960 = vmatmul.mubr.bf16.gmra.mrb[0].mxu0 %v2288
        %v3961 = vpop.f32.mrb[0].mxu0
        %v3962 = vadd.f32 %v3417, %v3961
        %v3963 = vpop.f32.mrb[0].mxu0
        %v3964 = vpop.f32.mrb[0].mxu0
        %v3965 = vadd.f32 %v3420, %v3964
        %v3966 = vpop.f32.mrb[0].mxu0
        %3967 = vmatprep.mubr.bf16.mxu0 %v2295
        %3968 = vmatmul.mubr.bf16.gmra.mrb[0].mxu0 %v2294
        %v3969 = vpop.f32.mrb[0].mxu0
        %v3970 = vadd.f32 %v3425, %v3969
        %v3971 = vpop.f32.mrb[0].mxu0
        %v3972 = vpop.f32.mrb[0].mxu0
        %v3973 = vadd.f32 %v3428, %v3972
        %v3974 = vpop.f32.mrb[0].mxu0
        %3975 = vmatprep.mubr.bf16.mxu0 %v2301
        %3976 = vmatmul.mubr.bf16.gmra.mrb[0].mxu0 %v2300
        %v3977 = vpop.f32.mrb[0].mxu0
        %v3978 = vadd.f32 %v3433, %v3977
        %v3979 = vpop.f32.mrb[0].mxu0
        %v3980 = vpop.f32.mrb[0].mxu0
        %v3981 = vadd.f32 %v3436, %v3980
        %v3982 = vpop.f32.mrb[0].mxu0
        %3983 = vmatprep.mubr.bf16.mxu0 %v2307
        %3984 = vmatmul.mubr.bf16.gmra.mrb[0].mxu0 %v2306
        %v3985 = vpop.f32.mrb[0].mxu0
        %v3986 = vadd.f32 %v3441, %v3985
        %v3987 = vpop.f32.mrb[0].mxu0
        %v3988 = vpop.f32.mrb[0].mxu0
        %v3989 = vadd.f32 %v3444, %v3988
        %v3990 = vpop.f32.mrb[0].mxu0
        %3991 = vmatprep.mubr.bf16.mxu0 %v2313
        %3992 = vmatmul.mubr.bf16.gmra.mrb[0].mxu0 %v2312
        %v3993 = vpop.f32.mrb[0].mxu0
        %v3994 = vadd.f32 %v3449, %v3993
        %v3995 = vpop.f32.mrb[0].mxu0
        %v3996 = vpop.f32.mrb[0].mxu0
        %v3997 = vadd.f32 %v3452, %v3996
        %v3998 = vpop.f32.mrb[0].mxu0
        %3999 = vmatprep.mubr.bf16.mxu0 %v2319
        %4000 = vmatmul.mubr.bf16.gmra.mrb[0].mxu0 %v2318
        %v4001 = vpop.f32.mrb[0].mxu0
        %v4002 = vadd.f32 %v3457, %v4001
        %v4003 = vpop.f32.mrb[0].mxu0
        %v4004 = vpop.f32.mrb[0].mxu0
        %v4005 = vadd.f32 %v3460, %v4004
        %v4006 = vpop.f32.mrb[0].mxu0
        %4007 = vmatprep.mubr.bf16.mxu0 %v2325
        %4008 = vmatmul.mubr.bf16.gmra.mrb[0].mxu0 %v2324
        %v4009 = vpop.f32.mrb[0].mxu0
        %v4010 = vadd.f32 %v3465, %v4009
        %v4011 = vpop.f32.mrb[0].mxu0
        %v4012 = vpop.f32.mrb[0].mxu0
        %v4013 = vadd.f32 %v3468, %v4012
        %v4014 = vpop.f32.mrb[0].mxu0
        %4015 = vmatprep.mubr.bf16.mxu0 %v2331
        %4016 = vmatmul.mubr.bf16.gmra.mrb[0].mxu0 %v2330
        %v4017 = vpop.f32.mrb[0].mxu0
        %v4018 = vadd.f32 %v3473, %v4017
        %v4019 = vpop.f32.mrb[0].mxu0
        %v4020 = vpop.f32.mrb[0].mxu0
        %v4021 = vadd.f32 %v3476, %v4020
        %v4022 = vpop.f32.mrb[0].mxu0
        %4023 = vmatprep.mubr.bf16.mxu0 %v2337
        %4024 = vmatmul.mubr.bf16.gmra.mrb[0].mxu0 %v2336
        %v4025 = vpop.f32.mrb[0].mxu0
        %v4026 = vadd.f32 %v3481, %v4025
        %v4027 = vpop.f32.mrb[0].mxu0
        %v4028 = vpop.f32.mrb[0].mxu0
        %v4029 = vadd.f32 %v3484, %v4028
        %v4030 = vpop.f32.mrb[0].mxu0
        %4031 = vmatprep.mubr.bf16.mxu0 %v2343
        %4032 = vmatmul.mubr.bf16.gmra.mrb[0].mxu0 %v2342
        %v4033 = vpop.f32.mrb[0].mxu0
        %v4034 = vadd.f32 %v3489, %v4033
        %v4035 = vpop.f32.mrb[0].mxu0
        %v4036 = vpop.f32.mrb[0].mxu0
        %v4037 = vadd.f32 %v3492, %v4036
        %v4038 = vpop.f32.mrb[0].mxu0
        %4039 = vmatprep.mubr.bf16.mxu0 %v2349
        %4040 = vmatmul.mubr.bf16.gmra.mrb[0].mxu0 %v2348
        %v4041 = vpop.f32.mrb[0].mxu0
        %v4042 = vadd.f32 %v3497, %v4041
        %v4043 = vpop.f32.mrb[0].mxu0
        %v4044 = vpop.f32.mrb[0].mxu0
        %v4045 = vadd.f32 %v3500, %v4044
        %v4046 = vpop.f32.mrb[0].mxu0
        %4047 = vmatprep.mubr.bf16.mxu0 %v2355
        %4048 = vmatmul.mubr.bf16.gmra.mrb[0].mxu0 %v2354
        %v4049 = vpop.f32.mrb[0].mxu0
        %v4050 = vadd.f32 %v3505, %v4049
        %v4051 = vpop.f32.mrb[0].mxu0
        %v4052 = vpop.f32.mrb[0].mxu0
        %v4053 = vadd.f32 %v3508, %v4052
        %v4054 = vpop.f32.mrb[0].mxu0
        %4055 = vmatprep.mubr.bf16.mxu0 %v2361
        %4056 = vmatmul.mubr.bf16.gmra.mrb[0].mxu0 %v2360
        %v4057 = vpop.f32.mrb[0].mxu0
        %v4058 = vadd.f32 %v3513, %v4057
        %v4059 = vpop.f32.mrb[0].mxu0
        %v4060 = vpop.f32.mrb[0].mxu0
        %v4061 = vadd.f32 %v3516, %v4060
        %v4062 = vpop.f32.mrb[0].mxu0
        %4063 = vmatprep.mubr.bf16.mxu0 %v2367
        %4064 = vmatmul.mubr.bf16.gmra.mrb[0].mxu0 %v2366
        %v4065 = vpop.f32.mrb[0].mxu0
        %v4066 = vadd.f32 %v3521, %v4065
        %v4067 = vpop.f32.mrb[0].mxu0
        %v4068 = vpop.f32.mrb[0].mxu0
        %v4069 = vadd.f32 %v3524, %v4068
        %v4070 = vpop.f32.mrb[0].mxu0
        %4071 = vmatprep.mubr.bf16.mxu0 %v2373
        %4072 = vmatmul.mubr.bf16.gmra.mrb[0].mxu0 %v2372
        %v4073 = vpop.f32.mrb[0].mxu0
        %v4074 = vadd.f32 %v3529, %v4073
        %v4075 = vpop.f32.mrb[0].mxu0
        %v4076 = vpop.f32.mrb[0].mxu0
        %v4077 = vadd.f32 %v3532, %v4076
        %v4078 = vpop.f32.mrb[0].mxu0
        %4079 = vmatprep.mubr.bf16.mxu0 %v2379
        %4080 = vmatmul.mubr.bf16.gmra.mrb[0].mxu0 %v2378
        %v4081 = vpop.f32.mrb[0].mxu0
        %v4082 = vadd.f32 %v3537, %v4081
        %v4083 = vpop.f32.mrb[0].mxu0
        %v4084 = vpop.f32.mrb[0].mxu0
        %v4085 = vadd.f32 %v3540, %v4084
        %v4086 = vpop.f32.mrb[0].mxu0
        %4087 = vmatprep.mubr.bf16.mxu0 %v2385
        %4088 = vmatmul.mubr.bf16.gmra.mrb[0].mxu0 %v2384
        %v4089 = vpop.f32.mrb[0].mxu0
        %v4090 = vadd.f32 %v3545, %v4089
        %v4091 = vpop.f32.mrb[0].mxu0
        %v4092 = vpop.f32.mrb[0].mxu0
        %v4093 = vadd.f32 %v3548, %v4092
        %v4094 = vpop.f32.mrb[0].mxu0
        %4095 = vmatprep.mubr.bf16.mxu0 %v2391
        %4096 = vmatmul.mubr.bf16.gmra.mrb[0].mxu0 %v2390
        %v4097 = vpop.f32.mrb[0].mxu0
        %v4098 = vadd.f32 %v3553, %v4097
        %v4099 = vpop.f32.mrb[0].mxu0
        %v4100 = vpop.f32.mrb[0].mxu0
        %v4101 = vadd.f32 %v3556, %v4100
        %v4102 = vpop.f32.mrb[0].mxu0
        %4103 = vmatprep.mubr.bf16.mxu0 %v2397
        %4104 = vmatmul.mubr.bf16.gmra.mrb[0].mxu0 %v2396
        %v4105 = vpop.f32.mrb[0].mxu0
        %v4106 = vadd.f32 %v3561, %v4105
        %v4107 = vpop.f32.mrb[0].mxu0
        %v4108 = vpop.f32.mrb[0].mxu0
        %v4109 = vadd.f32 %v3564, %v4108
        %v4110 = vpop.f32.mrb[0].mxu0
        %4111 = vmatprep.mubr.bf16.mxu0 %v2403
        %4112 = vmatmul.mubr.bf16.gmra.mrb[0].mxu0 %v2402
        %v4113 = vpop.f32.mrb[0].mxu0
        %v4114 = vadd.f32 %v3569, %v4113
        %v4115 = vpop.f32.mrb[0].mxu0
        %v4116 = vpop.f32.mrb[0].mxu0
        %v4117 = vadd.f32 %v3572, %v4116
        %v4118 = vpop.f32.mrb[0].mxu0
        %4119 = vmatprep.mubr.bf16.mxu0 %v2409
        %4120 = vmatmul.mubr.bf16.gmra.mrb[0].mxu0 %v2408
        %v4121 = vpop.f32.mrb[0].mxu0
        %v4122 = vadd.f32 %v3577, %v4121
        %v4123 = vpop.f32.mrb[0].mxu0
        %v4124 = vpop.f32.mrb[0].mxu0
        %v4125 = vadd.f32 %v3580, %v4124
        %v4126 = vpop.f32.mrb[0].mxu0
        %4127 = vmatprep.mubr.bf16.mxu0 %v2415
        %4128 = vmatmul.mubr.bf16.gmra.mrb[0].mxu0 %v2414
        %v4129 = vpop.f32.mrb[0].mxu0
        %v4130 = vadd.f32 %v3585, %v4129
        %v4131 = vpop.f32.mrb[0].mxu0
        %v4132 = vpop.f32.mrb[0].mxu0
        %v4133 = vadd.f32 %v3588, %v4132
        %v4134 = vpop.f32.mrb[0].mxu0
        %4135 = vmatprep.mubr.bf16.mxu0 %v2421
        %4136 = vmatmul.mubr.bf16.gmra.mrb[0].mxu0 %v2420
        %v4137 = vpop.f32.mrb[0].mxu0
        %v4138 = vadd.f32 %v3593, %v4137
        %v4139 = vpop.f32.mrb[0].mxu0
        %v4140 = vpop.f32.mrb[0].mxu0
        %v4141 = vadd.f32 %v3596, %v4140
        %v4142 = vpop.f32.mrb[0].mxu0
        %4143 = vmatprep.mubr.bf16.mxu0 %v2427
        %4144 = vmatmul.mubr.bf16.gmra.mrb[0].mxu0 %v2426
        %v4145 = vpop.f32.mrb[0].mxu0
        %v4146 = vadd.f32 %v3601, %v4145
        %v4147 = vpop.f32.mrb[0].mxu0
        %v4148 = vpop.f32.mrb[0].mxu0
        %v4149 = vadd.f32 %v3604, %v4148
        %v4150 = vpop.f32.mrb[0].mxu0
        %4151 = vmatprep.mubr.bf16.mxu0 %v2433
        %4152 = vmatmul.mubr.bf16.gmra.mrb[0].mxu0 %v2432
        %v4153 = vpop.f32.mrb[0].mxu0
        %v4154 = vadd.f32 %v3609, %v4153
        %v4155 = vpop.f32.mrb[0].mxu0
        %v4156 = vpop.f32.mrb[0].mxu0
        %v4157 = vadd.f32 %v3612, %v4156
        %v4158 = vpop.f32.mrb[0].mxu0
        %4159 = vmatprep.mubr.bf16.mxu0 %v2439
        %4160 = vmatmul.mubr.bf16.gmra.mrb[0].mxu0 %v2438
        %v4161 = vpop.f32.mrb[0].mxu0
        %v4162 = vadd.f32 %v3617, %v4161
        %v4163 = vpop.f32.mrb[0].mxu0
        %v4164 = vpop.f32.mrb[0].mxu0
        %v4165 = vadd.f32 %v3620, %v4164
        %v4166 = vpop.f32.mrb[0].mxu0
        %4167 = vmatprep.mubr.bf16.mxu0 %v2445
        %4168 = vmatmul.mubr.bf16.gmra.mrb[0].mxu0 %v2444
        %v4169 = vpop.f32.mrb[0].mxu0
        %v4170 = vadd.f32 %v3625, %v4169
        %v4171 = vpop.f32.mrb[0].mxu0
        %v4172 = vpop.f32.mrb[0].mxu0
        %v4173 = vadd.f32 %v3628, %v4172
        %v4174 = vpop.f32.mrb[0].mxu0
        %4175 = vmatprep.mubr.bf16.mxu0 %v2451
        %4176 = vmatmul.mubr.bf16.gmra.mrb[0].mxu0 %v2450
        %v4177 = vpop.f32.mrb[0].mxu0
        %v4178 = vadd.f32 %v3633, %v4177
        %v4179 = vpop.f32.mrb[0].mxu0
        %v4180 = vpop.f32.mrb[0].mxu0
        %v4181 = vadd.f32 %v3636, %v4180
        %v4182 = vpop.f32.mrb[0].mxu0
        %4183 = vmatprep.mubr.bf16.mxu0 %v2457
        %4184 = vmatmul.mubr.bf16.gmra.mrb[0].mxu0 %v2456
        %v4185 = vpop.f32.mrb[0].mxu0
        %v4186 = vadd.f32 %v3641, %v4185
        %v4187 = vpop.f32.mrb[0].mxu0
        %v4188 = vpop.f32.mrb[0].mxu0
        %v4189 = vadd.f32 %v3644, %v4188
        %v4190 = vpop.f32.mrb[0].mxu0
        %4191 = vmatprep.mubr.bf16.mxu0 %v2463
        %4192 = vmatmul.mubr.bf16.gmra.mrb[0].mxu0 %v2462
        %v4193 = vpop.f32.mrb[0].mxu0
        %v4194 = vadd.f32 %v3649, %v4193
        %v4195 = vpop.f32.mrb[0].mxu0
        %v4196 = vpop.f32.mrb[0].mxu0
        %v4197 = vadd.f32 %v3652, %v4196
        %v4198 = vpop.f32.mrb[0].mxu0
        %4199 = vmatprep.mubr.bf16.mxu0 %v2469
        %4200 = vmatmul.mubr.bf16.gmra.mrb[0].mxu0 %v2468
        %v4201 = vpop.f32.mrb[0].mxu0
        %v4202 = vadd.f32 %v3657, %v4201
        %v4203 = vpop.f32.mrb[0].mxu0
        %v4204 = vpop.f32.mrb[0].mxu0
        %v4205 = vadd.f32 %v3660, %v4204
        %v4206 = vpop.f32.mrb[0].mxu0
        %4207 = vmatprep.mubr.bf16.mxu0 %v2475
        %4208 = vmatmul.mubr.bf16.gmra.mrb[0].mxu0 %v2474
        %v4209 = vpop.f32.mrb[0].mxu0
        %v4210 = vadd.f32 %v3665, %v4209
        %v4211 = vpop.f32.mrb[0].mxu0
        %v4212 = vpop.f32.mrb[0].mxu0
        %v4213 = vadd.f32 %v3668, %v4212
        %v4214 = vpop.f32.mrb[0].mxu0
        %4215 = vmatprep.mubr.bf16.mxu0 %v2481
        %4216 = vmatmul.mubr.bf16.gmra.mrb[0].mxu0 %v2480
        %v4217 = vpop.f32.mrb[0].mxu0
        %v4218 = vadd.f32 %v3673, %v4217
        %v4219 = vpop.f32.mrb[0].mxu0
        %v4220 = vpop.f32.mrb[0].mxu0
        %v4221 = vadd.f32 %v3676, %v4220
        %v4222 = vpop.f32.mrb[0].mxu0
        %4223 = vmatprep.mubr.bf16.mxu0 %v2487
        %4224 = vmatmul.mubr.bf16.gmra.mrb[0].mxu0 %v2486
        %v4225 = vpop.f32.mrb[0].mxu0
        %v4226 = vadd.f32 %v3681, %v4225
        %v4227 = vpop.f32.mrb[0].mxu0
        %v4228 = vpop.f32.mrb[0].mxu0
        %v4229 = vadd.f32 %v3684, %v4228
        %v4230 = vpop.f32.mrb[0].mxu0
        %4231 = vmatprep.mubr.bf16.mxu0 %v2493
        %4232 = vmatmul.mubr.bf16.gmra.mrb[0].mxu0 %v2492
        %v4233 = vpop.f32.mrb[0].mxu0
        %v4234 = vadd.f32 %v3689, %v4233
        %v4235 = vpop.f32.mrb[0].mxu0
        %v4236 = vpop.f32.mrb[0].mxu0
        %v4237 = vadd.f32 %v3692, %v4236
        %v4238 = vpop.f32.mrb[0].mxu0
        %4239 = vmatprep.mubr.bf16.mxu0 %v2499
        %4240 = vmatmul.mubr.bf16.gmra.mrb[0].mxu0 %v2498
        %v4241 = vpop.f32.mrb[0].mxu0
        %v4242 = vadd.f32 %v3697, %v4241
        %v4243 = vpop.f32.mrb[0].mxu0
        %v4244 = vpop.f32.mrb[0].mxu0
        %v4245 = vadd.f32 %v3700, %v4244
        %v4246 = vpop.f32.mrb[0].mxu0
        %4247 = vmatprep.mubr.bf16.mxu0 %v2505
        %4248 = vmatmul.mubr.bf16.gmra.mrb[0].mxu0 %v2504
        %v4249 = vpop.f32.mrb[0].mxu0
        %v4250 = vadd.f32 %v3705, %v4249
        %v4251 = vpop.f32.mrb[0].mxu0
        %v4252 = vpop.f32.mrb[0].mxu0
        %v4253 = vadd.f32 %v3708, %v4252
        %v4254 = vpop.f32.mrb[0].mxu0
        %4255 = vmatprep.mubr.bf16.mxu0 %v2511
        %4256 = vmatmul.mubr.bf16.gmra.mrb[0].mxu0 %v2510
        %v4257 = vpop.f32.mrb[0].mxu0
        %v4258 = vadd.f32 %v3713, %v4257
        %v4259 = vpop.f32.mrb[0].mxu0
        %v4260 = vpop.f32.mrb[0].mxu0
        %v4261 = vadd.f32 %v3716, %v4260
        %v4262 = vpop.f32.mrb[0].mxu0
        %4263 = vmatprep.mubr.bf16.mxu0 %v2517
        %4264 = vmatmul.mubr.bf16.gmra.mrb[0].mxu0 %v2516
        %v4265 = vpop.f32.mrb[0].mxu0
        %v4266 = vadd.f32 %v3721, %v4265
        %v4267 = vpop.f32.mrb[0].mxu0
        %v4268 = vpop.f32.mrb[0].mxu0
        %v4269 = vadd.f32 %v3724, %v4268
        %v4270 = vpop.f32.mrb[0].mxu0
        %4271 = vmatprep.mubr.bf16.mxu0 %v2523
        %4272 = vmatmul.mubr.bf16.gmra.mrb[0].mxu0 %v2522
        %v4273 = vpop.f32.mrb[0].mxu0
        %v4274 = vadd.f32 %v3729, %v4273
        %v4275 = vpop.f32.mrb[0].mxu0
        %v4276 = vpop.f32.mrb[0].mxu0
        %v4277 = vadd.f32 %v3732, %v4276
        %v4278 = vpop.f32.mrb[0].mxu0
        %4279 = vmatprep.mubr.bf16.mxu0 %v2529
        %4280 = vmatmul.mubr.bf16.gmra.mrb[0].mxu0 %v2528
        %v4281 = vpop.f32.mrb[0].mxu0
        %v4282 = vadd.f32 %v3737, %v4281
        %v4283 = vpop.f32.mrb[0].mxu0
        %v4284 = vpop.f32.mrb[0].mxu0
        %v4285 = vadd.f32 %v3740, %v4284
        %v4286 = vpop.f32.mrb[0].mxu0
        %4287 = vmatprep.mubr.bf16.mxu0 %v2535
        %4288 = vmatmul.mubr.bf16.gmra.mrb[0].mxu0 %v2534
        %v4289 = vpop.f32.mrb[0].mxu0
        %v4290 = vadd.f32 %v3745, %v4289
        %v4291 = vpop.f32.mrb[0].mxu0
        %v4292 = vpop.f32.mrb[0].mxu0
        %v4293 = vadd.f32 %v3748, %v4292
        %v4294 = vpop.f32.mrb[0].mxu0
        %4295 = vmatprep.mubr.bf16.mxu0 %v2541
        %4296 = vmatmul.mubr.bf16.gmra.mrb[0].mxu0 %v2540
        %v4297 = vpop.f32.mrb[0].mxu0
        %v4298 = vadd.f32 %v3753, %v4297
        %v4299 = vpop.f32.mrb[0].mxu0
        %v4300 = vpop.f32.mrb[0].mxu0
        %v4301 = vadd.f32 %v3756, %v4300
        %v4302 = vpop.f32.mrb[0].mxu0
        %4303 = vmatprep.mubr.bf16.mxu0 %v2547
        %4304 = vmatmul.mubr.bf16.gmra.mrb[0].mxu0 %v2546
        %v4305 = vpop.f32.mrb[0].mxu0
        %v4306 = vadd.f32 %v3761, %v4305
        %v4307 = vpop.f32.mrb[0].mxu0
        %v4308 = vpop.f32.mrb[0].mxu0
        %v4309 = vadd.f32 %v3764, %v4308
        %v4310 = vpop.f32.mrb[0].mxu0
        %4311 = vdwg.mxu0
        %4312 = vmatprep.subr.bf16.mxu0 0
        %4313 = vmatpush1.bf16.msra.mxu0 %v3158
        %4314 = vmatprep.subr.bf16.mxu0 0
        %4315 = vmatpush1.bf16.msra.mxu0 %v3159
        %4316 = vmatprep.subr.bf16.mxu0 0
        %4317 = vmatpush1.bf16.msra.mxu0 %v3160
        %4318 = vmatprep.subr.bf16.mxu0 0
        %4319 = vmatpush1.bf16.msra.mxu0 %v3161
        %4320 = vmatprep.subr.bf16.mxu0 0
        %4321 = vmatpush1.bf16.msra.mxu0 %v3162
        %4322 = vmatprep.subr.bf16.mxu0 0
        %4323 = vmatpush1.bf16.msra.mxu0 %v3163
        %4324 = vmatprep.subr.bf16.mxu0 0
        %4325 = vmatpush1.bf16.msra.mxu0 %v3164
        %4326 = vmatprep.subr.bf16.mxu0 0
        %4327 = vmatpush1.bf16.msra.mxu0 %v3165
        %4328 = vmatprep.subr.bf16.mxu0 0
        %4329 = vmatpush1.bf16.msra.mxu0 %v3166
        %4330 = vmatprep.subr.bf16.mxu0 0
        %4331 = vmatpush1.bf16.msra.mxu0 %v3167
        %4332 = vmatprep.subr.bf16.mxu0 0
        %4333 = vmatpush1.bf16.msra.mxu0 %v3168
        %4334 = vmatprep.subr.bf16.mxu0 0
        %4335 = vmatpush1.bf16.msra.mxu0 %v3169
        %4336 = vmatprep.subr.bf16.mxu0 0
        %4337 = vmatpush1.bf16.msra.mxu0 %v3170
        %4338 = vmatprep.subr.bf16.mxu0 0
        %4339 = vmatpush1.bf16.msra.mxu0 %v3171
        %4340 = vmatprep.subr.bf16.mxu0 0
        %4341 = vmatpush1.bf16.msra.mxu0 %v3172
        %4342 = vmatprep.subr.bf16.mxu0 0
        %4343 = vmatpush1.bf16.msra.mxu0 %v3173
        %4344 = vmatprep.mubr.bf16.mxu0 %v2171
        %4345 = vmatmul.mubr.bf16.gmra.mrb[0].mxu0 %v2170
        %v4346 = vpop.f32.mrb[0].mxu0
        %v4347 = vadd.f32 %v3802, %v4346
        %v4348 = vpop.f32.mrb[0].mxu0
        %v4349 = vpop.f32.mrb[0].mxu0
        %v4350 = vadd.f32 %v3805, %v4349
        %v4351 = vpop.f32.mrb[0].mxu0
        %4352 = vmatprep.mubr.bf16.mxu0 %v2177
        %4353 = vmatmul.mubr.bf16.gmra.mrb[0].mxu0 %v2176
        %v4354 = vpop.f32.mrb[0].mxu0
        %v4355 = vadd.f32 %v3810, %v4354
        %v4356 = vpop.f32.mrb[0].mxu0
        %v4357 = vpop.f32.mrb[0].mxu0
        %v4358 = vadd.f32 %v3813, %v4357
        %v4359 = vpop.f32.mrb[0].mxu0
        %4360 = vmatprep.mubr.bf16.mxu0 %v2183
        %4361 = vmatmul.mubr.bf16.gmra.mrb[0].mxu0 %v2182
        %v4362 = vpop.f32.mrb[0].mxu0
        %v4363 = vadd.f32 %v3818, %v4362
        %v4364 = vpop.f32.mrb[0].mxu0
        %v4365 = vpop.f32.mrb[0].mxu0
        %v4366 = vadd.f32 %v3821, %v4365
        %v4367 = vpop.f32.mrb[0].mxu0
        %4368 = vmatprep.mubr.bf16.mxu0 %v2189
        %4369 = vmatmul.mubr.bf16.gmra.mrb[0].mxu0 %v2188
        %v4370 = vpop.f32.mrb[0].mxu0
        %v4371 = vadd.f32 %v3826, %v4370
        %v4372 = vpop.f32.mrb[0].mxu0
        %v4373 = vpop.f32.mrb[0].mxu0
        %v4374 = vadd.f32 %v3829, %v4373
        %v4375 = vpop.f32.mrb[0].mxu0
        %4376 = vmatprep.mubr.bf16.mxu0 %v2195
        %4377 = vmatmul.mubr.bf16.gmra.mrb[0].mxu0 %v2194
        %v4378 = vpop.f32.mrb[0].mxu0
        %v4379 = vadd.f32 %v3834, %v4378
        %v4380 = vpop.f32.mrb[0].mxu0
        %v4381 = vpop.f32.mrb[0].mxu0
        %v4382 = vadd.f32 %v3837, %v4381
        %v4383 = vpop.f32.mrb[0].mxu0
        %4384 = vmatprep.mubr.bf16.mxu0 %v2201
        %4385 = vmatmul.mubr.bf16.gmra.mrb[0].mxu0 %v2200
        %v4386 = vpop.f32.mrb[0].mxu0
        %v4387 = vadd.f32 %v3842, %v4386
        %v4388 = vpop.f32.mrb[0].mxu0
        %v4389 = vpop.f32.mrb[0].mxu0
        %v4390 = vadd.f32 %v3845, %v4389
        %v4391 = vpop.f32.mrb[0].mxu0
        %4392 = vmatprep.mubr.bf16.mxu0 %v2207
        %4393 = vmatmul.mubr.bf16.gmra.mrb[0].mxu0 %v2206
        %v4394 = vpop.f32.mrb[0].mxu0
        %v4395 = vadd.f32 %v3850, %v4394
        %v4396 = vpop.f32.mrb[0].mxu0
        %v4397 = vpop.f32.mrb[0].mxu0
        %v4398 = vadd.f32 %v3853, %v4397
        %v4399 = vpop.f32.mrb[0].mxu0
        %4400 = vmatprep.mubr.bf16.mxu0 %v2213
        %4401 = vmatmul.mubr.bf16.gmra.mrb[0].mxu0 %v2212
        %v4402 = vpop.f32.mrb[0].mxu0
        %v4403 = vadd.f32 %v3858, %v4402
        %v4404 = vpop.f32.mrb[0].mxu0
        %v4405 = vpop.f32.mrb[0].mxu0
        %v4406 = vadd.f32 %v3861, %v4405
        %v4407 = vpop.f32.mrb[0].mxu0
        %4408 = vmatprep.mubr.bf16.mxu0 %v2219
        %4409 = vmatmul.mubr.bf16.gmra.mrb[0].mxu0 %v2218
        %v4410 = vpop.f32.mrb[0].mxu0
        %v4411 = vadd.f32 %v3866, %v4410
        %v4412 = vpop.f32.mrb[0].mxu0
        %v4413 = vpop.f32.mrb[0].mxu0
        %v4414 = vadd.f32 %v3869, %v4413
        %v4415 = vpop.f32.mrb[0].mxu0
        %4416 = vmatprep.mubr.bf16.mxu0 %v2225
        %4417 = vmatmul.mubr.bf16.gmra.mrb[0].mxu0 %v2224
        %v4418 = vpop.f32.mrb[0].mxu0
        %v4419 = vadd.f32 %v3874, %v4418
        %v4420 = vpop.f32.mrb[0].mxu0
        %v4421 = vpop.f32.mrb[0].mxu0
        %v4422 = vadd.f32 %v3877, %v4421
        %v4423 = vpop.f32.mrb[0].mxu0
        %4424 = vmatprep.mubr.bf16.mxu0 %v2231
        %4425 = vmatmul.mubr.bf16.gmra.mrb[0].mxu0 %v2230
        %v4426 = vpop.f32.mrb[0].mxu0
        %v4427 = vadd.f32 %v3882, %v4426
        %v4428 = vpop.f32.mrb[0].mxu0
        %v4429 = vpop.f32.mrb[0].mxu0
        %v4430 = vadd.f32 %v3885, %v4429
        %v4431 = vpop.f32.mrb[0].mxu0
        %4432 = vmatprep.mubr.bf16.mxu0 %v2237
        %4433 = vmatmul.mubr.bf16.gmra.mrb[0].mxu0 %v2236
        %v4434 = vpop.f32.mrb[0].mxu0
        %v4435 = vadd.f32 %v3890, %v4434
        %v4436 = vpop.f32.mrb[0].mxu0
        %v4437 = vpop.f32.mrb[0].mxu0
        %v4438 = vadd.f32 %v3893, %v4437
        %v4439 = vpop.f32.mrb[0].mxu0
        %4440 = vmatprep.mubr.bf16.mxu0 %v2243
        %4441 = vmatmul.mubr.bf16.gmra.mrb[0].mxu0 %v2242
        %v4442 = vpop.f32.mrb[0].mxu0
        %v4443 = vadd.f32 %v3898, %v4442
        %v4444 = vpop.f32.mrb[0].mxu0
        %v4445 = vpop.f32.mrb[0].mxu0
        %v4446 = vadd.f32 %v3901, %v4445
        %v4447 = vpop.f32.mrb[0].mxu0
        %4448 = vmatprep.mubr.bf16.mxu0 %v2249
        %4449 = vmatmul.mubr.bf16.gmra.mrb[0].mxu0 %v2248
        %v4450 = vpop.f32.mrb[0].mxu0
        %v4451 = vadd.f32 %v3906, %v4450
        %v4452 = vpop.f32.mrb[0].mxu0
        %v4453 = vpop.f32.mrb[0].mxu0
        %v4454 = vadd.f32 %v3909, %v4453
        %v4455 = vpop.f32.mrb[0].mxu0
        %4456 = vmatprep.mubr.bf16.mxu0 %v2255
        %4457 = vmatmul.mubr.bf16.gmra.mrb[0].mxu0 %v2254
        %v4458 = vpop.f32.mrb[0].mxu0
        %v4459 = vadd.f32 %v3914, %v4458
        %v4460 = vpop.f32.mrb[0].mxu0
        %v4461 = vpop.f32.mrb[0].mxu0
        %v4462 = vadd.f32 %v3917, %v4461
        %v4463 = vpop.f32.mrb[0].mxu0
        %4464 = vmatprep.mubr.bf16.mxu0 %v2261
        %4465 = vmatmul.mubr.bf16.gmra.mrb[0].mxu0 %v2260
        %v4466 = vpop.f32.mrb[0].mxu0
        %v4467 = vadd.f32 %v3922, %v4466
        %v4468 = vpop.f32.mrb[0].mxu0
        %v4469 = vpop.f32.mrb[0].mxu0
        %v4470 = vadd.f32 %v3925, %v4469
        %v4471 = vpop.f32.mrb[0].mxu0
        %4472 = vmatprep.mubr.bf16.mxu0 %v2267
        %4473 = vmatmul.mubr.bf16.gmra.mrb[0].mxu0 %v2266
        %v4474 = vpop.f32.mrb[0].mxu0
        %v4475 = vadd.f32 %v3930, %v4474
        %v4476 = vpop.f32.mrb[0].mxu0
        %v4477 = vpop.f32.mrb[0].mxu0
        %v4478 = vadd.f32 %v3933, %v4477
        %v4479 = vpop.f32.mrb[0].mxu0
        %4480 = vmatprep.mubr.bf16.mxu0 %v2273
        %4481 = vmatmul.mubr.bf16.gmra.mrb[0].mxu0 %v2272
        %v4482 = vpop.f32.mrb[0].mxu0
        %v4483 = vadd.f32 %v3938, %v4482
        %v4484 = vpop.f32.mrb[0].mxu0
        %v4485 = vpop.f32.mrb[0].mxu0
        %v4486 = vadd.f32 %v3941, %v4485
        %v4487 = vpop.f32.mrb[0].mxu0
        %4488 = vmatprep.mubr.bf16.mxu0 %v2279
        %4489 = vmatmul.mubr.bf16.gmra.mrb[0].mxu0 %v2278
        %v4490 = vpop.f32.mrb[0].mxu0
        %v4491 = vadd.f32 %v3946, %v4490
        %v4492 = vpop.f32.mrb[0].mxu0
        %v4493 = vpop.f32.mrb[0].mxu0
        %v4494 = vadd.f32 %v3949, %v4493
        %v4495 = vpop.f32.mrb[0].mxu0
        %4496 = vmatprep.mubr.bf16.mxu0 %v2285
        %4497 = vmatmul.mubr.bf16.gmra.mrb[0].mxu0 %v2284
        %v4498 = vpop.f32.mrb[0].mxu0
        %v4499 = vadd.f32 %v3954, %v4498
        %v4500 = vpop.f32.mrb[0].mxu0
        %v4501 = vpop.f32.mrb[0].mxu0
        %v4502 = vadd.f32 %v3957, %v4501
        %v4503 = vpop.f32.mrb[0].mxu0
        %4504 = vmatprep.mubr.bf16.mxu0 %v2291
        %4505 = vmatmul.mubr.bf16.gmra.mrb[0].mxu0 %v2290
        %v4506 = vpop.f32.mrb[0].mxu0
        %v4507 = vadd.f32 %v3962, %v4506
        %v4508 = vpop.f32.mrb[0].mxu0
        %v4509 = vpop.f32.mrb[0].mxu0
        %v4510 = vadd.f32 %v3965, %v4509
        %v4511 = vpop.f32.mrb[0].mxu0
        %4512 = vmatprep.mubr.bf16.mxu0 %v2297
        %4513 = vmatmul.mubr.bf16.gmra.mrb[0].mxu0 %v2296
        %v4514 = vpop.f32.mrb[0].mxu0
        %v4515 = vadd.f32 %v3970, %v4514
        %v4516 = vpop.f32.mrb[0].mxu0
        %v4517 = vpop.f32.mrb[0].mxu0
        %v4518 = vadd.f32 %v3973, %v4517
        %v4519 = vpop.f32.mrb[0].mxu0
        %4520 = vmatprep.mubr.bf16.mxu0 %v2303
        %4521 = vmatmul.mubr.bf16.gmra.mrb[0].mxu0 %v2302
        %v4522 = vpop.f32.mrb[0].mxu0
        %v4523 = vadd.f32 %v3978, %v4522
        %v4524 = vpop.f32.mrb[0].mxu0
        %v4525 = vpop.f32.mrb[0].mxu0
        %v4526 = vadd.f32 %v3981, %v4525
        %v4527 = vpop.f32.mrb[0].mxu0
        %4528 = vmatprep.mubr.bf16.mxu0 %v2309
        %4529 = vmatmul.mubr.bf16.gmra.mrb[0].mxu0 %v2308
        %v4530 = vpop.f32.mrb[0].mxu0
        %v4531 = vadd.f32 %v3986, %v4530
        %v4532 = vpop.f32.mrb[0].mxu0
        %v4533 = vpop.f32.mrb[0].mxu0
        %v4534 = vadd.f32 %v3989, %v4533
        %v4535 = vpop.f32.mrb[0].mxu0
        %4536 = vmatprep.mubr.bf16.mxu0 %v2315
        %4537 = vmatmul.mubr.bf16.gmra.mrb[0].mxu0 %v2314
        %v4538 = vpop.f32.mrb[0].mxu0
        %v4539 = vadd.f32 %v3994, %v4538
        %v4540 = vpop.f32.mrb[0].mxu0
        %v4541 = vpop.f32.mrb[0].mxu0
        %v4542 = vadd.f32 %v3997, %v4541
        %v4543 = vpop.f32.mrb[0].mxu0
        %4544 = vmatprep.mubr.bf16.mxu0 %v2321
        %4545 = vmatmul.mubr.bf16.gmra.mrb[0].mxu0 %v2320
        %v4546 = vpop.f32.mrb[0].mxu0
        %v4547 = vadd.f32 %v4002, %v4546
        %v4548 = vpop.f32.mrb[0].mxu0
        %v4549 = vpop.f32.mrb[0].mxu0
        %v4550 = vadd.f32 %v4005, %v4549
        %v4551 = vpop.f32.mrb[0].mxu0
        %4552 = vmatprep.mubr.bf16.mxu0 %v2327
        %4553 = vmatmul.mubr.bf16.gmra.mrb[0].mxu0 %v2326
        %v4554 = vpop.f32.mrb[0].mxu0
        %v4555 = vadd.f32 %v4010, %v4554
        %v4556 = vpop.f32.mrb[0].mxu0
        %v4557 = vpop.f32.mrb[0].mxu0
        %v4558 = vadd.f32 %v4013, %v4557
        %v4559 = vpop.f32.mrb[0].mxu0
        %4560 = vmatprep.mubr.bf16.mxu0 %v2333
        %4561 = vmatmul.mubr.bf16.gmra.mrb[0].mxu0 %v2332
        %v4562 = vpop.f32.mrb[0].mxu0
        %v4563 = vadd.f32 %v4018, %v4562
        %v4564 = vpop.f32.mrb[0].mxu0
        %v4565 = vpop.f32.mrb[0].mxu0
        %v4566 = vadd.f32 %v4021, %v4565
        %v4567 = vpop.f32.mrb[0].mxu0
        %4568 = vmatprep.mubr.bf16.mxu0 %v2339
        %4569 = vmatmul.mubr.bf16.gmra.mrb[0].mxu0 %v2338
        %v4570 = vpop.f32.mrb[0].mxu0
        %v4571 = vadd.f32 %v4026, %v4570
        %v4572 = vpop.f32.mrb[0].mxu0
        %v4573 = vpop.f32.mrb[0].mxu0
        %v4574 = vadd.f32 %v4029, %v4573
        %v4575 = vpop.f32.mrb[0].mxu0
        %4576 = vmatprep.mubr.bf16.mxu0 %v2345
        %4577 = vmatmul.mubr.bf16.gmra.mrb[0].mxu0 %v2344
        %v4578 = vpop.f32.mrb[0].mxu0
        %v4579 = vadd.f32 %v4034, %v4578
        %v4580 = vpop.f32.mrb[0].mxu0
        %v4581 = vpop.f32.mrb[0].mxu0
        %v4582 = vadd.f32 %v4037, %v4581
        %v4583 = vpop.f32.mrb[0].mxu0
        %4584 = vmatprep.mubr.bf16.mxu0 %v2351
        %4585 = vmatmul.mubr.bf16.gmra.mrb[0].mxu0 %v2350
        %v4586 = vpop.f32.mrb[0].mxu0
        %v4587 = vadd.f32 %v4042, %v4586
        %v4588 = vpop.f32.mrb[0].mxu0
        %v4589 = vpop.f32.mrb[0].mxu0
        %v4590 = vadd.f32 %v4045, %v4589
        %v4591 = vpop.f32.mrb[0].mxu0
        %4592 = vmatprep.mubr.bf16.mxu0 %v2357
        %4593 = vmatmul.mubr.bf16.gmra.mrb[0].mxu0 %v2356
        %v4594 = vpop.f32.mrb[0].mxu0
        %v4595 = vadd.f32 %v4050, %v4594
        %v4596 = vpop.f32.mrb[0].mxu0
        %v4597 = vpop.f32.mrb[0].mxu0
        %v4598 = vadd.f32 %v4053, %v4597
        %v4599 = vpop.f32.mrb[0].mxu0
        %4600 = vmatprep.mubr.bf16.mxu0 %v2363
        %4601 = vmatmul.mubr.bf16.gmra.mrb[0].mxu0 %v2362
        %v4602 = vpop.f32.mrb[0].mxu0
        %v4603 = vadd.f32 %v4058, %v4602
        %v4604 = vpop.f32.mrb[0].mxu0
        %v4605 = vpop.f32.mrb[0].mxu0
        %v4606 = vadd.f32 %v4061, %v4605
        %v4607 = vpop.f32.mrb[0].mxu0
        %4608 = vmatprep.mubr.bf16.mxu0 %v2369
        %4609 = vmatmul.mubr.bf16.gmra.mrb[0].mxu0 %v2368
        %v4610 = vpop.f32.mrb[0].mxu0
        %v4611 = vadd.f32 %v4066, %v4610
        %v4612 = vpop.f32.mrb[0].mxu0
        %v4613 = vpop.f32.mrb[0].mxu0
        %v4614 = vadd.f32 %v4069, %v4613
        %v4615 = vpop.f32.mrb[0].mxu0
        %4616 = vmatprep.mubr.bf16.mxu0 %v2375
        %4617 = vmatmul.mubr.bf16.gmra.mrb[0].mxu0 %v2374
        %v4618 = vpop.f32.mrb[0].mxu0
        %v4619 = vadd.f32 %v4074, %v4618
        %v4620 = vpop.f32.mrb[0].mxu0
        %v4621 = vpop.f32.mrb[0].mxu0
        %v4622 = vadd.f32 %v4077, %v4621
        %v4623 = vpop.f32.mrb[0].mxu0
        %4624 = vmatprep.mubr.bf16.mxu0 %v2381
        %4625 = vmatmul.mubr.bf16.gmra.mrb[0].mxu0 %v2380
        %v4626 = vpop.f32.mrb[0].mxu0
        %v4627 = vadd.f32 %v4082, %v4626
        %v4628 = vpop.f32.mrb[0].mxu0
        %v4629 = vpop.f32.mrb[0].mxu0
        %v4630 = vadd.f32 %v4085, %v4629
        %v4631 = vpop.f32.mrb[0].mxu0
        %4632 = vmatprep.mubr.bf16.mxu0 %v2387
        %4633 = vmatmul.mubr.bf16.gmra.mrb[0].mxu0 %v2386
        %v4634 = vpop.f32.mrb[0].mxu0
        %v4635 = vadd.f32 %v4090, %v4634
        %v4636 = vpop.f32.mrb[0].mxu0
        %v4637 = vpop.f32.mrb[0].mxu0
        %v4638 = vadd.f32 %v4093, %v4637
        %v4639 = vpop.f32.mrb[0].mxu0
        %4640 = vmatprep.mubr.bf16.mxu0 %v2393
        %4641 = vmatmul.mubr.bf16.gmra.mrb[0].mxu0 %v2392
        %v4642 = vpop.f32.mrb[0].mxu0
        %v4643 = vadd.f32 %v4098, %v4642
        %v4644 = vpop.f32.mrb[0].mxu0
        %v4645 = vpop.f32.mrb[0].mxu0
        %v4646 = vadd.f32 %v4101, %v4645
        %v4647 = vpop.f32.mrb[0].mxu0
        %4648 = vmatprep.mubr.bf16.mxu0 %v2399
        %4649 = vmatmul.mubr.bf16.gmra.mrb[0].mxu0 %v2398
        %v4650 = vpop.f32.mrb[0].mxu0
        %v4651 = vadd.f32 %v4106, %v4650
        %v4652 = vpop.f32.mrb[0].mxu0
        %v4653 = vpop.f32.mrb[0].mxu0
        %v4654 = vadd.f32 %v4109, %v4653
        %v4655 = vpop.f32.mrb[0].mxu0
        %4656 = vmatprep.mubr.bf16.mxu0 %v2405
        %4657 = vmatmul.mubr.bf16.gmra.mrb[0].mxu0 %v2404
        %v4658 = vpop.f32.mrb[0].mxu0
        %v4659 = vadd.f32 %v4114, %v4658
        %v4660 = vpop.f32.mrb[0].mxu0
        %v4661 = vpop.f32.mrb[0].mxu0
        %v4662 = vadd.f32 %v4117, %v4661
        %v4663 = vpop.f32.mrb[0].mxu0
        %4664 = vmatprep.mubr.bf16.mxu0 %v2411
        %4665 = vmatmul.mubr.bf16.gmra.mrb[0].mxu0 %v2410
        %v4666 = vpop.f32.mrb[0].mxu0
        %v4667 = vadd.f32 %v4122, %v4666
        %v4668 = vpop.f32.mrb[0].mxu0
        %v4669 = vpop.f32.mrb[0].mxu0
        %v4670 = vadd.f32 %v4125, %v4669
        %v4671 = vpop.f32.mrb[0].mxu0
        %4672 = vmatprep.mubr.bf16.mxu0 %v2417
        %4673 = vmatmul.mubr.bf16.gmra.mrb[0].mxu0 %v2416
        %v4674 = vpop.f32.mrb[0].mxu0
        %v4675 = vadd.f32 %v4130, %v4674
        %v4676 = vpop.f32.mrb[0].mxu0
        %v4677 = vpop.f32.mrb[0].mxu0
        %v4678 = vadd.f32 %v4133, %v4677
        %v4679 = vpop.f32.mrb[0].mxu0
        %4680 = vmatprep.mubr.bf16.mxu0 %v2423
        %4681 = vmatmul.mubr.bf16.gmra.mrb[0].mxu0 %v2422
        %v4682 = vpop.f32.mrb[0].mxu0
        %v4683 = vadd.f32 %v4138, %v4682
        %v4684 = vpop.f32.mrb[0].mxu0
        %v4685 = vpop.f32.mrb[0].mxu0
        %v4686 = vadd.f32 %v4141, %v4685
        %v4687 = vpop.f32.mrb[0].mxu0
        %4688 = vmatprep.mubr.bf16.mxu0 %v2429
        %4689 = vmatmul.mubr.bf16.gmra.mrb[0].mxu0 %v2428
        %v4690 = vpop.f32.mrb[0].mxu0
        %v4691 = vadd.f32 %v4146, %v4690
        %v4692 = vpop.f32.mrb[0].mxu0
        %v4693 = vpop.f32.mrb[0].mxu0
        %v4694 = vadd.f32 %v4149, %v4693
        %v4695 = vpop.f32.mrb[0].mxu0
        %4696 = vmatprep.mubr.bf16.mxu0 %v2435
        %4697 = vmatmul.mubr.bf16.gmra.mrb[0].mxu0 %v2434
        %v4698 = vpop.f32.mrb[0].mxu0
        %v4699 = vadd.f32 %v4154, %v4698
        %v4700 = vpop.f32.mrb[0].mxu0
        %v4701 = vpop.f32.mrb[0].mxu0
        %v4702 = vadd.f32 %v4157, %v4701
        %v4703 = vpop.f32.mrb[0].mxu0
        %4704 = vmatprep.mubr.bf16.mxu0 %v2441
        %4705 = vmatmul.mubr.bf16.gmra.mrb[0].mxu0 %v2440
        %v4706 = vpop.f32.mrb[0].mxu0
        %v4707 = vadd.f32 %v4162, %v4706
        %v4708 = vpop.f32.mrb[0].mxu0
        %v4709 = vpop.f32.mrb[0].mxu0
        %v4710 = vadd.f32 %v4165, %v4709
        %v4711 = vpop.f32.mrb[0].mxu0
        %4712 = vmatprep.mubr.bf16.mxu0 %v2447
        %4713 = vmatmul.mubr.bf16.gmra.mrb[0].mxu0 %v2446
        %v4714 = vpop.f32.mrb[0].mxu0
        %v4715 = vadd.f32 %v4170, %v4714
        %v4716 = vpop.f32.mrb[0].mxu0
        %v4717 = vpop.f32.mrb[0].mxu0
        %v4718 = vadd.f32 %v4173, %v4717
        %v4719 = vpop.f32.mrb[0].mxu0
        %4720 = vmatprep.mubr.bf16.mxu0 %v2453
        %4721 = vmatmul.mubr.bf16.gmra.mrb[0].mxu0 %v2452
        %v4722 = vpop.f32.mrb[0].mxu0
        %v4723 = vadd.f32 %v4178, %v4722
        %v4724 = vpop.f32.mrb[0].mxu0
        %v4725 = vpop.f32.mrb[0].mxu0
        %v4726 = vadd.f32 %v4181, %v4725
        %v4727 = vpop.f32.mrb[0].mxu0
        %4728 = vmatprep.mubr.bf16.mxu0 %v2459
        %4729 = vmatmul.mubr.bf16.gmra.mrb[0].mxu0 %v2458
        %v4730 = vpop.f32.mrb[0].mxu0
        %v4731 = vadd.f32 %v4186, %v4730
        %v4732 = vpop.f32.mrb[0].mxu0
        %v4733 = vpop.f32.mrb[0].mxu0
        %v4734 = vadd.f32 %v4189, %v4733
        %v4735 = vpop.f32.mrb[0].mxu0
        %4736 = vmatprep.mubr.bf16.mxu0 %v2465
        %4737 = vmatmul.mubr.bf16.gmra.mrb[0].mxu0 %v2464
        %v4738 = vpop.f32.mrb[0].mxu0
        %v4739 = vadd.f32 %v4194, %v4738
        %v4740 = vpop.f32.mrb[0].mxu0
        %v4741 = vpop.f32.mrb[0].mxu0
        %v4742 = vadd.f32 %v4197, %v4741
        %v4743 = vpop.f32.mrb[0].mxu0
        %4744 = vmatprep.mubr.bf16.mxu0 %v2471
        %4745 = vmatmul.mubr.bf16.gmra.mrb[0].mxu0 %v2470
        %v4746 = vpop.f32.mrb[0].mxu0
        %v4747 = vadd.f32 %v4202, %v4746
        %v4748 = vpop.f32.mrb[0].mxu0
        %v4749 = vpop.f32.mrb[0].mxu0
        %v4750 = vadd.f32 %v4205, %v4749
        %v4751 = vpop.f32.mrb[0].mxu0
        %4752 = vmatprep.mubr.bf16.mxu0 %v2477
        %4753 = vmatmul.mubr.bf16.gmra.mrb[0].mxu0 %v2476
        %v4754 = vpop.f32.mrb[0].mxu0
        %v4755 = vadd.f32 %v4210, %v4754
        %v4756 = vpop.f32.mrb[0].mxu0
        %v4757 = vpop.f32.mrb[0].mxu0
        %v4758 = vadd.f32 %v4213, %v4757
        %v4759 = vpop.f32.mrb[0].mxu0
        %4760 = vmatprep.mubr.bf16.mxu0 %v2483
        %4761 = vmatmul.mubr.bf16.gmra.mrb[0].mxu0 %v2482
        %v4762 = vpop.f32.mrb[0].mxu0
        %v4763 = vadd.f32 %v4218, %v4762
        %v4764 = vpop.f32.mrb[0].mxu0
        %v4765 = vpop.f32.mrb[0].mxu0
        %v4766 = vadd.f32 %v4221, %v4765
        %v4767 = vpop.f32.mrb[0].mxu0
        %4768 = vmatprep.mubr.bf16.mxu0 %v2489
        %4769 = vmatmul.mubr.bf16.gmra.mrb[0].mxu0 %v2488
        %v4770 = vpop.f32.mrb[0].mxu0
        %v4771 = vadd.f32 %v4226, %v4770
        %v4772 = vpop.f32.mrb[0].mxu0
        %v4773 = vpop.f32.mrb[0].mxu0
        %v4774 = vadd.f32 %v4229, %v4773
        %v4775 = vpop.f32.mrb[0].mxu0
        %4776 = vmatprep.mubr.bf16.mxu0 %v2495
        %4777 = vmatmul.mubr.bf16.gmra.mrb[0].mxu0 %v2494
        %v4778 = vpop.f32.mrb[0].mxu0
        %v4779 = vadd.f32 %v4234, %v4778
        %v4780 = vpop.f32.mrb[0].mxu0
        %v4781 = vpop.f32.mrb[0].mxu0
        %v4782 = vadd.f32 %v4237, %v4781
        %v4783 = vpop.f32.mrb[0].mxu0
        %4784 = vmatprep.mubr.bf16.mxu0 %v2501
        %4785 = vmatmul.mubr.bf16.gmra.mrb[0].mxu0 %v2500
        %v4786 = vpop.f32.mrb[0].mxu0
        %v4787 = vadd.f32 %v4242, %v4786
        %v4788 = vpop.f32.mrb[0].mxu0
        %v4789 = vpop.f32.mrb[0].mxu0
        %v4790 = vadd.f32 %v4245, %v4789
        %v4791 = vpop.f32.mrb[0].mxu0
        %4792 = vmatprep.mubr.bf16.mxu0 %v2507
        %4793 = vmatmul.mubr.bf16.gmra.mrb[0].mxu0 %v2506
        %v4794 = vpop.f32.mrb[0].mxu0
        %v4795 = vadd.f32 %v4250, %v4794
        %v4796 = vpop.f32.mrb[0].mxu0
        %v4797 = vpop.f32.mrb[0].mxu0
        %v4798 = vadd.f32 %v4253, %v4797
        %v4799 = vpop.f32.mrb[0].mxu0
        %4800 = vmatprep.mubr.bf16.mxu0 %v2513
        %4801 = vmatmul.mubr.bf16.gmra.mrb[0].mxu0 %v2512
        %v4802 = vpop.f32.mrb[0].mxu0
        %v4803 = vadd.f32 %v4258, %v4802
        %v4804 = vpop.f32.mrb[0].mxu0
        %v4805 = vpop.f32.mrb[0].mxu0
        %v4806 = vadd.f32 %v4261, %v4805
        %v4807 = vpop.f32.mrb[0].mxu0
        %4808 = vmatprep.mubr.bf16.mxu0 %v2519
        %4809 = vmatmul.mubr.bf16.gmra.mrb[0].mxu0 %v2518
        %v4810 = vpop.f32.mrb[0].mxu0
        %v4811 = vadd.f32 %v4266, %v4810
        %v4812 = vpop.f32.mrb[0].mxu0
        %v4813 = vpop.f32.mrb[0].mxu0
        %v4814 = vadd.f32 %v4269, %v4813
        %v4815 = vpop.f32.mrb[0].mxu0
        %4816 = vmatprep.mubr.bf16.mxu0 %v2525
        %4817 = vmatmul.mubr.bf16.gmra.mrb[0].mxu0 %v2524
        %v4818 = vpop.f32.mrb[0].mxu0
        %v4819 = vadd.f32 %v4274, %v4818
        %v4820 = vpop.f32.mrb[0].mxu0
        %v4821 = vpop.f32.mrb[0].mxu0
        %v4822 = vadd.f32 %v4277, %v4821
        %v4823 = vpop.f32.mrb[0].mxu0
        %4824 = vmatprep.mubr.bf16.mxu0 %v2531
        %4825 = vmatmul.mubr.bf16.gmra.mrb[0].mxu0 %v2530
        %v4826 = vpop.f32.mrb[0].mxu0
        %v4827 = vadd.f32 %v4282, %v4826
        %v4828 = vpop.f32.mrb[0].mxu0
        %v4829 = vpop.f32.mrb[0].mxu0
        %v4830 = vadd.f32 %v4285, %v4829
        %v4831 = vpop.f32.mrb[0].mxu0
        %4832 = vmatprep.mubr.bf16.mxu0 %v2537
        %4833 = vmatmul.mubr.bf16.gmra.mrb[0].mxu0 %v2536
        %v4834 = vpop.f32.mrb[0].mxu0
        %v4835 = vadd.f32 %v4290, %v4834
        %v4836 = vpop.f32.mrb[0].mxu0
        %v4837 = vpop.f32.mrb[0].mxu0
        %v4838 = vadd.f32 %v4293, %v4837
        %v4839 = vpop.f32.mrb[0].mxu0
        %4840 = vmatprep.mubr.bf16.mxu0 %v2543
        %4841 = vmatmul.mubr.bf16.gmra.mrb[0].mxu0 %v2542
        %v4842 = vpop.f32.mrb[0].mxu0
        %v4843 = vadd.f32 %v4298, %v4842
        %v4844 = vpop.f32.mrb[0].mxu0
        %v4845 = vpop.f32.mrb[0].mxu0
        %v4846 = vadd.f32 %v4301, %v4845
        %v4847 = vpop.f32.mrb[0].mxu0
        %4848 = vmatprep.mubr.bf16.mxu0 %v2549
        %4849 = vmatmul.mubr.bf16.gmra.mrb[0].mxu0 %v2548
        %v4850 = vpop.f32.mrb[0].mxu0
        %v4851 = vadd.f32 %v4306, %v4850
        %v4852 = vpop.f32.mrb[0].mxu0
        %v4853 = vpop.f32.mrb[0].mxu0
        %v4854 = vadd.f32 %v4309, %v4853
        %v4855 = vpop.f32.mrb[0].mxu0
        %4856 = vdwg.mxu0
        %v4857 = vadd.f32 %v406, %v4347
        %v4858 = vadd.f32 %v407, %v4350
        %v4859 = vadd.f32 %v408, %v4355
        %v4860 = vadd.f32 %v409, %v4358
        %v4861 = vadd.f32 %v410, %v4363
        %v4862 = vadd.f32 %v411, %v4366
        %v4863 = vadd.f32 %v412, %v4371
        %v4864 = vadd.f32 %v413, %v4374
        %v4865 = vadd.f32 %v414, %v4379
        %v4866 = vadd.f32 %v415, %v4382
        %v4867 = vadd.f32 %v416, %v4387
        %v4868 = vadd.f32 %v417, %v4390
        %v4869 = vadd.f32 %v418, %v4395
        %v4870 = vadd.f32 %v419, %v4398
        %v4871 = vadd.f32 %v420, %v4403
        %v4872 = vadd.f32 %v421, %v4406
        %v4873 = vadd.f32 %v422, %v4411
        %v4874 = vadd.f32 %v423, %v4414
        %v4875 = vadd.f32 %v424, %v4419
        %v4876 = vadd.f32 %v425, %v4422
        %v4877 = vadd.f32 %v426, %v4427
        %v4878 = vadd.f32 %v427, %v4430
        %v4879 = vadd.f32 %v428, %v4435
        %v4880 = vadd.f32 %v429, %v4438
        %v4881 = vadd.f32 %v430, %v4443
        %v4882 = vadd.f32 %v431, %v4446
        %v4883 = vadd.f32 %v432, %v4451
        %v4884 = vadd.f32 %v433, %v4454
        %v4885 = vadd.f32 %v434, %v4459
        %v4886 = vadd.f32 %v435, %v4462
        %v4887 = vadd.f32 %v436, %v4467
        %v4888 = vadd.f32 %v437, %v4470
        %v4889 = vadd.f32 %v438, %v4475
        %v4890 = vadd.f32 %v439, %v4478
        %v4891 = vadd.f32 %v440, %v4483
        %v4892 = vadd.f32 %v441, %v4486
        %v4893 = vadd.f32 %v442, %v4491
        %v4894 = vadd.f32 %v443, %v4494
        %v4895 = vadd.f32 %v444, %v4499
        %v4896 = vadd.f32 %v445, %v4502
        %v4897 = vadd.f32 %v446, %v4507
        %v4898 = vadd.f32 %v447, %v4510
        %v4899 = vadd.f32 %v448, %v4515
        %v4900 = vadd.f32 %v449, %v4518
        %v4901 = vadd.f32 %v450, %v4523
        %v4902 = vadd.f32 %v451, %v4526
        %v4903 = vadd.f32 %v452, %v4531
        %v4904 = vadd.f32 %v453, %v4534
        %v4905 = vadd.f32 %v454, %v4539
        %v4906 = vadd.f32 %v455, %v4542
        %v4907 = vadd.f32 %v456, %v4547
        %v4908 = vadd.f32 %v457, %v4550
        %v4909 = vadd.f32 %v458, %v4555
        %v4910 = vadd.f32 %v459, %v4558
        %v4911 = vadd.f32 %v460, %v4563
        %v4912 = vadd.f32 %v461, %v4566
        %v4913 = vadd.f32 %v462, %v4571
        %v4914 = vadd.f32 %v463, %v4574
        %v4915 = vadd.f32 %v464, %v4579
        %v4916 = vadd.f32 %v465, %v4582
        %v4917 = vadd.f32 %v466, %v4587
        %v4918 = vadd.f32 %v467, %v4590
        %v4919 = vadd.f32 %v468, %v4595
        %v4920 = vadd.f32 %v469, %v4598
        %v4921 = vadd.f32 %v470, %v4603
        %v4922 = vadd.f32 %v471, %v4606
        %v4923 = vadd.f32 %v472, %v4611
        %v4924 = vadd.f32 %v473, %v4614
        %v4925 = vadd.f32 %v474, %v4619
        %v4926 = vadd.f32 %v475, %v4622
        %v4927 = vadd.f32 %v476, %v4627
        %v4928 = vadd.f32 %v477, %v4630
        %v4929 = vadd.f32 %v478, %v4635
        %v4930 = vadd.f32 %v479, %v4638
        %v4931 = vadd.f32 %v480, %v4643
        %v4932 = vadd.f32 %v481, %v4646
        %v4933 = vadd.f32 %v482, %v4651
        %v4934 = vadd.f32 %v483, %v4654
        %v4935 = vadd.f32 %v484, %v4659
        %v4936 = vadd.f32 %v485, %v4662
        %v4937 = vadd.f32 %v486, %v4667
        %v4938 = vadd.f32 %v487, %v4670
        %v4939 = vadd.f32 %v488, %v4675
        %v4940 = vadd.f32 %v489, %v4678
        %v4941 = vadd.f32 %v490, %v4683
        %v4942 = vadd.f32 %v491, %v4686
        %v4943 = vadd.f32 %v492, %v4691
        %v4944 = vadd.f32 %v493, %v4694
        %v4945 = vadd.f32 %v494, %v4699
        %v4946 = vadd.f32 %v495, %v4702
        %v4947 = vadd.f32 %v496, %v4707
        %v4948 = vadd.f32 %v497, %v4710
        %v4949 = vadd.f32 %v498, %v4715
        %v4950 = vadd.f32 %v499, %v4718
        %v4951 = vadd.f32 %v500, %v4723
        %v4952 = vadd.f32 %v501, %v4726
        %v4953 = vadd.f32 %v502, %v4731
        %v4954 = vadd.f32 %v503, %v4734
        %v4955 = vadd.f32 %v504, %v4739
        %v4956 = vadd.f32 %v505, %v4742
        %v4957 = vadd.f32 %v506, %v4747
        %v4958 = vadd.f32 %v507, %v4750
        %v4959 = vadd.f32 %v508, %v4755
        %v4960 = vadd.f32 %v509, %v4758
        %v4961 = vadd.f32 %v510, %v4763
        %v4962 = vadd.f32 %v511, %v4766
        %v4963 = vadd.f32 %v512, %v4771
        %v4964 = vadd.f32 %v513, %v4774
        %v4965 = vadd.f32 %v514, %v4779
        %v4966 = vadd.f32 %v515, %v4782
        %v4967 = vadd.f32 %v516, %v4787
        %v4968 = vadd.f32 %v517, %v4790
        %v4969 = vadd.f32 %v518, %v4795
        %v4970 = vadd.f32 %v519, %v4798
        %v4971 = vadd.f32 %v520, %v4803
        %v4972 = vadd.f32 %v521, %v4806
        %v4973 = vadd.f32 %v522, %v4811
        %v4974 = vadd.f32 %v523, %v4814
        %v4975 = vadd.f32 %v524, %v4819
        %v4976 = vadd.f32 %v525, %v4822
        %v4977 = vadd.f32 %v526, %v4827
        %v4978 = vadd.f32 %v527, %v4830
        %v4979 = vadd.f32 %v528, %v4835
        %v4980 = vadd.f32 %v529, %v4838
        %v4981 = vadd.f32 %v530, %v4843
        %v4982 = vadd.f32 %v531, %v4846
        %v4983 = vadd.f32 %v532, %v4851
        %v4984 = vadd.f32 %v533, %v4854
        %vm4985 = vcmask 64512
        %4986 = vst.msk [vmem:[#allocation2] sm:$0xff] %vm4985, %v4857
        %4987 = vst.msk [vmem:[#allocation2 + $0x8] sm:$0xff] %vm4985, %v4858
        %4988 = vst.msk [vmem:[#allocation2 + $0x10] sm:$0xff] %vm4985, %v4859
        %4989 = vst.msk [vmem:[#allocation2 + $0x18] sm:$0xff] %vm4985, %v4860
        %4990 = vst.msk [vmem:[#allocation2 + $0x20] sm:$0xff] %vm4985, %v4861
        %4991 = vst.msk [vmem:[#allocation2 + $0x28] sm:$0xff] %vm4985, %v4862
        %4992 = vst.msk [vmem:[#allocation2 + $0x30] sm:$0xff] %vm4985, %v4863
        %4993 = vst.msk [vmem:[#allocation2 + $0x38] sm:$0xff] %vm4985, %v4864
        %4994 = vst.msk [vmem:[#allocation2 + $0x40] sm:$0xff] %vm4985, %v4865
        %4995 = vst.msk [vmem:[#allocation2 + $0x48] sm:$0xff] %vm4985, %v4866
        %4996 = vst.msk [vmem:[#allocation2 + $0x50] sm:$0xff] %vm4985, %v4867
        %4997 = vst.msk [vmem:[#allocation2 + $0x58] sm:$0xff] %vm4985, %v4868
        %4998 = vst.msk [vmem:[#allocation2 + $0x60] sm:$0xff] %vm4985, %v4869
        %4999 = vst.msk [vmem:[#allocation2 + $0x68] sm:$0xff] %vm4985, %v4870
        %5000 = vst.msk [vmem:[#allocation2 + $0x70] sm:$0xff] %vm4985, %v4871
        %5001 = vst.msk [vmem:[#allocation2 + $0x78] sm:$0xff] %vm4985, %v4872
        %5002 = vst.msk [vmem:[#allocation2 + $0x80] sm:$0xff] %vm4985, %v4873
        %5003 = vst.msk [vmem:[#allocation2 + $0x88] sm:$0xff] %vm4985, %v4874
        %5004 = vst.msk [vmem:[#allocation2 + $0x90] sm:$0xff] %vm4985, %v4875
        %5005 = vst.msk [vmem:[#allocation2 + $0x98] sm:$0xff] %vm4985, %v4876
        %5006 = vst.msk [vmem:[#allocation2 + $0xa0] sm:$0xff] %vm4985, %v4877
        %5007 = vst.msk [vmem:[#allocation2 + $0xa8] sm:$0xff] %vm4985, %v4878
        %5008 = vst.msk [vmem:[#allocation2 + $0xb0] sm:$0xff] %vm4985, %v4879
        %5009 = vst.msk [vmem:[#allocation2 + $0xb8] sm:$0xff] %vm4985, %v4880
        %5010 = vst.msk [vmem:[#allocation2 + $0xc0] sm:$0xff] %vm4985, %v4881
        %5011 = vst.msk [vmem:[#allocation2 + $0xc8] sm:$0xff] %vm4985, %v4882
        %5012 = vst.msk [vmem:[#allocation2 + $0xd0] sm:$0xff] %vm4985, %v4883
        %5013 = vst.msk [vmem:[#allocation2 + $0xd8] sm:$0xff] %vm4985, %v4884
        %5014 = vst.msk [vmem:[#allocation2 + $0xe0] sm:$0xff] %vm4985, %v4885
        %5015 = vst.msk [vmem:[#allocation2 + $0xe8] sm:$0xff] %vm4985, %v4886
        %5016 = vst.msk [vmem:[#allocation2 + $0xf0] sm:$0xff] %vm4985, %v4887
        %5017 = vst.msk [vmem:[#allocation2 + $0xf8] sm:$0xff] %vm4985, %v4888
        %5018 = vst.msk [vmem:[#allocation2 + $0x100] sm:$0xff] %vm4985, %v4889
        %5019 = vst.msk [vmem:[#allocation2 + $0x108] sm:$0xff] %vm4985, %v4890
        %5020 = vst.msk [vmem:[#allocation2 + $0x110] sm:$0xff] %vm4985, %v4891
        %5021 = vst.msk [vmem:[#allocation2 + $0x118] sm:$0xff] %vm4985, %v4892
        %5022 = vst.msk [vmem:[#allocation2 + $0x120] sm:$0xff] %vm4985, %v4893
        %5023 = vst.msk [vmem:[#allocation2 + $0x128] sm:$0xff] %vm4985, %v4894
        %5024 = vst.msk [vmem:[#allocation2 + $0x130] sm:$0xff] %vm4985, %v4895
        %5025 = vst.msk [vmem:[#allocation2 + $0x138] sm:$0xff] %vm4985, %v4896
        %5026 = vst.msk [vmem:[#allocation2 + $0x140] sm:$0xff] %vm4985, %v4897
        %5027 = vst.msk [vmem:[#allocation2 + $0x148] sm:$0xff] %vm4985, %v4898
        %5028 = vst.msk [vmem:[#allocation2 + $0x150] sm:$0xff] %vm4985, %v4899
        %5029 = vst.msk [vmem:[#allocation2 + $0x158] sm:$0xff] %vm4985, %v4900
        %5030 = vst.msk [vmem:[#allocation2 + $0x160] sm:$0xff] %vm4985, %v4901
        %5031 = vst.msk [vmem:[#allocation2 + $0x168] sm:$0xff] %vm4985, %v4902
        %5032 = vst.msk [vmem:[#allocation2 + $0x170] sm:$0xff] %vm4985, %v4903
        %5033 = vst.msk [vmem:[#allocation2 + $0x178] sm:$0xff] %vm4985, %v4904
        %5034 = vst.msk [vmem:[#allocation2 + $0x180] sm:$0xff] %vm4985, %v4905
        %5035 = vst.msk [vmem:[#allocation2 + $0x188] sm:$0xff] %vm4985, %v4906
        %5036 = vst.msk [vmem:[#allocation2 + $0x190] sm:$0xff] %vm4985, %v4907
        %5037 = vst.msk [vmem:[#allocation2 + $0x198] sm:$0xff] %vm4985, %v4908
        %5038 = vst.msk [vmem:[#allocation2 + $0x1a0] sm:$0xff] %vm4985, %v4909
        %5039 = vst.msk [vmem:[#allocation2 + $0x1a8] sm:$0xff] %vm4985, %v4910
        %5040 = vst.msk [vmem:[#allocation2 + $0x1b0] sm:$0xff] %vm4985, %v4911
        %5041 = vst.msk [vmem:[#allocation2 + $0x1b8] sm:$0xff] %vm4985, %v4912
        %5042 = vst.msk [vmem:[#allocation2 + $0x1c0] sm:$0xff] %vm4985, %v4913
        %5043 = vst.msk [vmem:[#allocation2 + $0x1c8] sm:$0xff] %vm4985, %v4914
        %5044 = vst.msk [vmem:[#allocation2 + $0x1d0] sm:$0xff] %vm4985, %v4915
        %5045 = vst.msk [vmem:[#allocation2 + $0x1d8] sm:$0xff] %vm4985, %v4916
        %5046 = vst.msk [vmem:[#allocation2 + $0x1e0] sm:$0xff] %vm4985, %v4917
        %5047 = vst.msk [vmem:[#allocation2 + $0x1e8] sm:$0xff] %vm4985, %v4918
        %5048 = vst.msk [vmem:[#allocation2 + $0x1f0] sm:$0xff] %vm4985, %v4919
        %5049 = vst.msk [vmem:[#allocation2 + $0x1f8] sm:$0xff] %vm4985, %v4920
        %5050 = vst.msk [vmem:[#allocation2 + $0x200] sm:$0xff] %vm4985, %v4921
        %5051 = vst.msk [vmem:[#allocation2 + $0x208] sm:$0xff] %vm4985, %v4922
        %5052 = vst.msk [vmem:[#allocation2 + $0x210] sm:$0xff] %vm4985, %v4923
        %5053 = vst.msk [vmem:[#allocation2 + $0x218] sm:$0xff] %vm4985, %v4924
        %5054 = vst.msk [vmem:[#allocation2 + $0x220] sm:$0xff] %vm4985, %v4925
        %5055 = vst.msk [vmem:[#allocation2 + $0x228] sm:$0xff] %vm4985, %v4926
        %5056 = vst.msk [vmem:[#allocation2 + $0x230] sm:$0xff] %vm4985, %v4927
        %5057 = vst.msk [vmem:[#allocation2 + $0x238] sm:$0xff] %vm4985, %v4928
        %5058 = vst.msk [vmem:[#allocation2 + $0x240] sm:$0xff] %vm4985, %v4929
        %5059 = vst.msk [vmem:[#allocation2 + $0x248] sm:$0xff] %vm4985, %v4930
        %5060 = vst.msk [vmem:[#allocation2 + $0x250] sm:$0xff] %vm4985, %v4931
        %5061 = vst.msk [vmem:[#allocation2 + $0x258] sm:$0xff] %vm4985, %v4932
        %5062 = vst.msk [vmem:[#allocation2 + $0x260] sm:$0xff] %vm4985, %v4933
        %5063 = vst.msk [vmem:[#allocation2 + $0x268] sm:$0xff] %vm4985, %v4934
        %5064 = vst.msk [vmem:[#allocation2 + $0x270] sm:$0xff] %vm4985, %v4935
        %5065 = vst.msk [vmem:[#allocation2 + $0x278] sm:$0xff] %vm4985, %v4936
        %5066 = vst.msk [vmem:[#allocation2 + $0x280] sm:$0xff] %vm4985, %v4937
        %5067 = vst.msk [vmem:[#allocation2 + $0x288] sm:$0xff] %vm4985, %v4938
        %5068 = vst.msk [vmem:[#allocation2 + $0x290] sm:$0xff] %vm4985, %v4939
        %5069 = vst.msk [vmem:[#allocation2 + $0x298] sm:$0xff] %vm4985, %v4940
        %5070 = vst.msk [vmem:[#allocation2 + $0x2a0] sm:$0xff] %vm4985, %v4941
        %5071 = vst.msk [vmem:[#allocation2 + $0x2a8] sm:$0xff] %vm4985, %v4942
        %5072 = vst.msk [vmem:[#allocation2 + $0x2b0] sm:$0xff] %vm4985, %v4943
        %5073 = vst.msk [vmem:[#allocation2 + $0x2b8] sm:$0xff] %vm4985, %v4944
        %5074 = vst.msk [vmem:[#allocation2 + $0x2c0] sm:$0xff] %vm4985, %v4945
        %5075 = vst.msk [vmem:[#allocation2 + $0x2c8] sm:$0xff] %vm4985, %v4946
        %5076 = vst.msk [vmem:[#allocation2 + $0x2d0] sm:$0xff] %vm4985, %v4947
        %5077 = vst.msk [vmem:[#allocation2 + $0x2d8] sm:$0xff] %vm4985, %v4948
        %5078 = vst.msk [vmem:[#allocation2 + $0x2e0] sm:$0xff] %vm4985, %v4949
        %5079 = vst.msk [vmem:[#allocation2 + $0x2e8] sm:$0xff] %vm4985, %v4950
        %5080 = vst.msk [vmem:[#allocation2 + $0x2f0] sm:$0xff] %vm4985, %v4951
        %5081 = vst.msk [vmem:[#allocation2 + $0x2f8] sm:$0xff] %vm4985, %v4952
        %5082 = vst.msk [vmem:[#allocation2 + $0x300] sm:$0xff] %vm4985, %v4953
        %5083 = vst.msk [vmem:[#allocation2 + $0x308] sm:$0xff] %vm4985, %v4954
        %5084 = vst.msk [vmem:[#allocation2 + $0x310] sm:$0xff] %vm4985, %v4955
        %5085 = vst.msk [vmem:[#allocation2 + $0x318] sm:$0xff] %vm4985, %v4956
        %5086 = vst.msk [vmem:[#allocation2 + $0x320] sm:$0xff] %vm4985, %v4957
        %5087 = vst.msk [vmem:[#allocation2 + $0x328] sm:$0xff] %vm4985, %v4958
        %5088 = vst.msk [vmem:[#allocation2 + $0x330] sm:$0xff] %vm4985, %v4959
        %5089 = vst.msk [vmem:[#allocation2 + $0x338] sm:$0xff] %vm4985, %v4960
        %5090 = vst.msk [vmem:[#allocation2 + $0x340] sm:$0xff] %vm4985, %v4961
        %5091 = vst.msk [vmem:[#allocation2 + $0x348] sm:$0xff] %vm4985, %v4962
        %5092 = vst.msk [vmem:[#allocation2 + $0x350] sm:$0xff] %vm4985, %v4963
        %5093 = vst.msk [vmem:[#allocation2 + $0x358] sm:$0xff] %vm4985, %v4964
        %5094 = vst.msk [vmem:[#allocation2 + $0x360] sm:$0xff] %vm4985, %v4965
        %5095 = vst.msk [vmem:[#allocation2 + $0x368] sm:$0xff] %vm4985, %v4966
        %5096 = vst.msk [vmem:[#allocation2 + $0x370] sm:$0xff] %vm4985, %v4967
        %5097 = vst.msk [vmem:[#allocation2 + $0x378] sm:$0xff] %vm4985, %v4968
        %5098 = vst.msk [vmem:[#allocation2 + $0x380] sm:$0xff] %vm4985, %v4969
        %5099 = vst.msk [vmem:[#allocation2 + $0x388] sm:$0xff] %vm4985, %v4970
        %5100 = vst.msk [vmem:[#allocation2 + $0x390] sm:$0xff] %vm4985, %v4971
        %5101 = vst.msk [vmem:[#allocation2 + $0x398] sm:$0xff] %vm4985, %v4972
        %5102 = vst.msk [vmem:[#allocation2 + $0x3a0] sm:$0xff] %vm4985, %v4973
        %5103 = vst.msk [vmem:[#allocation2 + $0x3a8] sm:$0xff] %vm4985, %v4974
        %5104 = vst.msk [vmem:[#allocation2 + $0x3b0] sm:$0xff] %vm4985, %v4975
        %5105 = vst.msk [vmem:[#allocation2 + $0x3b8] sm:$0xff] %vm4985, %v4976
        %5106 = vst.msk [vmem:[#allocation2 + $0x3c0] sm:$0xff] %vm4985, %v4977
        %5107 = vst.msk [vmem:[#allocation2 + $0x3c8] sm:$0xff] %vm4985, %v4978
        %5108 = vst.msk [vmem:[#allocation2 + $0x3d0] sm:$0xff] %vm4985, %v4979
        %5109 = vst.msk [vmem:[#allocation2 + $0x3d8] sm:$0xff] %vm4985, %v4980
        %5110 = vst.msk [vmem:[#allocation2 + $0x3e0] sm:$0xff] %vm4985, %v4981
        %5111 = vst.msk [vmem:[#allocation2 + $0x3e8] sm:$0xff] %vm4985, %v4982
        %5112 = vst.msk [vmem:[#allocation2 + $0x3f0] sm:$0xff] %vm4985, %v4983
        %5113 = vst.msk [vmem:[#allocation2 + $0x3f8] sm:$0xff] %vm4985, %v4984
        // Predicated region
        $region49: #{conv3d_bn.1} parent=31 // pred_check
          %p5114 = pneg %p273
        $region50: #{conv3d_bn.1} parent=31 // pred_check_branch
          %5116 = sbr.rel (%p5114) target = $region52
        $region51: #{conv3d_bn.1} parent=31 // pred_region
          %v5117 = vld [vmem:[#allocation2] sm:$0xff]
          %v5118 = vld [vmem:[#allocation2 + $0x8] sm:$0xff]
          %v5119 = vld [vmem:[#allocation2 + $0x10] sm:$0xff]
          %v5120 = vld [vmem:[#allocation2 + $0x18] sm:$0xff]
          %v5121 = vld [vmem:[#allocation2 + $0x20] sm:$0xff]
          %v5122 = vld [vmem:[#allocation2 + $0x28] sm:$0xff]
          %v5123 = vld [vmem:[#allocation2 + $0x30] sm:$0xff]
          %v5124 = vld [vmem:[#allocation2 + $0x38] sm:$0xff]
          %v5125 = vld [vmem:[#allocation2 + $0x40] sm:$0xff]
          %v5126 = vld [vmem:[#allocation2 + $0x48] sm:$0xff]
          %v5127 = vld [vmem:[#allocation2 + $0x50] sm:$0xff]
          %v5128 = vld [vmem:[#allocation2 + $0x58] sm:$0xff]
          %v5129 = vld [vmem:[#allocation2 + $0x60] sm:$0xff]
          %v5130 = vld [vmem:[#allocation2 + $0x68] sm:$0xff]
          %v5131 = vld [vmem:[#allocation2 + $0x70] sm:$0xff]
          %v5132 = vld [vmem:[#allocation2 + $0x78] sm:$0xff]
          %v5133 = vld [vmem:[#allocation2 + $0x80] sm:$0xff]
          %v5134 = vld [vmem:[#allocation2 + $0x88] sm:$0xff]
          %v5135 = vld [vmem:[#allocation2 + $0x90] sm:$0xff]
          %v5136 = vld [vmem:[#allocation2 + $0x98] sm:$0xff]
          %v5137 = vld [vmem:[#allocation2 + $0xa0] sm:$0xff]
          %v5138 = vld [vmem:[#allocation2 + $0xa8] sm:$0xff]
          %v5139 = vld [vmem:[#allocation2 + $0xb0] sm:$0xff]
          %v5140 = vld [vmem:[#allocation2 + $0xb8] sm:$0xff]
          %v5141 = vld [vmem:[#allocation2 + $0xc0] sm:$0xff]
          %v5142 = vld [vmem:[#allocation2 + $0xc8] sm:$0xff]
          %v5143 = vld [vmem:[#allocation2 + $0xd0] sm:$0xff]
          %v5144 = vld [vmem:[#allocation2 + $0xd8] sm:$0xff]
          %v5145 = vld [vmem:[#allocation2 + $0xe0] sm:$0xff]
          %v5146 = vld [vmem:[#allocation2 + $0xe8] sm:$0xff]
          %v5147 = vld [vmem:[#allocation2 + $0xf0] sm:$0xff]
          %v5148 = vld [vmem:[#allocation2 + $0xf8] sm:$0xff]
          %v5149 = vld [vmem:[#allocation2 + $0x100] sm:$0xff]
          %v5150 = vld [vmem:[#allocation2 + $0x108] sm:$0xff]
          %v5151 = vld [vmem:[#allocation2 + $0x110] sm:$0xff]
          %v5152 = vld [vmem:[#allocation2 + $0x118] sm:$0xff]
          %v5153 = vld [vmem:[#allocation2 + $0x120] sm:$0xff]
          %v5154 = vld [vmem:[#allocation2 + $0x128] sm:$0xff]
          %v5155 = vld [vmem:[#allocation2 + $0x130] sm:$0xff]
          %v5156 = vld [vmem:[#allocation2 + $0x138] sm:$0xff]
          %v5157 = vld [vmem:[#allocation2 + $0x140] sm:$0xff]
          %v5158 = vld [vmem:[#allocation2 + $0x148] sm:$0xff]
          %v5159 = vld [vmem:[#allocation2 + $0x150] sm:$0xff]
          %v5160 = vld [vmem:[#allocation2 + $0x158] sm:$0xff]
          %v5161 = vld [vmem:[#allocation2 + $0x160] sm:$0xff]
          %v5162 = vld [vmem:[#allocation2 + $0x168] sm:$0xff]
          %v5163 = vld [vmem:[#allocation2 + $0x170] sm:$0xff]
          %v5164 = vld [vmem:[#allocation2 + $0x178] sm:$0xff]
          %v5165 = vld [vmem:[#allocation2 + $0x180] sm:$0xff]
          %v5166 = vld [vmem:[#allocation2 + $0x188] sm:$0xff]
          %v5167 = vld [vmem:[#allocation2 + $0x190] sm:$0xff]
          %v5168 = vld [vmem:[#allocation2 + $0x198] sm:$0xff]
          %v5169 = vld [vmem:[#allocation2 + $0x1a0] sm:$0xff]
          %v5170 = vld [vmem:[#allocation2 + $0x1a8] sm:$0xff]
          %v5171 = vld [vmem:[#allocation2 + $0x1b0] sm:$0xff]
          %v5172 = vld [vmem:[#allocation2 + $0x1b8] sm:$0xff]
          %v5173 = vld [vmem:[#allocation2 + $0x1c0] sm:$0xff]
          %v5174 = vld [vmem:[#allocation2 + $0x1c8] sm:$0xff]
          %v5175 = vld [vmem:[#allocation2 + $0x1d0] sm:$0xff]
          %v5176 = vld [vmem:[#allocation2 + $0x1d8] sm:$0xff]
          %v5177 = vld [vmem:[#allocation2 + $0x1e0] sm:$0xff]
          %v5178 = vld [vmem:[#allocation2 + $0x1e8] sm:$0xff]
          %v5179 = vld [vmem:[#allocation2 + $0x1f0] sm:$0xff]
          %v5180 = vld [vmem:[#allocation2 + $0x1f8] sm:$0xff]
          %v5181 = vld [vmem:[#allocation2 + $0x200] sm:$0xff]
          %v5182 = vld [vmem:[#allocation2 + $0x208] sm:$0xff]
          %v5183 = vld [vmem:[#allocation2 + $0x210] sm:$0xff]
          %v5184 = vld [vmem:[#allocation2 + $0x218] sm:$0xff]
          %v5185 = vld [vmem:[#allocation2 + $0x220] sm:$0xff]
          %v5186 = vld [vmem:[#allocation2 + $0x228] sm:$0xff]
          %v5187 = vld [vmem:[#allocation2 + $0x230] sm:$0xff]
          %v5188 = vld [vmem:[#allocation2 + $0x238] sm:$0xff]
          %v5189 = vld [vmem:[#allocation2 + $0x240] sm:$0xff]
          %v5190 = vld [vmem:[#allocation2 + $0x248] sm:$0xff]
          %v5191 = vld [vmem:[#allocation2 + $0x250] sm:$0xff]
          %v5192 = vld [vmem:[#allocation2 + $0x258] sm:$0xff]
          %v5193 = vld [vmem:[#allocation2 + $0x260] sm:$0xff]
          %v5194 = vld [vmem:[#allocation2 + $0x268] sm:$0xff]
          %v5195 = vld [vmem:[#allocation2 + $0x270] sm:$0xff]
          %v5196 = vld [vmem:[#allocation2 + $0x278] sm:$0xff]
          %v5197 = vld [vmem:[#allocation2 + $0x280] sm:$0xff]
          %v5198 = vld [vmem:[#allocation2 + $0x288] sm:$0xff]
          %v5199 = vld [vmem:[#allocation2 + $0x290] sm:$0xff]
          %v5200 = vld [vmem:[#allocation2 + $0x298] sm:$0xff]
          %v5201 = vld [vmem:[#allocation2 + $0x2a0] sm:$0xff]
          %v5202 = vld [vmem:[#allocation2 + $0x2a8] sm:$0xff]
          %v5203 = vld [vmem:[#allocation2 + $0x2b0] sm:$0xff]
          %v5204 = vld [vmem:[#allocation2 + $0x2b8] sm:$0xff]
          %v5205 = vld [vmem:[#allocation2 + $0x2c0] sm:$0xff]
          %v5206 = vld [vmem:[#allocation2 + $0x2c8] sm:$0xff]
          %v5207 = vld [vmem:[#allocation2 + $0x2d0] sm:$0xff]
          %v5208 = vld [vmem:[#allocation2 + $0x2d8] sm:$0xff]
          %v5209 = vld [vmem:[#allocation2 + $0x2e0] sm:$0xff]
          %v5210 = vld [vmem:[#allocation2 + $0x2e8] sm:$0xff]
          %v5211 = vld [vmem:[#allocation2 + $0x2f0] sm:$0xff]
          %v5212 = vld [vmem:[#allocation2 + $0x2f8] sm:$0xff]
          %v5213 = vld [vmem:[#allocation2 + $0x300] sm:$0xff]
          %v5214 = vld [vmem:[#allocation2 + $0x308] sm:$0xff]
          %v5215 = vld [vmem:[#allocation2 + $0x310] sm:$0xff]
          %v5216 = vld [vmem:[#allocation2 + $0x318] sm:$0xff]
          %v5217 = vld [vmem:[#allocation2 + $0x320] sm:$0xff]
          %v5218 = vld [vmem:[#allocation2 + $0x328] sm:$0xff]
          %v5219 = vld [vmem:[#allocation2 + $0x330] sm:$0xff]
          %v5220 = vld [vmem:[#allocation2 + $0x338] sm:$0xff]
          %v5221 = vld [vmem:[#allocation2 + $0x340] sm:$0xff]
          %v5222 = vld [vmem:[#allocation2 + $0x348] sm:$0xff]
          %v5223 = vld [vmem:[#allocation2 + $0x350] sm:$0xff]
          %v5224 = vld [vmem:[#allocation2 + $0x358] sm:$0xff]
          %v5225 = vld [vmem:[#allocation2 + $0x360] sm:$0xff]
          %v5226 = vld [vmem:[#allocation2 + $0x368] sm:$0xff]
          %v5227 = vld [vmem:[#allocation2 + $0x370] sm:$0xff]
          %v5228 = vld [vmem:[#allocation2 + $0x378] sm:$0xff]
          %v5229 = vld [vmem:[#allocation2 + $0x380] sm:$0xff]
          %v5230 = vld [vmem:[#allocation2 + $0x388] sm:$0xff]
          %v5231 = vld [vmem:[#allocation2 + $0x390] sm:$0xff]
          %v5232 = vld [vmem:[#allocation2 + $0x398] sm:$0xff]
          %v5233 = vld [vmem:[#allocation2 + $0x3a0] sm:$0xff]
          %v5234 = vld [vmem:[#allocation2 + $0x3a8] sm:$0xff]
          %v5235 = vld [vmem:[#allocation2 + $0x3b0] sm:$0xff]
          %v5236 = vld [vmem:[#allocation2 + $0x3b8] sm:$0xff]
          %v5237 = vld [vmem:[#allocation2 + $0x3c0] sm:$0xff]
          %v5238 = vld [vmem:[#allocation2 + $0x3c8] sm:$0xff]
          %v5239 = vld [vmem:[#allocation2 + $0x3d0] sm:$0xff]
          %v5240 = vld [vmem:[#allocation2 + $0x3d8] sm:$0xff]
          %v5241 = vld [vmem:[#allocation2 + $0x3e0] sm:$0xff]
          %v5242 = vld [vmem:[#allocation2 + $0x3e8] sm:$0xff]
          %v5243 = vld [vmem:[#allocation2 + $0x3f0] sm:$0xff]
          %v5244 = vld [vmem:[#allocation2 + $0x3f8] sm:$0xff]
          %v5245 = vld [vmem:[#allocation7] sm:$0x1]
          %v5247 = vlaneseq
          %v5248 = vshrl.u32 %v5247, 7
          %v5249 = vsub.s32 0, %v5248
          %v5250 = vrot.slane %v5245, %v5249
          %v5252 = vadd.f32 %v5117, %v5250
          %v5253 = vadd.f32 %v5118, %v5250
          %v5254 = vadd.f32 %v5119, %v5250
          %v5255 = vadd.f32 %v5120, %v5250
          %v5256 = vadd.f32 %v5121, %v5250
          %v5257 = vadd.f32 %v5122, %v5250
          %v5258 = vadd.f32 %v5123, %v5250
          %v5259 = vadd.f32 %v5124, %v5250
          %v5260 = vadd.f32 %v5125, %v5250
          %v5261 = vadd.f32 %v5126, %v5250
          %v5262 = vadd.f32 %v5127, %v5250
          %v5263 = vadd.f32 %v5128, %v5250
          %v5264 = vadd.f32 %v5129, %v5250
          %v5265 = vadd.f32 %v5130, %v5250
          %v5266 = vadd.f32 %v5131, %v5250
          %v5267 = vadd.f32 %v5132, %v5250
          %v5268 = vadd.f32 %v5133, %v5250
          %v5269 = vadd.f32 %v5134, %v5250
          %v5270 = vadd.f32 %v5135, %v5250
          %v5271 = vadd.f32 %v5136, %v5250
          %v5272 = vadd.f32 %v5137, %v5250
          %v5273 = vadd.f32 %v5138, %v5250
          %v5274 = vadd.f32 %v5139, %v5250
          %v5275 = vadd.f32 %v5140, %v5250
          %v5276 = vadd.f32 %v5141, %v5250
          %v5277 = vadd.f32 %v5142, %v5250
          %v5278 = vadd.f32 %v5143, %v5250
          %v5279 = vadd.f32 %v5144, %v5250
          %v5280 = vadd.f32 %v5145, %v5250
          %v5281 = vadd.f32 %v5146, %v5250
          %v5282 = vadd.f32 %v5147, %v5250
          %v5283 = vadd.f32 %v5148, %v5250
          %v5284 = vadd.f32 %v5149, %v5250
          %v5285 = vadd.f32 %v5150, %v5250
          %v5286 = vadd.f32 %v5151, %v5250
          %v5287 = vadd.f32 %v5152, %v5250
          %v5288 = vadd.f32 %v5153, %v5250
          %v5289 = vadd.f32 %v5154, %v5250
          %v5290 = vadd.f32 %v5155, %v5250
          %v5291 = vadd.f32 %v5156, %v5250
          %v5292 = vadd.f32 %v5157, %v5250
          %v5293 = vadd.f32 %v5158, %v5250
          %v5294 = vadd.f32 %v5159, %v5250
          %v5295 = vadd.f32 %v5160, %v5250
          %v5296 = vadd.f32 %v5161, %v5250
          %v5297 = vadd.f32 %v5162, %v5250
          %v5298 = vadd.f32 %v5163, %v5250
          %v5299 = vadd.f32 %v5164, %v5250
          %v5300 = vadd.f32 %v5165, %v5250
          %v5301 = vadd.f32 %v5166, %v5250
          %v5302 = vadd.f32 %v5167, %v5250
          %v5303 = vadd.f32 %v5168, %v5250
          %v5304 = vadd.f32 %v5169, %v5250
          %v5305 = vadd.f32 %v5170, %v5250
          %v5306 = vadd.f32 %v5171, %v5250
          %v5307 = vadd.f32 %v5172, %v5250
          %v5308 = vadd.f32 %v5173, %v5250
          %v5309 = vadd.f32 %v5174, %v5250
          %v5310 = vadd.f32 %v5175, %v5250
          %v5311 = vadd.f32 %v5176, %v5250
          %v5312 = vadd.f32 %v5177, %v5250
          %v5313 = vadd.f32 %v5178, %v5250
          %v5314 = vadd.f32 %v5179, %v5250
          %v5315 = vadd.f32 %v5180, %v5250
          %v5316 = vadd.f32 %v5181, %v5250
          %v5317 = vadd.f32 %v5182, %v5250
          %v5318 = vadd.f32 %v5183, %v5250
          %v5319 = vadd.f32 %v5184, %v5250
          %v5320 = vadd.f32 %v5185, %v5250
          %v5321 = vadd.f32 %v5186, %v5250
          %v5322 = vadd.f32 %v5187, %v5250
          %v5323 = vadd.f32 %v5188, %v5250
          %v5324 = vadd.f32 %v5189, %v5250
          %v5325 = vadd.f32 %v5190, %v5250
          %v5326 = vadd.f32 %v5191, %v5250
          %v5327 = vadd.f32 %v5192, %v5250
          %v5328 = vadd.f32 %v5193, %v5250
          %v5329 = vadd.f32 %v5194, %v5250
          %v5330 = vadd.f32 %v5195, %v5250
          %v5331 = vadd.f32 %v5196, %v5250
          %v5332 = vadd.f32 %v5197, %v5250
          %v5333 = vadd.f32 %v5198, %v5250
          %v5334 = vadd.f32 %v5199, %v5250
          %v5335 = vadd.f32 %v5200, %v5250
          %v5336 = vadd.f32 %v5201, %v5250
          %v5337 = vadd.f32 %v5202, %v5250
          %v5338 = vadd.f32 %v5203, %v5250
          %v5339 = vadd.f32 %v5204, %v5250
          %v5340 = vadd.f32 %v5205, %v5250
          %v5341 = vadd.f32 %v5206, %v5250
          %v5342 = vadd.f32 %v5207, %v5250
          %v5343 = vadd.f32 %v5208, %v5250
          %v5344 = vadd.f32 %v5209, %v5250
          %v5345 = vadd.f32 %v5210, %v5250
          %v5346 = vadd.f32 %v5211, %v5250
          %v5347 = vadd.f32 %v5212, %v5250
          %v5348 = vadd.f32 %v5213, %v5250
          %v5349 = vadd.f32 %v5214, %v5250
          %v5350 = vadd.f32 %v5215, %v5250
          %v5351 = vadd.f32 %v5216, %v5250
          %v5352 = vadd.f32 %v5217, %v5250
          %v5353 = vadd.f32 %v5218, %v5250
          %v5354 = vadd.f32 %v5219, %v5250
          %v5355 = vadd.f32 %v5220, %v5250
          %v5356 = vadd.f32 %v5221, %v5250
          %v5357 = vadd.f32 %v5222, %v5250
          %v5358 = vadd.f32 %v5223, %v5250
          %v5359 = vadd.f32 %v5224, %v5250
          %v5360 = vadd.f32 %v5225, %v5250
          %v5361 = vadd.f32 %v5226, %v5250
          %v5362 = vadd.f32 %v5227, %v5250
          %v5363 = vadd.f32 %v5228, %v5250
          %v5364 = vadd.f32 %v5229, %v5250
          %v5365 = vadd.f32 %v5230, %v5250
          %v5366 = vadd.f32 %v5231, %v5250
          %v5367 = vadd.f32 %v5232, %v5250
          %v5368 = vadd.f32 %v5233, %v5250
          %v5369 = vadd.f32 %v5234, %v5250
          %v5370 = vadd.f32 %v5235, %v5250
          %v5371 = vadd.f32 %v5236, %v5250
          %v5372 = vadd.f32 %v5237, %v5250
          %v5373 = vadd.f32 %v5238, %v5250
          %v5374 = vadd.f32 %v5239, %v5250
          %v5375 = vadd.f32 %v5240, %v5250
          %v5376 = vadd.f32 %v5241, %v5250
          %v5377 = vadd.f32 %v5242, %v5250
          %v5378 = vadd.f32 %v5243, %v5250
          %v5379 = vadd.f32 %v5244, %v5250
          %v5380 = vmax.f32 %v5252, 0.0
          %v5381 = vmax.f32 %v5253, 0.0
          %v5382 = vmax.f32 %v5254, 0.0
          %v5383 = vmax.f32 %v5255, 0.0
          %v5384 = vmax.f32 %v5256, 0.0
          %v5385 = vmax.f32 %v5257, 0.0
          %v5386 = vmax.f32 %v5258, 0.0
          %v5387 = vmax.f32 %v5259, 0.0
          %v5388 = vmax.f32 %v5260, 0.0
          %v5389 = vmax.f32 %v5261, 0.0
          %v5390 = vmax.f32 %v5262, 0.0
          %v5391 = vmax.f32 %v5263, 0.0
          %v5392 = vmax.f32 %v5264, 0.0
          %v5393 = vmax.f32 %v5265, 0.0
          %v5394 = vmax.f32 %v5266, 0.0
          %v5395 = vmax.f32 %v5267, 0.0
          %v5396 = vmax.f32 %v5268, 0.0
          %v5397 = vmax.f32 %v5269, 0.0
          %v5398 = vmax.f32 %v5270, 0.0
          %v5399 = vmax.f32 %v5271, 0.0
          %v5400 = vmax.f32 %v5272, 0.0
          %v5401 = vmax.f32 %v5273, 0.0
          %v5402 = vmax.f32 %v5274, 0.0
          %v5403 = vmax.f32 %v5275, 0.0
          %v5404 = vmax.f32 %v5276, 0.0
          %v5405 = vmax.f32 %v5277, 0.0
          %v5406 = vmax.f32 %v5278, 0.0
          %v5407 = vmax.f32 %v5279, 0.0
          %v5408 = vmax.f32 %v5280, 0.0
          %v5409 = vmax.f32 %v5281, 0.0
          %v5410 = vmax.f32 %v5282, 0.0
          %v5411 = vmax.f32 %v5283, 0.0
          %v5412 = vmax.f32 %v5284, 0.0
          %v5413 = vmax.f32 %v5285, 0.0
          %v5414 = vmax.f32 %v5286, 0.0
          %v5415 = vmax.f32 %v5287, 0.0
          %v5416 = vmax.f32 %v5288, 0.0
          %v5417 = vmax.f32 %v5289, 0.0
          %v5418 = vmax.f32 %v5290, 0.0
          %v5419 = vmax.f32 %v5291, 0.0
          %v5420 = vmax.f32 %v5292, 0.0
          %v5421 = vmax.f32 %v5293, 0.0
          %v5422 = vmax.f32 %v5294, 0.0
          %v5423 = vmax.f32 %v5295, 0.0
          %v5424 = vmax.f32 %v5296, 0.0
          %v5425 = vmax.f32 %v5297, 0.0
          %v5426 = vmax.f32 %v5298, 0.0
          %v5427 = vmax.f32 %v5299, 0.0
          %v5428 = vmax.f32 %v5300, 0.0
          %v5429 = vmax.f32 %v5301, 0.0
          %v5430 = vmax.f32 %v5302, 0.0
          %v5431 = vmax.f32 %v5303, 0.0
          %v5432 = vmax.f32 %v5304, 0.0
          %v5433 = vmax.f32 %v5305, 0.0
          %v5434 = vmax.f32 %v5306, 0.0
          %v5435 = vmax.f32 %v5307, 0.0
          %v5436 = vmax.f32 %v5308, 0.0
          %v5437 = vmax.f32 %v5309, 0.0
          %v5438 = vmax.f32 %v5310, 0.0
          %v5439 = vmax.f32 %v5311, 0.0
          %v5440 = vmax.f32 %v5312, 0.0
          %v5441 = vmax.f32 %v5313, 0.0
          %v5442 = vmax.f32 %v5314, 0.0
          %v5443 = vmax.f32 %v5315, 0.0
          %v5444 = vmax.f32 %v5316, 0.0
          %v5445 = vmax.f32 %v5317, 0.0
          %v5446 = vmax.f32 %v5318, 0.0
          %v5447 = vmax.f32 %v5319, 0.0
          %v5448 = vmax.f32 %v5320, 0.0
          %v5449 = vmax.f32 %v5321, 0.0
          %v5450 = vmax.f32 %v5322, 0.0
          %v5451 = vmax.f32 %v5323, 0.0
          %v5452 = vmax.f32 %v5324, 0.0
          %v5453 = vmax.f32 %v5325, 0.0
          %v5454 = vmax.f32 %v5326, 0.0
          %v5455 = vmax.f32 %v5327, 0.0
          %v5456 = vmax.f32 %v5328, 0.0
          %v5457 = vmax.f32 %v5329, 0.0
          %v5458 = vmax.f32 %v5330, 0.0
          %v5459 = vmax.f32 %v5331, 0.0
          %v5460 = vmax.f32 %v5332, 0.0
          %v5461 = vmax.f32 %v5333, 0.0
          %v5462 = vmax.f32 %v5334, 0.0
          %v5463 = vmax.f32 %v5335, 0.0
          %v5464 = vmax.f32 %v5336, 0.0
          %v5465 = vmax.f32 %v5337, 0.0
          %v5466 = vmax.f32 %v5338, 0.0
          %v5467 = vmax.f32 %v5339, 0.0
          %v5468 = vmax.f32 %v5340, 0.0
          %v5469 = vmax.f32 %v5341, 0.0
          %v5470 = vmax.f32 %v5342, 0.0
          %v5471 = vmax.f32 %v5343, 0.0
          %v5472 = vmax.f32 %v5344, 0.0
          %v5473 = vmax.f32 %v5345, 0.0
          %v5474 = vmax.f32 %v5346, 0.0
          %v5475 = vmax.f32 %v5347, 0.0
          %v5476 = vmax.f32 %v5348, 0.0
          %v5477 = vmax.f32 %v5349, 0.0
          %v5478 = vmax.f32 %v5350, 0.0
          %v5479 = vmax.f32 %v5351, 0.0
          %v5480 = vmax.f32 %v5352, 0.0
          %v5481 = vmax.f32 %v5353, 0.0
          %v5482 = vmax.f32 %v5354, 0.0
          %v5483 = vmax.f32 %v5355, 0.0
          %v5484 = vmax.f32 %v5356, 0.0
          %v5485 = vmax.f32 %v5357, 0.0
          %v5486 = vmax.f32 %v5358, 0.0
          %v5487 = vmax.f32 %v5359, 0.0
          %v5488 = vmax.f32 %v5360, 0.0
          %v5489 = vmax.f32 %v5361, 0.0
          %v5490 = vmax.f32 %v5362, 0.0
          %v5491 = vmax.f32 %v5363, 0.0
          %v5492 = vmax.f32 %v5364, 0.0
          %v5493 = vmax.f32 %v5365, 0.0
          %v5494 = vmax.f32 %v5366, 0.0
          %v5495 = vmax.f32 %v5367, 0.0
          %v5496 = vmax.f32 %v5368, 0.0
          %v5497 = vmax.f32 %v5369, 0.0
          %v5498 = vmax.f32 %v5370, 0.0
          %v5499 = vmax.f32 %v5371, 0.0
          %v5500 = vmax.f32 %v5372, 0.0
          %v5501 = vmax.f32 %v5373, 0.0
          %v5502 = vmax.f32 %v5374, 0.0
          %v5503 = vmax.f32 %v5375, 0.0
          %v5504 = vmax.f32 %v5376, 0.0
          %v5505 = vmax.f32 %v5377, 0.0
          %v5506 = vmax.f32 %v5378, 0.0
          %v5507 = vmax.f32 %v5379, 0.0
          %v5508 = vpack.c.bf16 %v5381, %v5380
          %v5509 = vpack.c.bf16 %v5383, %v5382
          %v5510 = vpack.c.bf16 %v5385, %v5384
          %v5511 = vpack.c.bf16 %v5387, %v5386
          %v5512 = vpack.c.bf16 %v5389, %v5388
          %v5513 = vpack.c.bf16 %v5391, %v5390
          %v5514 = vpack.c.bf16 %v5393, %v5392
          %v5515 = vpack.c.bf16 %v5395, %v5394
          %v5516 = vpack.c.bf16 %v5397, %v5396
          %v5517 = vpack.c.bf16 %v5399, %v5398
          %v5518 = vpack.c.bf16 %v5401, %v5400
          %v5519 = vpack.c.bf16 %v5403, %v5402
          %v5520 = vpack.c.bf16 %v5405, %v5404
          %v5521 = vpack.c.bf16 %v5407, %v5406
          %v5522 = vpack.c.bf16 %v5409, %v5408
          %v5523 = vpack.c.bf16 %v5411, %v5410
          %v5524 = vpack.c.bf16 %v5413, %v5412
          %v5525 = vpack.c.bf16 %v5415, %v5414
          %v5526 = vpack.c.bf16 %v5417, %v5416
          %v5527 = vpack.c.bf16 %v5419, %v5418
          %v5528 = vpack.c.bf16 %v5421, %v5420
          %v5529 = vpack.c.bf16 %v5423, %v5422
          %v5530 = vpack.c.bf16 %v5425, %v5424
          %v5531 = vpack.c.bf16 %v5427, %v5426
          %v5532 = vpack.c.bf16 %v5429, %v5428
          %v5533 = vpack.c.bf16 %v5431, %v5430
          %v5534 = vpack.c.bf16 %v5433, %v5432
          %v5535 = vpack.c.bf16 %v5435, %v5434
          %v5536 = vpack.c.bf16 %v5437, %v5436
          %v5537 = vpack.c.bf16 %v5439, %v5438
          %v5538 = vpack.c.bf16 %v5441, %v5440
          %v5539 = vpack.c.bf16 %v5443, %v5442
          %v5540 = vpack.c.bf16 %v5445, %v5444
          %v5541 = vpack.c.bf16 %v5447, %v5446
          %v5542 = vpack.c.bf16 %v5449, %v5448
          %v5543 = vpack.c.bf16 %v5451, %v5450
          %v5544 = vpack.c.bf16 %v5453, %v5452
          %v5545 = vpack.c.bf16 %v5455, %v5454
          %v5546 = vpack.c.bf16 %v5457, %v5456
          %v5547 = vpack.c.bf16 %v5459, %v5458
          %v5548 = vpack.c.bf16 %v5461, %v5460
          %v5549 = vpack.c.bf16 %v5463, %v5462
          %v5550 = vpack.c.bf16 %v5465, %v5464
          %v5551 = vpack.c.bf16 %v5467, %v5466
          %v5552 = vpack.c.bf16 %v5469, %v5468
          %v5553 = vpack.c.bf16 %v5471, %v5470
          %v5554 = vpack.c.bf16 %v5473, %v5472
          %v5555 = vpack.c.bf16 %v5475, %v5474
          %v5556 = vpack.c.bf16 %v5477, %v5476
          %v5557 = vpack.c.bf16 %v5479, %v5478
          %v5558 = vpack.c.bf16 %v5481, %v5480
          %v5559 = vpack.c.bf16 %v5483, %v5482
          %v5560 = vpack.c.bf16 %v5485, %v5484
          %v5561 = vpack.c.bf16 %v5487, %v5486
          %v5562 = vpack.c.bf16 %v5489, %v5488
          %v5563 = vpack.c.bf16 %v5491, %v5490
          %v5564 = vpack.c.bf16 %v5493, %v5492
          %v5565 = vpack.c.bf16 %v5495, %v5494
          %v5566 = vpack.c.bf16 %v5497, %v5496
          %v5567 = vpack.c.bf16 %v5499, %v5498
          %v5568 = vpack.c.bf16 %v5501, %v5500
          %v5569 = vpack.c.bf16 %v5503, %v5502
          %v5570 = vpack.c.bf16 %v5505, %v5504
          %v5571 = vpack.c.bf16 %v5507, %v5506
          %v5636 = vunpack.c.l.b16 %v5508
          %v5637 = vunpack.c.h.b16 %v5508
          %v5638 = vunpack.c.l.b16 %v5509
          %v5639 = vunpack.c.h.b16 %v5509
          %v5640 = vunpack.c.l.b16 %v5510
          %v5641 = vunpack.c.h.b16 %v5510
          %v5642 = vunpack.c.l.b16 %v5511
          %v5643 = vunpack.c.h.b16 %v5511
          %v5644 = vunpack.c.l.b16 %v5512
          %v5645 = vunpack.c.h.b16 %v5512
          %v5646 = vunpack.c.l.b16 %v5513
          %v5647 = vunpack.c.h.b16 %v5513
          %v5648 = vunpack.c.l.b16 %v5514
          %v5649 = vunpack.c.h.b16 %v5514
          %v5650 = vunpack.c.l.b16 %v5515
          %v5651 = vunpack.c.h.b16 %v5515
          %v5652 = vunpack.c.l.b16 %v5516
          %v5653 = vunpack.c.h.b16 %v5516
          %v5654 = vunpack.c.l.b16 %v5517
          %v5655 = vunpack.c.h.b16 %v5517
          %v5656 = vunpack.c.l.b16 %v5518
          %v5657 = vunpack.c.h.b16 %v5518
          %v5658 = vunpack.c.l.b16 %v5519
          %v5659 = vunpack.c.h.b16 %v5519
          %v5660 = vunpack.c.l.b16 %v5520
          %v5661 = vunpack.c.h.b16 %v5520
          %v5662 = vunpack.c.l.b16 %v5521
          %v5663 = vunpack.c.h.b16 %v5521
          %v5664 = vunpack.c.l.b16 %v5522
          %v5665 = vunpack.c.h.b16 %v5522
          %v5666 = vunpack.c.l.b16 %v5523
          %v5667 = vunpack.c.h.b16 %v5523
          %v5668 = vunpack.c.l.b16 %v5524
          %v5669 = vunpack.c.h.b16 %v5524
          %v5670 = vunpack.c.l.b16 %v5525
          %v5671 = vunpack.c.h.b16 %v5525
          %v5672 = vunpack.c.l.b16 %v5526
          %v5673 = vunpack.c.h.b16 %v5526
          %v5674 = vunpack.c.l.b16 %v5527
          %v5675 = vunpack.c.h.b16 %v5527
          %v5676 = vunpack.c.l.b16 %v5528
          %v5677 = vunpack.c.h.b16 %v5528
          %v5678 = vunpack.c.l.b16 %v5529
          %v5679 = vunpack.c.h.b16 %v5529
          %v5680 = vunpack.c.l.b16 %v5530
          %v5681 = vunpack.c.h.b16 %v5530
          %v5682 = vunpack.c.l.b16 %v5531
          %v5683 = vunpack.c.h.b16 %v5531
          %v5684 = vunpack.c.l.b16 %v5532
          %v5685 = vunpack.c.h.b16 %v5532
          %v5686 = vunpack.c.l.b16 %v5533
          %v5687 = vunpack.c.h.b16 %v5533
          %v5688 = vunpack.c.l.b16 %v5534
          %v5689 = vunpack.c.h.b16 %v5534
          %v5690 = vunpack.c.l.b16 %v5535
          %v5691 = vunpack.c.h.b16 %v5535
          %v5692 = vunpack.c.l.b16 %v5536
          %v5693 = vunpack.c.h.b16 %v5536
          %v5694 = vunpack.c.l.b16 %v5537
          %v5695 = vunpack.c.h.b16 %v5537
          %v5696 = vunpack.c.l.b16 %v5538
          %v5697 = vunpack.c.h.b16 %v5538
          %v5698 = vunpack.c.l.b16 %v5539
          %v5699 = vunpack.c.h.b16 %v5539
          %v5700 = vunpack.c.l.b16 %v5540
          %v5701 = vunpack.c.h.b16 %v5540
          %v5702 = vunpack.c.l.b16 %v5541
          %v5703 = vunpack.c.h.b16 %v5541
          %v5704 = vunpack.c.l.b16 %v5542
          %v5705 = vunpack.c.h.b16 %v5542
          %v5706 = vunpack.c.l.b16 %v5543
          %v5707 = vunpack.c.h.b16 %v5543
          %v5708 = vunpack.c.l.b16 %v5544
          %v5709 = vunpack.c.h.b16 %v5544
          %v5710 = vunpack.c.l.b16 %v5545
          %v5711 = vunpack.c.h.b16 %v5545
          %v5712 = vunpack.c.l.b16 %v5546
          %v5713 = vunpack.c.h.b16 %v5546
          %v5714 = vunpack.c.l.b16 %v5547
          %v5715 = vunpack.c.h.b16 %v5547
          %v5716 = vunpack.c.l.b16 %v5548
          %v5717 = vunpack.c.h.b16 %v5548
          %v5718 = vunpack.c.l.b16 %v5549
          %v5719 = vunpack.c.h.b16 %v5549
          %v5720 = vunpack.c.l.b16 %v5550
          %v5721 = vunpack.c.h.b16 %v5550
          %v5722 = vunpack.c.l.b16 %v5551
          %v5723 = vunpack.c.h.b16 %v5551
          %v5724 = vunpack.c.l.b16 %v5552
          %v5725 = vunpack.c.h.b16 %v5552
          %v5726 = vunpack.c.l.b16 %v5553
          %v5727 = vunpack.c.h.b16 %v5553
          %v5728 = vunpack.c.l.b16 %v5554
          %v5729 = vunpack.c.h.b16 %v5554
          %v5730 = vunpack.c.l.b16 %v5555
          %v5731 = vunpack.c.h.b16 %v5555
          %v5732 = vunpack.c.l.b16 %v5556
          %v5733 = vunpack.c.h.b16 %v5556
          %v5734 = vunpack.c.l.b16 %v5557
          %v5735 = vunpack.c.h.b16 %v5557
          %v5736 = vunpack.c.l.b16 %v5558
          %v5737 = vunpack.c.h.b16 %v5558
          %v5738 = vunpack.c.l.b16 %v5559
          %v5739 = vunpack.c.h.b16 %v5559
          %v5740 = vunpack.c.l.b16 %v5560
          %v5741 = vunpack.c.h.b16 %v5560
          %v5742 = vunpack.c.l.b16 %v5561
          %v5743 = vunpack.c.h.b16 %v5561
          %v5744 = vunpack.c.l.b16 %v5562
          %v5745 = vunpack.c.h.b16 %v5562
          %v5746 = vunpack.c.l.b16 %v5563
          %v5747 = vunpack.c.h.b16 %v5563
          %v5748 = vunpack.c.l.b16 %v5564
          %v5749 = vunpack.c.h.b16 %v5564
          %v5750 = vunpack.c.l.b16 %v5565
          %v5751 = vunpack.c.h.b16 %v5565
          %v5752 = vunpack.c.l.b16 %v5566
          %v5753 = vunpack.c.h.b16 %v5566
          %v5754 = vunpack.c.l.b16 %v5567
          %v5755 = vunpack.c.h.b16 %v5567
          %v5756 = vunpack.c.l.b16 %v5568
          %v5757 = vunpack.c.h.b16 %v5568
          %v5758 = vunpack.c.l.b16 %v5569
          %v5759 = vunpack.c.h.b16 %v5569
          %v5760 = vunpack.c.l.b16 %v5570
          %v5761 = vunpack.c.h.b16 %v5570
          %v5762 = vunpack.c.l.b16 %v5571
          %v5763 = vunpack.c.h.b16 %v5571
          %v5764 = vpack.c.b16 %v5636, %v5636
          %v5765 = vpack.c.b16 %v5637, %v5637
          %v5766 = vpack.c.b16 %v5638, %v5638
          %v5767 = vpack.c.b16 %v5639, %v5639
          %v5768 = vpack.c.b16 %v5640, %v5640
          %v5769 = vpack.c.b16 %v5641, %v5641
          %v5770 = vpack.c.b16 %v5642, %v5642
          %v5771 = vpack.c.b16 %v5643, %v5643
          %v5772 = vpack.c.b16 %v5644, %v5644
          %v5773 = vpack.c.b16 %v5645, %v5645
          %v5774 = vpack.c.b16 %v5646, %v5646
          %v5775 = vpack.c.b16 %v5647, %v5647
          %v5776 = vpack.c.b16 %v5648, %v5648
          %v5777 = vpack.c.b16 %v5649, %v5649
          %v5778 = vpack.c.b16 %v5650, %v5650
          %v5779 = vpack.c.b16 %v5651, %v5651
          %v5780 = vpack.c.b16 %v5652, %v5652
          %v5781 = vpack.c.b16 %v5653, %v5653
          %v5782 = vpack.c.b16 %v5654, %v5654
          %v5783 = vpack.c.b16 %v5655, %v5655
          %v5784 = vpack.c.b16 %v5656, %v5656
          %v5785 = vpack.c.b16 %v5657, %v5657
          %v5786 = vpack.c.b16 %v5658, %v5658
          %v5787 = vpack.c.b16 %v5659, %v5659
          %v5788 = vpack.c.b16 %v5660, %v5660
          %v5789 = vpack.c.b16 %v5661, %v5661
          %v5790 = vpack.c.b16 %v5662, %v5662
          %v5791 = vpack.c.b16 %v5663, %v5663
          %v5792 = vpack.c.b16 %v5664, %v5664
          %v5793 = vpack.c.b16 %v5665, %v5665
          %v5794 = vpack.c.b16 %v5666, %v5666
          %v5795 = vpack.c.b16 %v5667, %v5667
          %v5796 = vpack.c.b16 %v5668, %v5668
          %v5797 = vpack.c.b16 %v5669, %v5669
          %v5798 = vpack.c.b16 %v5670, %v5670
          %v5799 = vpack.c.b16 %v5671, %v5671
          %v5800 = vpack.c.b16 %v5672, %v5672
          %v5801 = vpack.c.b16 %v5673, %v5673
          %v5802 = vpack.c.b16 %v5674, %v5674
          %v5803 = vpack.c.b16 %v5675, %v5675
          %v5804 = vpack.c.b16 %v5676, %v5676
          %v5805 = vpack.c.b16 %v5677, %v5677
          %v5806 = vpack.c.b16 %v5678, %v5678
          %v5807 = vpack.c.b16 %v5679, %v5679
          %v5808 = vpack.c.b16 %v5680, %v5680
          %v5809 = vpack.c.b16 %v5681, %v5681
          %v5810 = vpack.c.b16 %v5682, %v5682
          %v5811 = vpack.c.b16 %v5683, %v5683
          %v5812 = vpack.c.b16 %v5684, %v5684
          %v5813 = vpack.c.b16 %v5685, %v5685
          %v5814 = vpack.c.b16 %v5686, %v5686
          %v5815 = vpack.c.b16 %v5687, %v5687
          %v5816 = vpack.c.b16 %v5688, %v5688
          %v5817 = vpack.c.b16 %v5689, %v5689
          %v5818 = vpack.c.b16 %v5690, %v5690
          %v5819 = vpack.c.b16 %v5691, %v5691
          %v5820 = vpack.c.b16 %v5692, %v5692
          %v5821 = vpack.c.b16 %v5693, %v5693
          %v5822 = vpack.c.b16 %v5694, %v5694
          %v5823 = vpack.c.b16 %v5695, %v5695
          %v5824 = vpack.c.b16 %v5696, %v5696
          %v5825 = vpack.c.b16 %v5697, %v5697
          %v5826 = vpack.c.b16 %v5698, %v5698
          %v5827 = vpack.c.b16 %v5699, %v5699
          %v5828 = vpack.c.b16 %v5700, %v5700
          %v5829 = vpack.c.b16 %v5701, %v5701
          %v5830 = vpack.c.b16 %v5702, %v5702
          %v5831 = vpack.c.b16 %v5703, %v5703
          %v5832 = vpack.c.b16 %v5704, %v5704
          %v5833 = vpack.c.b16 %v5705, %v5705
          %v5834 = vpack.c.b16 %v5706, %v5706
          %v5835 = vpack.c.b16 %v5707, %v5707
          %v5836 = vpack.c.b16 %v5708, %v5708
          %v5837 = vpack.c.b16 %v5709, %v5709
          %v5838 = vpack.c.b16 %v5710, %v5710
          %v5839 = vpack.c.b16 %v5711, %v5711
          %v5840 = vpack.c.b16 %v5712, %v5712
          %v5841 = vpack.c.b16 %v5713, %v5713
          %v5842 = vpack.c.b16 %v5714, %v5714
          %v5843 = vpack.c.b16 %v5715, %v5715
          %v5844 = vpack.c.b16 %v5716, %v5716
          %v5845 = vpack.c.b16 %v5717, %v5717
          %v5846 = vpack.c.b16 %v5718, %v5718
          %v5847 = vpack.c.b16 %v5719, %v5719
          %v5848 = vpack.c.b16 %v5720, %v5720
          %v5849 = vpack.c.b16 %v5721, %v5721
          %v5850 = vpack.c.b16 %v5722, %v5722
          %v5851 = vpack.c.b16 %v5723, %v5723
          %v5852 = vpack.c.b16 %v5724, %v5724
          %v5853 = vpack.c.b16 %v5725, %v5725
          %v5854 = vpack.c.b16 %v5726, %v5726
          %v5855 = vpack.c.b16 %v5727, %v5727
          %v5856 = vpack.c.b16 %v5728, %v5728
          %v5857 = vpack.c.b16 %v5729, %v5729
          %v5858 = vpack.c.b16 %v5730, %v5730
          %v5859 = vpack.c.b16 %v5731, %v5731
          %v5860 = vpack.c.b16 %v5732, %v5732
          %v5861 = vpack.c.b16 %v5733, %v5733
          %v5862 = vpack.c.b16 %v5734, %v5734
          %v5863 = vpack.c.b16 %v5735, %v5735
          %v5864 = vpack.c.b16 %v5736, %v5736
          %v5865 = vpack.c.b16 %v5737, %v5737
          %v5866 = vpack.c.b16 %v5738, %v5738
          %v5867 = vpack.c.b16 %v5739, %v5739
          %v5868 = vpack.c.b16 %v5740, %v5740
          %v5869 = vpack.c.b16 %v5741, %v5741
          %v5870 = vpack.c.b16 %v5742, %v5742
          %v5871 = vpack.c.b16 %v5743, %v5743
          %v5872 = vpack.c.b16 %v5744, %v5744
          %v5873 = vpack.c.b16 %v5745, %v5745
          %v5874 = vpack.c.b16 %v5746, %v5746
          %v5875 = vpack.c.b16 %v5747, %v5747
          %v5876 = vpack.c.b16 %v5748, %v5748
          %v5877 = vpack.c.b16 %v5749, %v5749
          %v5878 = vpack.c.b16 %v5750, %v5750
          %v5879 = vpack.c.b16 %v5751, %v5751
          %v5880 = vpack.c.b16 %v5752, %v5752
          %v5881 = vpack.c.b16 %v5753, %v5753
          %v5882 = vpack.c.b16 %v5754, %v5754
          %v5883 = vpack.c.b16 %v5755, %v5755
          %v5884 = vpack.c.b16 %v5756, %v5756
          %v5885 = vpack.c.b16 %v5757, %v5757
          %v5886 = vpack.c.b16 %v5758, %v5758
          %v5887 = vpack.c.b16 %v5759, %v5759
          %v5888 = vpack.c.b16 %v5760, %v5760
          %v5889 = vpack.c.b16 %v5761, %v5761
          %v5890 = vpack.c.b16 %v5762, %v5762
          %v5891 = vpack.c.b16 %v5763, %v5763
          %vm6020 = vcmask 60416
          %6021 = vst.msk [vmem:[%s270] sm:$0xf] %vm6020, %v5764
          %6022 = vst.msk [vmem:[%s270 + $0x4] sm:$0xf] %vm6020, %v5765
          %6023 = vst.msk [vmem:[%s270 + $0x8] sm:$0xf] %vm6020, %v5766
          %6024 = vst.msk [vmem:[%s270 + $0xc] sm:$0xf] %vm6020, %v5767
          %6025 = vst.msk [vmem:[%s270 + $0x10] sm:$0xf] %vm6020, %v5768
          %6026 = vst.msk [vmem:[%s270 + $0x14] sm:$0xf] %vm6020, %v5769
          %6027 = vst.msk [vmem:[%s270 + $0x18] sm:$0xf] %vm6020, %v5770
          %6028 = vst.msk [vmem:[%s270 + $0x1c] sm:$0xf] %vm6020, %v5771
          %6029 = vst.msk [vmem:[%s270 + $0x20] sm:$0xf] %vm6020, %v5772
          %6030 = vst.msk [vmem:[%s270 + $0x24] sm:$0xf] %vm6020, %v5773
          %6031 = vst.msk [vmem:[%s270 + $0x28] sm:$0xf] %vm6020, %v5774
          %6032 = vst.msk [vmem:[%s270 + $0x2c] sm:$0xf] %vm6020, %v5775
          %6033 = vst.msk [vmem:[%s270 + $0x30] sm:$0xf] %vm6020, %v5776
          %6034 = vst.msk [vmem:[%s270 + $0x34] sm:$0xf] %vm6020, %v5777
          %6035 = vst.msk [vmem:[%s270 + $0x38] sm:$0xf] %vm6020, %v5778
          %6036 = vst.msk [vmem:[%s270 + $0x3c] sm:$0xf] %vm6020, %v5779
          %6037 = vst.msk [vmem:[%s270 + $0x40] sm:$0xf] %vm6020, %v5780
          %6038 = vst.msk [vmem:[%s270 + $0x44] sm:$0xf] %vm6020, %v5781
          %6039 = vst.msk [vmem:[%s270 + $0x48] sm:$0xf] %vm6020, %v5782
          %6040 = vst.msk [vmem:[%s270 + $0x4c] sm:$0xf] %vm6020, %v5783
          %6041 = vst.msk [vmem:[%s270 + $0x50] sm:$0xf] %vm6020, %v5784
          %6042 = vst.msk [vmem:[%s270 + $0x54] sm:$0xf] %vm6020, %v5785
          %6043 = vst.msk [vmem:[%s270 + $0x58] sm:$0xf] %vm6020, %v5786
          %6044 = vst.msk [vmem:[%s270 + $0x5c] sm:$0xf] %vm6020, %v5787
          %6045 = vst.msk [vmem:[%s270 + $0x60] sm:$0xf] %vm6020, %v5788
          %6046 = vst.msk [vmem:[%s270 + $0x64] sm:$0xf] %vm6020, %v5789
          %6047 = vst.msk [vmem:[%s270 + $0x68] sm:$0xf] %vm6020, %v5790
          %6048 = vst.msk [vmem:[%s270 + $0x6c] sm:$0xf] %vm6020, %v5791
          %6049 = vst.msk [vmem:[%s270 + $0x70] sm:$0xf] %vm6020, %v5792
          %6050 = vst.msk [vmem:[%s270 + $0x74] sm:$0xf] %vm6020, %v5793
          %6051 = vst.msk [vmem:[%s270 + $0x78] sm:$0xf] %vm6020, %v5794
          %6052 = vst.msk [vmem:[%s270 + $0x7c] sm:$0xf] %vm6020, %v5795
          %6053 = vst.msk [vmem:[%s270 + $0x80] sm:$0xf] %vm6020, %v5796
          %6054 = vst.msk [vmem:[%s270 + $0x84] sm:$0xf] %vm6020, %v5797
          %6055 = vst.msk [vmem:[%s270 + $0x88] sm:$0xf] %vm6020, %v5798
          %6056 = vst.msk [vmem:[%s270 + $0x8c] sm:$0xf] %vm6020, %v5799
          %6057 = vst.msk [vmem:[%s270 + $0x90] sm:$0xf] %vm6020, %v5800
          %6058 = vst.msk [vmem:[%s270 + $0x94] sm:$0xf] %vm6020, %v5801
          %6059 = vst.msk [vmem:[%s270 + $0x98] sm:$0xf] %vm6020, %v5802
          %6060 = vst.msk [vmem:[%s270 + $0x9c] sm:$0xf] %vm6020, %v5803
          %6061 = vst.msk [vmem:[%s270 + $0xa0] sm:$0xf] %vm6020, %v5804
          %6062 = vst.msk [vmem:[%s270 + $0xa4] sm:$0xf] %vm6020, %v5805
          %6063 = vst.msk [vmem:[%s270 + $0xa8] sm:$0xf] %vm6020, %v5806
          %6064 = vst.msk [vmem:[%s270 + $0xac] sm:$0xf] %vm6020, %v5807
          %6065 = vst.msk [vmem:[%s270 + $0xb0] sm:$0xf] %vm6020, %v5808
          %6066 = vst.msk [vmem:[%s270 + $0xb4] sm:$0xf] %vm6020, %v5809
          %6067 = vst.msk [vmem:[%s270 + $0xb8] sm:$0xf] %vm6020, %v5810
          %6068 = vst.msk [vmem:[%s270 + $0xbc] sm:$0xf] %vm6020, %v5811
          %6069 = vst.msk [vmem:[%s270 + $0xc0] sm:$0xf] %vm6020, %v5812
          %6070 = vst.msk [vmem:[%s270 + $0xc4] sm:$0xf] %vm6020, %v5813
          %6071 = vst.msk [vmem:[%s270 + $0xc8] sm:$0xf] %vm6020, %v5814
          %6072 = vst.msk [vmem:[%s270 + $0xcc] sm:$0xf] %vm6020, %v5815
          %6073 = vst.msk [vmem:[%s270 + $0xd0] sm:$0xf] %vm6020, %v5816
          %6074 = vst.msk [vmem:[%s270 + $0xd4] sm:$0xf] %vm6020, %v5817
          %6075 = vst.msk [vmem:[%s270 + $0xd8] sm:$0xf] %vm6020, %v5818
          %6076 = vst.msk [vmem:[%s270 + $0xdc] sm:$0xf] %vm6020, %v5819
          %6077 = vst.msk [vmem:[%s270 + $0xe0] sm:$0xf] %vm6020, %v5820
          %6078 = vst.msk [vmem:[%s270 + $0xe4] sm:$0xf] %vm6020, %v5821
          %6079 = vst.msk [vmem:[%s270 + $0xe8] sm:$0xf] %vm6020, %v5822
          %6080 = vst.msk [vmem:[%s270 + $0xec] sm:$0xf] %vm6020, %v5823
          %6081 = vst.msk [vmem:[%s270 + $0xf0] sm:$0xf] %vm6020, %v5824
          %6082 = vst.msk [vmem:[%s270 + $0xf4] sm:$0xf] %vm6020, %v5825
          %6083 = vst.msk [vmem:[%s270 + $0xf8] sm:$0xf] %vm6020, %v5826
          %6084 = vst.msk [vmem:[%s270 + $0xfc] sm:$0xf] %vm6020, %v5827
          %6085 = vst.msk [vmem:[%s270 + $0x100] sm:$0xf] %vm6020, %v5828
          %6086 = vst.msk [vmem:[%s270 + $0x104] sm:$0xf] %vm6020, %v5829
          %6087 = vst.msk [vmem:[%s270 + $0x108] sm:$0xf] %vm6020, %v5830
          %6088 = vst.msk [vmem:[%s270 + $0x10c] sm:$0xf] %vm6020, %v5831
          %6089 = vst.msk [vmem:[%s270 + $0x110] sm:$0xf] %vm6020, %v5832
          %6090 = vst.msk [vmem:[%s270 + $0x114] sm:$0xf] %vm6020, %v5833
          %6091 = vst.msk [vmem:[%s270 + $0x118] sm:$0xf] %vm6020, %v5834
          %6092 = vst.msk [vmem:[%s270 + $0x11c] sm:$0xf] %vm6020, %v5835
          %6093 = vst.msk [vmem:[%s270 + $0x120] sm:$0xf] %vm6020, %v5836
          %6094 = vst.msk [vmem:[%s270 + $0x124] sm:$0xf] %vm6020, %v5837
          %6095 = vst.msk [vmem:[%s270 + $0x128] sm:$0xf] %vm6020, %v5838
          %6096 = vst.msk [vmem:[%s270 + $0x12c] sm:$0xf] %vm6020, %v5839
          %6097 = vst.msk [vmem:[%s270 + $0x130] sm:$0xf] %vm6020, %v5840
          %6098 = vst.msk [vmem:[%s270 + $0x134] sm:$0xf] %vm6020, %v5841
          %6099 = vst.msk [vmem:[%s270 + $0x138] sm:$0xf] %vm6020, %v5842
          %6100 = vst.msk [vmem:[%s270 + $0x13c] sm:$0xf] %vm6020, %v5843
          %6101 = vst.msk [vmem:[%s270 + $0x140] sm:$0xf] %vm6020, %v5844
          %6102 = vst.msk [vmem:[%s270 + $0x144] sm:$0xf] %vm6020, %v5845
          %6103 = vst.msk [vmem:[%s270 + $0x148] sm:$0xf] %vm6020, %v5846
          %6104 = vst.msk [vmem:[%s270 + $0x14c] sm:$0xf] %vm6020, %v5847
          %6105 = vst.msk [vmem:[%s270 + $0x150] sm:$0xf] %vm6020, %v5848
          %6106 = vst.msk [vmem:[%s270 + $0x154] sm:$0xf] %vm6020, %v5849
          %6107 = vst.msk [vmem:[%s270 + $0x158] sm:$0xf] %vm6020, %v5850
          %6108 = vst.msk [vmem:[%s270 + $0x15c] sm:$0xf] %vm6020, %v5851
          %6109 = vst.msk [vmem:[%s270 + $0x160] sm:$0xf] %vm6020, %v5852
          %6110 = vst.msk [vmem:[%s270 + $0x164] sm:$0xf] %vm6020, %v5853
          %6111 = vst.msk [vmem:[%s270 + $0x168] sm:$0xf] %vm6020, %v5854
          %6112 = vst.msk [vmem:[%s270 + $0x16c] sm:$0xf] %vm6020, %v5855
          %6113 = vst.msk [vmem:[%s270 + $0x170] sm:$0xf] %vm6020, %v5856
          %6114 = vst.msk [vmem:[%s270 + $0x174] sm:$0xf] %vm6020, %v5857
          %6115 = vst.msk [vmem:[%s270 + $0x178] sm:$0xf] %vm6020, %v5858
          %6116 = vst.msk [vmem:[%s270 + $0x17c] sm:$0xf] %vm6020, %v5859
          %6117 = vst.msk [vmem:[%s270 + $0x180] sm:$0xf] %vm6020, %v5860
          %6118 = vst.msk [vmem:[%s270 + $0x184] sm:$0xf] %vm6020, %v5861
          %6119 = vst.msk [vmem:[%s270 + $0x188] sm:$0xf] %vm6020, %v5862
          %6120 = vst.msk [vmem:[%s270 + $0x18c] sm:$0xf] %vm6020, %v5863
          %6121 = vst.msk [vmem:[%s270 + $0x190] sm:$0xf] %vm6020, %v5864
          %6122 = vst.msk [vmem:[%s270 + $0x194] sm:$0xf] %vm6020, %v5865
          %6123 = vst.msk [vmem:[%s270 + $0x198] sm:$0xf] %vm6020, %v5866
          %6124 = vst.msk [vmem:[%s270 + $0x19c] sm:$0xf] %vm6020, %v5867
          %6125 = vst.msk [vmem:[%s270 + $0x1a0] sm:$0xf] %vm6020, %v5868
          %6126 = vst.msk [vmem:[%s270 + $0x1a4] sm:$0xf] %vm6020, %v5869
          %6127 = vst.msk [vmem:[%s270 + $0x1a8] sm:$0xf] %vm6020, %v5870
          %6128 = vst.msk [vmem:[%s270 + $0x1ac] sm:$0xf] %vm6020, %v5871
          %6129 = vst.msk [vmem:[%s270 + $0x1b0] sm:$0xf] %vm6020, %v5872
          %6130 = vst.msk [vmem:[%s270 + $0x1b4] sm:$0xf] %vm6020, %v5873
          %6131 = vst.msk [vmem:[%s270 + $0x1b8] sm:$0xf] %vm6020, %v5874
          %6132 = vst.msk [vmem:[%s270 + $0x1bc] sm:$0xf] %vm6020, %v5875
          %6133 = vst.msk [vmem:[%s270 + $0x1c0] sm:$0xf] %vm6020, %v5876
          %6134 = vst.msk [vmem:[%s270 + $0x1c4] sm:$0xf] %vm6020, %v5877
          %6135 = vst.msk [vmem:[%s270 + $0x1c8] sm:$0xf] %vm6020, %v5878
          %6136 = vst.msk [vmem:[%s270 + $0x1cc] sm:$0xf] %vm6020, %v5879
          %6137 = vst.msk [vmem:[%s270 + $0x1d0] sm:$0xf] %vm6020, %v5880
          %6138 = vst.msk [vmem:[%s270 + $0x1d4] sm:$0xf] %vm6020, %v5881
          %6139 = vst.msk [vmem:[%s270 + $0x1d8] sm:$0xf] %vm6020, %v5882
          %6140 = vst.msk [vmem:[%s270 + $0x1dc] sm:$0xf] %vm6020, %v5883
          %6141 = vst.msk [vmem:[%s270 + $0x1e0] sm:$0xf] %vm6020, %v5884
          %6142 = vst.msk [vmem:[%s270 + $0x1e4] sm:$0xf] %vm6020, %v5885
          %6143 = vst.msk [vmem:[%s270 + $0x1e8] sm:$0xf] %vm6020, %v5886
          %6144 = vst.msk [vmem:[%s270 + $0x1ec] sm:$0xf] %vm6020, %v5887
          %6145 = vst.msk [vmem:[%s270 + $0x1f0] sm:$0xf] %vm6020, %v5888
          %6146 = vst.msk [vmem:[%s270 + $0x1f4] sm:$0xf] %vm6020, %v5889
          %6147 = vst.msk [vmem:[%s270 + $0x1f8] sm:$0xf] %vm6020, %v5890
          %6148 = vst.msk [vmem:[%s270 + $0x1fc] sm:$0xf] %vm6020, %v5891
        $region52: #{conv3d_bn.1} parent=31 // pred_fallthru
          _
        %s6149 = smul.u32 128, %s23
        %p6150 = scmp.lt.s32.totalorder %s6149, 8191
        %s6151 = scalar_select %p6150, %s6149, 8191
        %p6152 = scmp.lt.s32.totalorder %s24, 0
        %s6153 = scalar_select %p6152, %s24, 0
        %s6154 = sadd.s32 %s6153, %s6151
        %s6155 = smul.addr %s6154, 4
        %s6156 = scalar_lea.vmem %s3, %s6155
        // Predicated region
        $region53: #{conv3d_bn.1} parent=31 // pred_check
          %p6157 = pneg %p139
        $region54: #{conv3d_bn.1} parent=31 // pred_check_branch
          %6159 = sbr.rel (%p6157) target = $region56
        $region55: #{conv3d_bn.1} parent=31 // pred_region
          %s6160 = smul.u32 128, %s23
        $region56: #{conv3d_bn.1} parent=31 // pred_fallthru
          _
      $region32: #{conv3d_bn.1} parent=5 // pred_fallthru
        _
      %p6161 = scmp.le.s32.totalorder 2, %s13
      // Predicated region
      $region57: #{conv3d_bn.1} parent=5 // pred_check
        %p6162 = pneg %p6161
      $region58: #{conv3d_bn.1} parent=5 // pred_check_branch
        %6164 = sbr.rel (%p6162) target = $region60
      $region59: #{conv3d_bn.1} parent=5 // pred_region
        %s6165 = ssub.s32 %s13, 2
        // Predicated region
        $region61: #{conv3d_bn.1} parent=59 // pred_check
          %p6166 = pneg %p145
        $region62: #{conv3d_bn.1} parent=59 // pred_check_branch
          %6168 = sbr.rel (%p6166) target = $region64
        $region63: #{conv3d_bn.1} parent=59 // pred_region
          %s6169 = smul.u32 128, %s26
          %p6170 = scmp.lt.s32.totalorder %s6169, 8191
          %s6171 = scalar_select %p6170, %s6169, 8191
          %p6172 = scmp.lt.s32.totalorder %s27, 0
          %s6173 = scalar_select %p6172, %s27, 0
          %s6174 = sadd.s32 %s6173, %s6171
          %s6175 = smul.addr %s6174, 4
          %s6176 = scalar_lea.vmem %s3, %s6175
        $region64: #{conv3d_bn.1} parent=59 // pred_fallthru
          _
      $region60: #{conv3d_bn.1} parent=5 // pred_fallthru
        _
    $region6: #{conv3d_bn.1} parent=1 // loop_footer
      %s17 = sadd.s32 1, %s13
    $region7: #{conv3d_bn.1} parent=1 // loop_footer_branch
      %12 = sbr.rel target = $region3
    $region8: #{conv3d_bn.1} parent=1 // loop_exit
      _
    %6177 = vsyncpa [#allocation4], 1
    %s6178 = scalar_lea.sflag [#allocation4], 1
    %6179 = vsyncpa %s6178, 1
    %6180 = vsyncpa [#allocation6], 1

</llo_original>
